<compile_context>
chip_gen: v7x
topology: tpu7x:2x2x1
jax: 0.10.0
libtpu: 0.0.40
codegen_flags: <defaults>
</compile_context>

<pallas_src>
import functools

import jax
import jax.numpy as jnp
from jax.experimental import pallas as pl
from jax.experimental.pallas import tpu as pltpu


def _round_up(x, m):
    return (x + m - 1) // m * m


def _row_tile(m):
    for t in (512, 256, 128, 64, 32, 16, 8):
        if m % t == 0:
            return t
    return m


def _col_tile(n):
    for t in (2048, 1024, 512, 256, 128):
        if n % t == 0:
            return t
    return n


# --------------------------------------------------------------------------
# Batched projection kernel: Y = X @ W + b   (used for x@W_ih and h@W_out)
# --------------------------------------------------------------------------
def _matmul_bias_kernel(x_ref, w_ref, b_ref, y_ref):
    y_ref[...] = (
        jnp.dot(x_ref[...], w_ref[...], preferred_element_type=jnp.float32)
        + b_ref[...]
    )


def matmul_bias(x, w, b):
    """x: (M, K) bf16, w: (K, N) bf16, b: (1, N) f32 -> (M, N) f32."""
    M, K = x.shape
    N = w.shape[1]
    tm, tn = _row_tile(M), _col_tile(N)
    return pl.pallas_call(
        _matmul_bias_kernel,
        out_shape=jax.ShapeDtypeStruct((M, N), jnp.float32),
        grid_spec=pltpu.PrefetchScalarGridSpec(
            num_scalar_prefetch=0,
            grid=(M // tm, N // tn),
            in_specs=[
                pl.BlockSpec((tm, K), lambda i, j: (i, 0)),
                pl.BlockSpec((K, tn), lambda i, j: (0, j)),
                pl.BlockSpec((1, tn), lambda i, j: (0, j)),
            ],
            out_specs=pl.BlockSpec((tm, tn), lambda i, j: (i, j)),
        ),
        compiler_params=pltpu.CompilerParams(
            dimension_semantics=("parallel", "parallel")),
    )(x, w, b)


# --------------------------------------------------------------------------
# Sequential LSTM recurrence kernel (only h @ W_hh + cell math stays serial)
# --------------------------------------------------------------------------
def _lstm_recurrence_kernel(gx_ref, whh_ref, h_ref, h_sc, c_sc, *, t_chunk):
    # gx_ref:  (4, t_chunk, B, H)  precomputed  x@W_ih + (b_ih+b_hh), f32
    # whh_ref: (4, H, H)           grouped recurrent weights, bf16
    # h_ref:   (t_chunk, B, H)     hidden-state output block, f32
    @pl.when(pl.program_id(0) == 0)
    def _():
        h_sc[...] = jnp.zeros_like(h_sc)
        c_sc[...] = jnp.zeros_like(c_sc)

    def step(s, carry):
        h_prev = h_sc[...]
        c_prev = c_sc[...]
        hb = h_prev.astype(whh_ref.dtype)
        # grouped-gate layout: each gate is a leading-axis index (lane aligned)
        gi = gx_ref[0, s] + jnp.dot(hb, whh_ref[0],
                                    preferred_element_type=jnp.float32)
        gf = gx_ref[1, s] + jnp.dot(hb, whh_ref[1],
                                    preferred_element_type=jnp.float32)
        gg = gx_ref[2, s] + jnp.dot(hb, whh_ref[2],
                                    preferred_element_type=jnp.float32)
        go = gx_ref[3, s] + jnp.dot(hb, whh_ref[3],
                                    preferred_element_type=jnp.float32)
        i_g = jax.nn.sigmoid(gi)
        f_g = jax.nn.sigmoid(gf)
        g_g = jnp.tanh(gg)
        o_g = jax.nn.sigmoid(go)
        c_new = f_g * c_prev + i_g * g_g
        h_new = o_g * jnp.tanh(c_new)
        c_sc[...] = c_new
        h_sc[...] = h_new
        h_ref[s] = h_new
        return carry

    jax.lax.fori_loop(0, t_chunk, step, 0, unroll=True)


def lstm_recurrence(gates_x, w_hh_g, *, t_chunk):
    """gates_x: (4, T, B, H) f32, w_hh_g: (4, H, H) bf16 -> h_seq (T, B, H) f32."""
    _, T, B, H = gates_x.shape
    n_chunks = T // t_chunk
    kernel = functools.partial(_lstm_recurrence_kernel, t_chunk=t_chunk)
    return pl.pallas_call(
        kernel,
        out_shape=jax.ShapeDtypeStruct((T, B, H), jnp.float32),
        grid_spec=pltpu.PrefetchScalarGridSpec(
            num_scalar_prefetch=0,
            grid=(n_chunks,),
            in_specs=[
                pl.BlockSpec((4, t_chunk, B, H), lambda t: (0, t, 0, 0)),
                pl.BlockSpec((4, H, H), lambda t: (0, 0, 0)),
            ],
            out_specs=pl.BlockSpec((t_chunk, B, H), lambda t: (t, 0, 0)),
            scratch_shapes=[
                pltpu.VMEM((B, H), jnp.float32),   # h carry
                pltpu.VMEM((B, H), jnp.float32),   # c carry
            ],
        ),
        compiler_params=pltpu.CompilerParams(
            dimension_semantics=("arbitrary",),    # sequential over time
        ),
    )(gates_x, w_hh_g)


# --------------------------------------------------------------------------
# Full forward (mirrors DecoderRNN.forward, batch_first)
# --------------------------------------------------------------------------
def decoder_rnn_forward(params, features, captions, *, t_chunk=8):
    """features: (B, E) f32, captions: (B, Tc) int32 -> (B, Tc, V) f32 logits."""
    emb = params["embed"]                              # (V, E) f32
    w_ih = params["w_ih"].astype(jnp.bfloat16)         # (E, 4H)
    w_hh = params["w_hh"].astype(jnp.bfloat16)         # (H, 4H)
    b = params["b"]                                    # (1, 4H) f32 (b_ih+b_hh)
    w_out = params["w_out"].astype(jnp.bfloat16)       # (H, V)
    b_out = params["b_out"]                            # (1, V) f32

    B = features.shape[0]
    E = emb.shape[1]
    H = w_hh.shape[0]
    V = w_out.shape[1]

    # embedding lookup / concat (glue, plain JAX)
    caps = captions[:, :-1]
    cap_emb = jnp.take(emb, caps, axis=0)                              # (B, Tc-1, E)
    inputs = jnp.concatenate([features[:, None, :], cap_emb], axis=1)  # (B, T, E)
    T = inputs.shape[1]

    # pad batch to sublane multiple and T to a chunk multiple (sliced away later)
    B_pad = max(8, _round_up(B, 8))
    t_chunk = min(t_chunk, T)
    T_pad = _round_up(T, t_chunk)
    x = jnp.zeros((B_pad, T_pad, E), jnp.float32).at[:B, :T].set(inputs)
    x_tbe = jnp.transpose(x, (1, 0, 2)).astype(jnp.bfloat16)           # (T_pad, B_pad, E)

    # (1) hoisted input projection: one tall (T*B, E) @ (E, 4H) matmul
    gx_flat = matmul_bias(x_tbe.reshape(T_pad * B_pad, E), w_ih, b)    # (M, 4H) f32
    # grouped-gate layout (4, T, B, H): per-gate access in-kernel is leading-axis
    gates_x = jnp.transpose(gx_flat.reshape(T_pad, B_pad, 4, H), (2, 0, 1, 3))

    # matching grouped recurrent weight layout (4, H, H)
    w_hh_g = jnp.transpose(w_hh.reshape(H, 4, H), (1, 0, 2))

    # (2) sequential recurrence (the only serial part)
    h_seq = lstm_recurrence(gates_x, w_hh_g, t_chunk=t_chunk)          # (T_pad, B_pad, H)

    # (3) hoisted output projection: one (T*B, H) @ (H, V) matmul
    y_flat = matmul_bias(h_seq.reshape(T_pad * B_pad, H).astype(jnp.bfloat16),
                         w_out, b_out)                                 # (M, V) f32
    y_tbv = y_flat.reshape(T_pad, B_pad, V)
    return jnp.transpose(y_tbv, (1, 0, 2))[:B, :T]                     # (B, T, V)


# --------------------------------------------------------------------------
# Pure-JAX reference (same bf16 weight/input quantization, f32 accumulation)
# --------------------------------------------------------------------------
def _reference_forward(params, features, captions):
    bf = lambda a: a.astype(jnp.bfloat16).astype(jnp.float32)
    emb = params["embed"]
    w_ih = bf(params["w_ih"])
    w_hh = bf(params["w_hh"])
    w_out = bf(params["w_out"])
    b = params["b"]
    b_out = params["b_out"]

    caps = captions[:, :-1]
    cap_emb = jnp.take(emb, caps, axis=0)
    inputs = jnp.concatenate([features[:, None, :], cap_emb], axis=1)
    x_tbe = bf(jnp.transpose(inputs, (1, 0, 2)))
    B = features.shape[0]
    H = params["w_hh"].shape[0]

    def step(carry, x_t):
        h, c = carry
        gates = x_t @ w_ih + bf(h) @ w_hh + b[0]
        i = jax.nn.sigmoid(gates[:, 0 * H:1 * H])
        f = jax.nn.sigmoid(gates[:, 1 * H:2 * H])
        g = jnp.tanh(gates[:, 2 * H:3 * H])
        o = jax.nn.sigmoid(gates[:, 3 * H:4 * H])
        c = f * c + i * g
        h = o * jnp.tanh(c)
        return (h, c), h

    init = (jnp.zeros((B, H), jnp.float32), jnp.zeros((B, H), jnp.float32))
    _, h_tbh = jax.lax.scan(step, init, x_tbe)
    y = bf(h_tbh) @ w_out + b_out[0]
    return jnp.transpose(y, (1, 0, 2))


if __name__ == "__main__":
    # small shapes consistent with the module
    B, Tc = 2, 8           # batch, caption length (LSTM seq len == Tc)
    E, H, V = 32, 32, 128  # embed_size, hidden_size, vocab_size

    key = jax.random.PRNGKey(0)
    ks = jax.random.split(key, 8)
    scale = 0.1
    params = {
        "embed": scale * jax.random.normal(ks[0], (V, E), jnp.float32),
        # PyTorch LSTM weights are (4H, E)/(4H, H); stored transposed for x @ W.
        "w_ih": scale * jax.random.normal(ks[1], (E, 4 * H), jnp.float32),
        "w_hh": scale * jax.random.normal(ks[2], (H, 4 * H), jnp.float32),
        # combined bias b_ih + b_hh
        "b": scale * jax.random.normal(ks[3], (1, 4 * H), jnp.float32),
        # Linear: PyTorch weight (V, H); stored transposed as (H, V).
        "w_out": scale * jax.random.normal(ks[4], (H, V), jnp.float32),
        "b_out": scale * jax.random.normal(ks[5], (1, V), jnp.float32),
    }

    features = jax.random.normal(ks[6], (B, E), jnp.float32)
    captions = jax.random.randint(ks[7], (B, Tc), 0, V, dtype=jnp.int32)

    y = jax.jit(decoder_rnn_forward)(params, features, captions)
    y = jax.block_until_ready(y)

    y_ref = _reference_forward(params, features, captions)
    assert y.shape == (B, Tc, V), y.shape
    max_err = float(jnp.max(jnp.abs(y - y_ref)))
    assert jnp.allclose(y, y_ref, atol=2e-3, rtol=2e-3), (
        f"mismatch vs reference, max abs err {max_err}")

    print("KERNEL_OK")
</pallas_src>

<mosaic_0001>
module attributes {stable_mosaic.version = 11 : i64} {
  func.func @_matmul_bias_kernel(%arg0: i32, %arg1: i32, %arg2: memref<64x32xbf16, #tpu.memory_space<vmem>>, %arg3: memref<32x128xbf16, #tpu.memory_space<vmem>>, %arg4: memref<1x128xf32, #tpu.memory_space<vmem>>, %arg5: memref<64x128xf32, #tpu.memory_space<vmem>>) attributes {dimension_semantics = [#tpu.dimension_semantics<parallel>, #tpu.dimension_semantics<parallel>], iteration_bounds = array<i64: 1, 1>, scalar_prefetch = 0 : i64, scratch_operands = 0 : i64, tpu.core_type = #tpu.core_type<tc>, window_params = [{transform_indices = @transform_0, window_bounds = array<i64: 64, 32>}, {transform_indices = @transform_1, window_bounds = array<i64: 32, 128>}, {transform_indices = @transform_2, window_bounds = array<i64: 1, 128>}, {transform_indices = @transform_3, window_bounds = array<i64: 64, 128>}]} {
    %c0 = arith.constant 0 : index
    %c0_0 = arith.constant 0 : index
    %0 = vector.load %arg2[%c0, %c0_0] : memref<64x32xbf16, #tpu.memory_space<vmem>>, vector<64x32xbf16>
    %c0_1 = arith.constant 0 : index
    %c0_2 = arith.constant 0 : index
    %1 = vector.load %arg3[%c0_1, %c0_2] : memref<32x128xbf16, #tpu.memory_space<vmem>>, vector<32x128xbf16>
    %cst = arith.constant dense<0.000000e+00> : vector<64x128xf32>
    %2 = tpu.matmul %0, %1, %cst {dimension_numbers = #tpu.dot_dimension_numbers<[1], [0], [0], [1], [0, 0, 1, 1], [], []>} : vector<64x32xbf16>, vector<32x128xbf16>, vector<64x128xf32> -> vector<64x128xf32>
    %c0_3 = arith.constant 0 : index
    %c0_4 = arith.constant 0 : index
    %3 = vector.load %arg4[%c0_3, %c0_4] : memref<1x128xf32, #tpu.memory_space<vmem>>, vector<1x128xf32>
    %4 = vector.broadcast %3 : vector<1x128xf32> to vector<64x128xf32>
    %5 = arith.addf %2, %4 : vector<64x128xf32>
    %c0_5 = arith.constant 0 : index
    %c0_6 = arith.constant 0 : index
    %6 = vector.load %arg5[%c0_5, %c0_6] : memref<64x128xf32, #tpu.memory_space<vmem>>, vector<64x128xf32>
    tpu.vector_store %arg5[%c0_5, %c0_6], %5 {strides = array<i32>} : memref<64x128xf32, #tpu.memory_space<vmem>>, vector<64x128xf32>,
    return
  }
  func.func @transform_0(%arg0: i32, %arg1: i32) -> (i32, i32) {
    %c0_i32 = arith.constant 0 : i32
    %c0_i32_0 = arith.constant 0 : i32
    return %arg0, %c0_i32 : i32, i32
  }
  func.func @transform_1(%arg0: i32, %arg1: i32) -> (i32, i32) {
    %c0_i32 = arith.constant 0 : i32
    %c0_i32_0 = arith.constant 0 : i32
    return %c0_i32, %arg1 : i32, i32
  }
  func.func @transform_2(%arg0: i32, %arg1: i32) -> (i32, i32) {
    %c0_i32 = arith.constant 0 : i32
    %c0_i32_0 = arith.constant 0 : i32
    return %c0_i32, %arg1 : i32, i32
  }
  func.func @transform_3(%arg0: i32, %arg1: i32) -> (i32, i32) {
    %c0_i32 = arith.constant 0 : i32
    return %arg0, %arg1 : i32, i32
  }
}

module attributes {stable_mosaic.version = 11 : i64} {
  func.func @_lstm_recurrence_kernel(%arg0: i32, %arg1: memref<4x8x8x32xf32, #tpu.memory_space<vmem>>, %arg2: memref<4x32x32xbf16, #tpu.memory_space<vmem>>, %arg3: memref<8x8x32xf32, #tpu.memory_space<vmem>>, %arg4: memref<8x32xf32, #tpu.memory_space<vmem>>, %arg5: memref<8x32xf32, #tpu.memory_space<vmem>>) attributes {dimension_semantics = [#tpu.dimension_semantics<arbitrary>], iteration_bounds = array<i64: 1>, scalar_prefetch = 0 : i64, scratch_operands = 2 : i64, tpu.core_type = #tpu.core_type<tc>, window_params = [{transform_indices = @transform_0, window_bounds = array<i64: 4, 8, 8, 32>}, {pipeline_mode = #tpu.pipeline_mode<synchronous>, transform_indices = @transform_1, window_bounds = array<i64: 4, 32, 32>}, {transform_indices = @transform_2, window_bounds = array<i64: 8, 8, 32>}]} {
    %c0_i32 = arith.constant 0 : i32
    %0 = arith.cmpi eq, %arg0, %c0_i32 : i32
    %1 = arith.extui %0 : i1 to i32
    %c0_i32_0 = arith.constant 0 : i32
    %2 = arith.cmpi ne, %1, %c0_i32_0 : i32
    scf.if %2 {
      %cst_325 = arith.constant 0.000000e+00 : f32
      %467 = vector.broadcast %cst_325 : f32 to vector<8x32xf32>
      %c0_326 = arith.constant 0 : index
      %c0_327 = arith.constant 0 : index
      %468 = vector.load %arg4[%c0_326, %c0_327] : memref<8x32xf32, #tpu.memory_space<vmem>>, vector<8x32xf32>
      tpu.vector_store %arg4[%c0_326, %c0_327], %467 {strides = array<i32>} : memref<8x32xf32, #tpu.memory_space<vmem>>, vector<8x32xf32>,
      %cst_328 = arith.constant 0.000000e+00 : f32
      %469 = vector.broadcast %cst_328 : f32 to vector<8x32xf32>
      %c0_329 = arith.constant 0 : index
      %c0_330 = arith.constant 0 : index
      %470 = vector.load %arg5[%c0_329, %c0_330] : memref<8x32xf32, #tpu.memory_space<vmem>>, vector<8x32xf32>
      tpu.vector_store %arg5[%c0_329, %c0_330], %469 {strides = array<i32>} : memref<8x32xf32, #tpu.memory_space<vmem>>, vector<8x32xf32>,
    } else {
    }
    %c0_i32_1 = arith.constant 0 : i32
    %c0 = arith.constant 0 : index
    %c0_2 = arith.constant 0 : index
    %3 = vector.load %arg4[%c0, %c0_2] : memref<8x32xf32, #tpu.memory_space<vmem>>, vector<8x32xf32>
    %c0_3 = arith.constant 0 : index
    %c0_4 = arith.constant 0 : index
    %4 = vector.load %arg5[%c0_3, %c0_4] : memref<8x32xf32, #tpu.memory_space<vmem>>, vector<8x32xf32>
    %5 = arith.truncf %3 : vector<8x32xf32> to vector<8x32xbf16>
    %c0_5 = arith.constant 0 : index
    %6 = arith.index_cast %c0_i32_1 : i32 to index
    %c0_6 = arith.constant 0 : index
    %c0_7 = arith.constant 0 : index
    %7 = vector.load %arg1[%c0_5, %6, %c0_6, %c0_7] : memref<4x8x8x32xf32, #tpu.memory_space<vmem>>, vector<1x1x8x32xf32>
    %8 = vector.shape_cast %7 : vector<1x1x8x32xf32> to vector<8x32xf32>
    %c0_8 = arith.constant 0 : index
    %c0_9 = arith.constant 0 : index
    %c0_10 = arith.constant 0 : index
    %9 = vector.load %arg2[%c0_8, %c0_9, %c0_10] : memref<4x32x32xbf16, #tpu.memory_space<vmem>>, vector<1x32x32xbf16>
    %10 = vector.shape_cast %9 : vector<1x32x32xbf16> to vector<32x32xbf16>
    %cst = arith.constant dense<0.000000e+00> : vector<8x32xf32>
    %11 = tpu.matmul %5, %10, %cst {dimension_numbers = #tpu.dot_dimension_numbers<[1], [0], [0], [1], [0, 0, 1, 1], [], []>} : vector<8x32xbf16>, vector<32x32xbf16>, vector<8x32xf32> -> vector<8x32xf32>
    %12 = arith.addf %8, %11 : vector<8x32xf32>
    %c1 = arith.constant 1 : index
    %13 = arith.index_cast %c0_i32_1 : i32 to index
    %c0_11 = arith.constant 0 : index
    %c0_12 = arith.constant 0 : index
    %14 = vector.load %arg1[%c1, %13, %c0_11, %c0_12] : memref<4x8x8x32xf32, #tpu.memory_space<vmem>>, vector<1x1x8x32xf32>
    %15 = vector.shape_cast %14 : vector<1x1x8x32xf32> to vector<8x32xf32>
    %c1_13 = arith.constant 1 : index
    %c0_14 = arith.constant 0 : index
    %c0_15 = arith.constant 0 : index
    %16 = vector.load %arg2[%c1_13, %c0_14, %c0_15] : memref<4x32x32xbf16, #tpu.memory_space<vmem>>, vector<1x32x32xbf16>
    %17 = vector.shape_cast %16 : vector<1x32x32xbf16> to vector<32x32xbf16>
    %cst_16 = arith.constant dense<0.000000e+00> : vector<8x32xf32>
    %18 = tpu.matmul %5, %17, %cst_16 {dimension_numbers = #tpu.dot_dimension_numbers<[1], [0], [0], [1], [0, 0, 1, 1], [], []>} : vector<8x32xbf16>, vector<32x32xbf16>, vector<8x32xf32> -> vector<8x32xf32>
    %19 = arith.addf %15, %18 : vector<8x32xf32>
    %c2 = arith.constant 2 : index
    %20 = arith.index_cast %c0_i32_1 : i32 to index
    %c0_17 = arith.constant 0 : index
    %c0_18 = arith.constant 0 : index
    %21 = vector.load %arg1[%c2, %20, %c0_17, %c0_18] : memref<4x8x8x32xf32, #tpu.memory_space<vmem>>, vector<1x1x8x32xf32>
    %22 = vector.shape_cast %21 : vector<1x1x8x32xf32> to vector<8x32xf32>
    %c2_19 = arith.constant 2 : index
    %c0_20 = arith.constant 0 : index
    %c0_21 = arith.constant 0 : index
    %23 = vector.load %arg2[%c2_19, %c0_20, %c0_21] : memref<4x32x32xbf16, #tpu.memory_space<vmem>>, vector<1x32x32xbf16>
    %24 = vector.shape_cast %23 : vector<1x32x32xbf16> to vector<32x32xbf16>
    %cst_22 = arith.constant dense<0.000000e+00> : vector<8x32xf32>
    %25 = tpu.matmul %5, %24, %cst_22 {dimension_numbers = #tpu.dot_dimension_numbers<[1], [0], [0], [1], [0, 0, 1, 1], [], []>} : vector<8x32xbf16>, vector<32x32xbf16>, vector<8x32xf32> -> vector<8x32xf32>
    %26 = arith.addf %22, %25 : vector<8x32xf32>
    %c3 = arith.constant 3 : index
    %27 = arith.index_cast %c0_i32_1 : i32 to index
    %c0_23 = arith.constant 0 : index
    %c0_24 = arith.constant 0 : index
    %28 = vector.load %arg1[%c3, %27, %c0_23, %c0_24] : memref<4x8x8x32xf32, #tpu.memory_space<vmem>>, vector<1x1x8x32xf32>
    %29 = vector.shape_cast %28 : vector<1x1x8x32xf32> to vector<8x32xf32>
    %c3_25 = arith.constant 3 : index
    %c0_26 = arith.constant 0 : index
    %c0_27 = arith.constant 0 : index
    %30 = vector.load %arg2[%c3_25, %c0_26, %c0_27] : memref<4x32x32xbf16, #tpu.memory_space<vmem>>, vector<1x32x32xbf16>
    %31 = vector.shape_cast %30 : vector<1x32x32xbf16> to vector<32x32xbf16>
    %cst_28 = arith.constant dense<0.000000e+00> : vector<8x32xf32>
    %32 = tpu.matmul %5, %31, %cst_28 {dimension_numbers = #tpu.dot_dimension_numbers<[1], [0], [0], [1], [0, 0, 1, 1], [], []>} : vector<8x32xbf16>, vector<32x32xbf16>, vector<8x32xf32> -> vector<8x32xf32>
    %33 = arith.addf %29, %32 : vector<8x32xf32>
    %34 = arith.negf %12 : vector<8x32xf32>
    %35 = math.exp %34 : vector<8x32xf32>
    %cst_29 = arith.constant 1.000000e+00 : f32
    %36 = vector.broadcast %cst_29 : f32 to vector<8x32xf32>
    %37 = arith.addf %36, %35 : vector<8x32xf32>
    %38 = arith.divf %36, %37 : vector<8x32xf32>
    %39 = arith.negf %19 : vector<8x32xf32>
    %40 = math.exp %39 : vector<8x32xf32>
    %cst_30 = arith.constant 1.000000e+00 : f32
    %41 = vector.broadcast %cst_30 : f32 to vector<8x32xf32>
    %42 = arith.addf %41, %40 : vector<8x32xf32>
    %43 = arith.divf %41, %42 : vector<8x32xf32>
    %44 = math.tanh %26 : vector<8x32xf32>
    %45 = arith.negf %33 : vector<8x32xf32>
    %46 = math.exp %45 : vector<8x32xf32>
    %cst_31 = arith.constant 1.000000e+00 : f32
    %47 = vector.broadcast %cst_31 : f32 to vector<8x32xf32>
    %48 = arith.addf %47, %46 : vector<8x32xf32>
    %49 = arith.divf %47, %48 : vector<8x32xf32>
    %50 = arith.mulf %43, %4 : vector<8x32xf32>
    %51 = arith.mulf %38, %44 : vector<8x32xf32>
    %52 = arith.addf %50, %51 : vector<8x32xf32>
    %53 = math.tanh %52 : vector<8x32xf32>
    %54 = arith.mulf %49, %53 : vector<8x32xf32>
    %c0_32 = arith.constant 0 : index
    %c0_33 = arith.constant 0 : index
    %55 = vector.load %arg5[%c0_32, %c0_33] : memref<8x32xf32, #tpu.memory_space<vmem>>, vector<8x32xf32>
    tpu.vector_store %arg5[%c0_32, %c0_33], %52 {strides = array<i32>} : memref<8x32xf32, #tpu.memory_space<vmem>>, vector<8x32xf32>,
    %c0_34 = arith.constant 0 : index
    %c0_35 = arith.constant 0 : index
    %56 = vector.load %arg4[%c0_34, %c0_35] : memref<8x32xf32, #tpu.memory_space<vmem>>, vector<8x32xf32>
    tpu.vector_store %arg4[%c0_34, %c0_35], %54 {strides = array<i32>} : memref<8x32xf32, #tpu.memory_space<vmem>>, vector<8x32xf32>,
    %57 = arith.index_cast %c0_i32_1 : i32 to index
    %c0_36 = arith.constant 0 : index
    %c0_37 = arith.constant 0 : index
    %58 = vector.load %arg3[%57, %c0_36, %c0_37] : memref<8x8x32xf32, #tpu.memory_space<vmem>>, vector<1x8x32xf32>
    %59 = vector.shape_cast %58 : vector<1x8x32xf32> to vector<8x32xf32>
    %60 = vector.shape_cast %54 : vector<8x32xf32> to vector<1x8x32xf32>
    tpu.vector_store %arg3[%57, %c0_36, %c0_37], %60 {strides = array<i32>} : memref<8x8x32xf32, #tpu.memory_space<vmem>>, vector<1x8x32xf32>,
    %c1_i32 = arith.constant 1 : i32
    %c0_38 = arith.constant 0 : index
    %c0_39 = arith.constant 0 : index
    %61 = vector.load %arg4[%c0_38, %c0_39] : memref<8x32xf32, #tpu.memory_space<vmem>>, vector<8x32xf32>
    %c0_40 = arith.constant 0 : index
    %c0_41 = arith.constant 0 : index
    %62 = vector.load %arg5[%c0_40, %c0_41] : memref<8x32xf32, #tpu.memory_space<vmem>>, vector<8x32xf32>
    %63 = arith.truncf %61 : vector<8x32xf32> to vector<8x32xbf16>
    %c0_42 = arith.constant 0 : index
    %64 = arith.index_cast %c1_i32 : i32 to index
    %c0_43 = arith.constant 0 : index
    %c0_44 = arith.constant 0 : index
    %65 = vector.load %arg1[%c0_42, %64, %c0_43, %c0_44] : memref<4x8x8x32xf32, #tpu.memory_space<vmem>>, vector<1x1x8x32xf32>
    %66 = vector.shape_cast %65 : vector<1x1x8x32xf32> to vector<8x32xf32>
    %c0_45 = arith.constant 0 : index
    %c0_46 = arith.constant 0 : index
    %c0_47 = arith.constant 0 : index
    %67 = vector.load %arg2[%c0_45, %c0_46, %c0_47] : memref<4x32x32xbf16, #tpu.memory_space<vmem>>, vector<1x32x32xbf16>
    %68 = vector.shape_cast %67 : vector<1x32x32xbf16> to vector<32x32xbf16>
    %cst_48 = arith.constant dense<0.000000e+00> : vector<8x32xf32>
    %69 = tpu.matmul %63, %68, %cst_48 {dimension_numbers = #tpu.dot_dimension_numbers<[1], [0], [0], [1], [0, 0, 1, 1], [], []>} : vector<8x32xbf16>, vector<32x32xbf16>, vector<8x32xf32> -> vector<8x32xf32>
    %70 = arith.addf %66, %69 : vector<8x32xf32>
    %c1_49 = arith.constant 1 : index
    %71 = arith.index_cast %c1_i32 : i32 to index
    %c0_50 = arith.constant 0 : index
    %c0_51 = arith.constant 0 : index
    %72 = vector.load %arg1[%c1_49, %71, %c0_50, %c0_51] : memref<4x8x8x32xf32, #tpu.memory_space<vmem>>, vector<1x1x8x32xf32>
    %73 = vector.shape_cast %72 : vector<1x1x8x32xf32> to vector<8x32xf32>
    %c1_52 = arith.constant 1 : index
    %c0_53 = arith.constant 0 : index
    %c0_54 = arith.constant 0 : index
    %74 = vector.load %arg2[%c1_52, %c0_53, %c0_54] : memref<4x32x32xbf16, #tpu.memory_space<vmem>>, vector<1x32x32xbf16>
    %75 = vector.shape_cast %74 : vector<1x32x32xbf16> to vector<32x32xbf16>
    %cst_55 = arith.constant dense<0.000000e+00> : vector<8x32xf32>
    %76 = tpu.matmul %63, %75, %cst_55 {dimension_numbers = #tpu.dot_dimension_numbers<[1], [0], [0], [1], [0, 0, 1, 1], [], []>} : vector<8x32xbf16>, vector<32x32xbf16>, vector<8x32xf32> -> vector<8x32xf32>
    %77 = arith.addf %73, %76 : vector<8x32xf32>
    %c2_56 = arith.constant 2 : index
    %78 = arith.index_cast %c1_i32 : i32 to index
    %c0_57 = arith.constant 0 : index
    %c0_58 = arith.constant 0 : index
    %79 = vector.load %arg1[%c2_56, %78, %c0_57, %c0_58] : memref<4x8x8x32xf32, #tpu.memory_space<vmem>>, vector<1x1x8x32xf32>
    %80 = vector.shape_cast %79 : vector<1x1x8x32xf32> to vector<8x32xf32>
    %c2_59 = arith.constant 2 : index
    %c0_60 = arith.constant 0 : index
    %c0_61 = arith.constant 0 : index
    %81 = vector.load %arg2[%c2_59, %c0_60, %c0_61] : memref<4x32x32xbf16, #tpu.memory_space<vmem>>, vector<1x32x32xbf16>
    %82 = vector.shape_cast %81 : vector<1x32x32xbf16> to vector<32x32xbf16>
    %cst_62 = arith.constant dense<0.000000e+00> : vector<8x32xf32>
    %83 = tpu.matmul %63, %82, %cst_62 {dimension_numbers = #tpu.dot_dimension_numbers<[1], [0], [0], [1], [0, 0, 1, 1], [], []>} : vector<8x32xbf16>, vector<32x32xbf16>, vector<8x32xf32> -> vector<8x32xf32>
    %84 = arith.addf %80, %83 : vector<8x32xf32>
    %c3_63 = arith.constant 3 : index
    %85 = arith.index_cast %c1_i32 : i32 to index
    %c0_64 = arith.constant 0 : index
    %c0_65 = arith.constant 0 : index
    %86 = vector.load %arg1[%c3_63, %85, %c0_64, %c0_65] : memref<4x8x8x32xf32, #tpu.memory_space<vmem>>, vector<1x1x8x32xf32>
    %87 = vector.shape_cast %86 : vector<1x1x8x32xf32> to vector<8x32xf32>
    %c3_66 = arith.constant 3 : index
    %c0_67 = arith.constant 0 : index
    %c0_68 = arith.constant 0 : index
    %88 = vector.load %arg2[%c3_66, %c0_67, %c0_68] : memref<4x32x32xbf16, #tpu.memory_space<vmem>>, vector<1x32x32xbf16>
    %89 = vector.shape_cast %88 : vector<1x32x32xbf16> to vector<32x32xbf16>
    %cst_69 = arith.constant dense<0.000000e+00> : vector<8x32xf32>
    %90 = tpu.matmul %63, %89, %cst_69 {dimension_numbers = #tpu.dot_dimension_numbers<[1], [0], [0], [1], [0, 0, 1, 1], [], []>} : vector<8x32xbf16>, vector<32x32xbf16>, vector<8x32xf32> -> vector<8x32xf32>
    %91 = arith.addf %87, %90 : vector<8x32xf32>
    %92 = arith.negf %70 : vector<8x32xf32>
    %93 = math.exp %92 : vector<8x32xf32>
    %cst_70 = arith.constant 1.000000e+00 : f32
    %94 = vector.broadcast %cst_70 : f32 to vector<8x32xf32>
    %95 = arith.addf %94, %93 : vector<8x32xf32>
    %96 = arith.divf %94, %95 : vector<8x32xf32>
    %97 = arith.negf %77 : vector<8x32xf32>
    %98 = math.exp %97 : vector<8x32xf32>
    %cst_71 = arith.constant 1.000000e+00 : f32
    %99 = vector.broadcast %cst_71 : f32 to vector<8x32xf32>
    %100 = arith.addf %99, %98 : vector<8x32xf32>
    %101 = arith.divf %99, %100 : vector<8x32xf32>
    %102 = math.tanh %84 : vector<8x32xf32>
    %103 = arith.negf %91 : vector<8x32xf32>
    %104 = math.exp %103 : vector<8x32xf32>
    %cst_72 = arith.constant 1.000000e+00 : f32
    %105 = vector.broadcast %cst_72 : f32 to vector<8x32xf32>
    %106 = arith.addf %105, %104 : vector<8x32xf32>
    %107 = arith.divf %105, %106 : vector<8x32xf32>
    %108 = arith.mulf %101, %62 : vector<8x32xf32>
    %109 = arith.mulf %96, %102 : vector<8x32xf32>
    %110 = arith.addf %108, %109 : vector<8x32xf32>
    %111 = math.tanh %110 : vector<8x32xf32>
    %112 = arith.mulf %107, %111 : vector<8x32xf32>
    %c0_73 = arith.constant 0 : index
    %c0_74 = arith.constant 0 : index
    %113 = vector.load %arg5[%c0_73, %c0_74] : memref<8x32xf32, #tpu.memory_space<vmem>>, vector<8x32xf32>
    tpu.vector_store %arg5[%c0_73, %c0_74], %110 {strides = array<i32>} : memref<8x32xf32, #tpu.memory_space<vmem>>, vector<8x32xf32>,
    %c0_75 = arith.constant 0 : index
    %c0_76 = arith.constant 0 : index
    %114 = vector.load %arg4[%c0_75, %c0_76] : memref<8x32xf32, #tpu.memory_space<vmem>>, vector<8x32xf32>
    tpu.vector_store %arg4[%c0_75, %c0_76], %112 {strides = array<i32>} : memref<8x32xf32, #tpu.memory_space<vmem>>, vector<8x32xf32>,
    %115 = arith.index_cast %c1_i32 : i32 to index
    %c0_77 = arith.constant 0 : index
    %c0_78 = arith.constant 0 : index
    %116 = vector.load %arg3[%115, %c0_77, %c0_78] : memref<8x8x32xf32, #tpu.memory_space<vmem>>, vector<1x8x32xf32>
    %117 = vector.shape_cast %116 : vector<1x8x32xf32> to vector<8x32xf32>
    %118 = vector.shape_cast %112 : vector<8x32xf32> to vector<1x8x32xf32>
    tpu.vector_store %arg3[%115, %c0_77, %c0_78], %118 {strides = array<i32>} : memref<8x8x32xf32, #tpu.memory_space<vmem>>, vector<1x8x32xf32>,
    %c2_i32 = arith.constant 2 : i32
    %c0_79 = arith.constant 0 : index
    %c0_80 = arith.constant 0 : index
    %119 = vector.load %arg4[%c0_79, %c0_80] : memref<8x32xf32, #tpu.memory_space<vmem>>, vector<8x32xf32>
    %c0_81 = arith.constant 0 : index
    %c0_82 = arith.constant 0 : index
    %120 = vector.load %arg5[%c0_81, %c0_82] : memref<8x32xf32, #tpu.memory_space<vmem>>, vector<8x32xf32>
    %121 = arith.truncf %119 : vector<8x32xf32> to vector<8x32xbf16>
    %c0_83 = arith.constant 0 : index
    %122 = arith.index_cast %c2_i32 : i32 to index
    %c0_84 = arith.constant 0 : index
    %c0_85 = arith.constant 0 : index
    %123 = vector.load %arg1[%c0_83, %122, %c0_84, %c0_85] : memref<4x8x8x32xf32, #tpu.memory_space<vmem>>, vector<1x1x8x32xf32>
    %124 = vector.shape_cast %123 : vector<1x1x8x32xf32> to vector<8x32xf32>
    %c0_86 = arith.constant 0 : index
    %c0_87 = arith.constant 0 : index
    %c0_88 = arith.constant 0 : index
    %125 = vector.load %arg2[%c0_86, %c0_87, %c0_88] : memref<4x32x32xbf16, #tpu.memory_space<vmem>>, vector<1x32x32xbf16>
    %126 = vector.shape_cast %125 : vector<1x32x32xbf16> to vector<32x32xbf16>
    %cst_89 = arith.constant dense<0.000000e+00> : vector<8x32xf32>
    %127 = tpu.matmul %121, %126, %cst_89 {dimension_numbers = #tpu.dot_dimension_numbers<[1], [0], [0], [1], [0, 0, 1, 1], [], []>} : vector<8x32xbf16>, vector<32x32xbf16>, vector<8x32xf32> -> vector<8x32xf32>
    %128 = arith.addf %124, %127 : vector<8x32xf32>
    %c1_90 = arith.constant 1 : index
    %129 = arith.index_cast %c2_i32 : i32 to index
    %c0_91 = arith.constant 0 : index
    %c0_92 = arith.constant 0 : index
    %130 = vector.load %arg1[%c1_90, %129, %c0_91, %c0_92] : memref<4x8x8x32xf32, #tpu.memory_space<vmem>>, vector<1x1x8x32xf32>
    %131 = vector.shape_cast %130 : vector<1x1x8x32xf32> to vector<8x32xf32>
    %c1_93 = arith.constant 1 : index
    %c0_94 = arith.constant 0 : index
    %c0_95 = arith.constant 0 : index
    %132 = vector.load %arg2[%c1_93, %c0_94, %c0_95] : memref<4x32x32xbf16, #tpu.memory_space<vmem>>, vector<1x32x32xbf16>
    %133 = vector.shape_cast %132 : vector<1x32x32xbf16> to vector<32x32xbf16>
    %cst_96 = arith.constant dense<0.000000e+00> : vector<8x32xf32>
    %134 = tpu.matmul %121, %133, %cst_96 {dimension_numbers = #tpu.dot_dimension_numbers<[1], [0], [0], [1], [0, 0, 1, 1], [], []>} : vector<8x32xbf16>, vector<32x32xbf16>, vector<8x32xf32> -> vector<8x32xf32>
    %135 = arith.addf %131, %134 : vector<8x32xf32>
    %c2_97 = arith.constant 2 : index
    %136 = arith.index_cast %c2_i32 : i32 to index
    %c0_98 = arith.constant 0 : index
    %c0_99 = arith.constant 0 : index
    %137 = vector.load %arg1[%c2_97, %136, %c0_98, %c0_99] : memref<4x8x8x32xf32, #tpu.memory_space<vmem>>, vector<1x1x8x32xf32>
    %138 = vector.shape_cast %137 : vector<1x1x8x32xf32> to vector<8x32xf32>
    %c2_100 = arith.constant 2 : index
    %c0_101 = arith.constant 0 : index
    %c0_102 = arith.constant 0 : index
    %139 = vector.load %arg2[%c2_100, %c0_101, %c0_102] : memref<4x32x32xbf16, #tpu.memory_space<vmem>>, vector<1x32x32xbf16>
    %140 = vector.shape_cast %139 : vector<1x32x32xbf16> to vector<32x32xbf16>
    %cst_103 = arith.constant dense<0.000000e+00> : vector<8x32xf32>
    %141 = tpu.matmul %121, %140, %cst_103 {dimension_numbers = #tpu.dot_dimension_numbers<[1], [0], [0], [1], [0, 0, 1, 1], [], []>} : vector<8x32xbf16>, vector<32x32xbf16>, vector<8x32xf32> -> vector<8x32xf32>
    %142 = arith.addf %138, %141 : vector<8x32xf32>
    %c3_104 = arith.constant 3 : index
    %143 = arith.index_cast %c2_i32 : i32 to index
    %c0_105 = arith.constant 0 : index
    %c0_106 = arith.constant 0 : index
    %144 = vector.load %arg1[%c3_104, %143, %c0_105, %c0_106] : memref<4x8x8x32xf32, #tpu.memory_space<vmem>>, vector<1x1x8x32xf32>
    %145 = vector.shape_cast %144 : vector<1x1x8x32xf32> to vector<8x32xf32>
    %c3_107 = arith.constant 3 : index
    %c0_108 = arith.constant 0 : index
    %c0_109 = arith.constant 0 : index
    %146 = vector.load %arg2[%c3_107, %c0_108, %c0_109] : memref<4x32x32xbf16, #tpu.memory_space<vmem>>, vector<1x32x32xbf16>
    %147 = vector.shape_cast %146 : vector<1x32x32xbf16> to vector<32x32xbf16>
    %cst_110 = arith.constant dense<0.000000e+00> : vector<8x32xf32>
    %148 = tpu.matmul %121, %147, %cst_110 {dimension_numbers = #tpu.dot_dimension_numbers<[1], [0], [0], [1], [0, 0, 1, 1], [], []>} : vector<8x32xbf16>, vector<32x32xbf16>, vector<8x32xf32> -> vector<8x32xf32>
    %149 = arith.addf %145, %148 : vector<8x32xf32>
    %150 = arith.negf %128 : vector<8x32xf32>
    %151 = math.exp %150 : vector<8x32xf32>
    %cst_111 = arith.constant 1.000000e+00 : f32
    %152 = vector.broadcast %cst_111 : f32 to vector<8x32xf32>
    %153 = arith.addf %152, %151 : vector<8x32xf32>
    %154 = arith.divf %152, %153 : vector<8x32xf32>
    %155 = arith.negf %135 : vector<8x32xf32>
    %156 = math.exp %155 : vector<8x32xf32>
    %cst_112 = arith.constant 1.000000e+00 : f32
    %157 = vector.broadcast %cst_112 : f32 to vector<8x32xf32>
    %158 = arith.addf %157, %156 : vector<8x32xf32>
    %159 = arith.divf %157, %158 : vector<8x32xf32>
    %160 = math.tanh %142 : vector<8x32xf32>
    %161 = arith.negf %149 : vector<8x32xf32>
    %162 = math.exp %161 : vector<8x32xf32>
    %cst_113 = arith.constant 1.000000e+00 : f32
    %163 = vector.broadcast %cst_113 : f32 to vector<8x32xf32>
    %164 = arith.addf %163, %162 : vector<8x32xf32>
    %165 = arith.divf %163, %164 : vector<8x32xf32>
    %166 = arith.mulf %159, %120 : vector<8x32xf32>
    %167 = arith.mulf %154, %160 : vector<8x32xf32>
    %168 = arith.addf %166, %167 : vector<8x32xf32>
    %169 = math.tanh %168 : vector<8x32xf32>
    %170 = arith.mulf %165, %169 : vector<8x32xf32>
    %c0_114 = arith.constant 0 : index
    %c0_115 = arith.constant 0 : index
    %171 = vector.load %arg5[%c0_114, %c0_115] : memref<8x32xf32, #tpu.memory_space<vmem>>, vector<8x32xf32>
    tpu.vector_store %arg5[%c0_114, %c0_115], %168 {strides = array<i32>} : memref<8x32xf32, #tpu.memory_space<vmem>>, vector<8x32xf32>,
    %c0_116 = arith.constant 0 : index
    %c0_117 = arith.constant 0 : index
    %172 = vector.load %arg4[%c0_116, %c0_117] : memref<8x32xf32, #tpu.memory_space<vmem>>, vector<8x32xf32>
    tpu.vector_store %arg4[%c0_116, %c0_117], %170 {strides = array<i32>} : memref<8x32xf32, #tpu.memory_space<vmem>>, vector<8x32xf32>,
    %173 = arith.index_cast %c2_i32 : i32 to index
    %c0_118 = arith.constant 0 : index
    %c0_119 = arith.constant 0 : index
    %174 = vector.load %arg3[%173, %c0_118, %c0_119] : memref<8x8x32xf32, #tpu.memory_space<vmem>>, vector<1x8x32xf32>
    %175 = vector.shape_cast %174 : vector<1x8x32xf32> to vector<8x32xf32>
    %176 = vector.shape_cast %170 : vector<8x32xf32> to vector<1x8x32xf32>
    tpu.vector_store %arg3[%173, %c0_118, %c0_119], %176 {strides = array<i32>} : memref<8x8x32xf32, #tpu.memory_space<vmem>>, vector<1x8x32xf32>,
    %c3_i32 = arith.constant 3 : i32
    %c0_120 = arith.constant 0 : index
    %c0_121 = arith.constant 0 : index
    %177 = vector.load %arg4[%c0_120, %c0_121] : memref<8x32xf32, #tpu.memory_space<vmem>>, vector<8x32xf32>
    %c0_122 = arith.constant 0 : index
    %c0_123 = arith.constant 0 : index
    %178 = vector.load %arg5[%c0_122, %c0_123] : memref<8x32xf32, #tpu.memory_space<vmem>>, vector<8x32xf32>
    %179 = arith.truncf %177 : vector<8x32xf32> to vector<8x32xbf16>
    %c0_124 = arith.constant 0 : index
    %180 = arith.index_cast %c3_i32 : i32 to index
    %c0_125 = arith.constant 0 : index
    %c0_126 = arith.constant 0 : index
    %181 = vector.load %arg1[%c0_124, %180, %c0_125, %c0_126] : memref<4x8x8x32xf32, #tpu.memory_space<vmem>>, vector<1x1x8x32xf32>
    %182 = vector.shape_cast %181 : vector<1x1x8x32xf32> to vector<8x32xf32>
    %c0_127 = arith.constant 0 : index
    %c0_128 = arith.constant 0 : index
    %c0_129 = arith.constant 0 : index
    %183 = vector.load %arg2[%c0_127, %c0_128, %c0_129] : memref<4x32x32xbf16, #tpu.memory_space<vmem>>, vector<1x32x32xbf16>
    %184 = vector.shape_cast %183 : vector<1x32x32xbf16> to vector<32x32xbf16>
    %cst_130 = arith.constant dense<0.000000e+00> : vector<8x32xf32>
    %185 = tpu.matmul %179, %184, %cst_130 {dimension_numbers = #tpu.dot_dimension_numbers<[1], [0], [0], [1], [0, 0, 1, 1], [], []>} : vector<8x32xbf16>, vector<32x32xbf16>, vector<8x32xf32> -> vector<8x32xf32>
    %186 = arith.addf %182, %185 : vector<8x32xf32>
    %c1_131 = arith.constant 1 : index
    %187 = arith.index_cast %c3_i32 : i32 to index
    %c0_132 = arith.constant 0 : index
    %c0_133 = arith.constant 0 : index
    %188 = vector.load %arg1[%c1_131, %187, %c0_132, %c0_133] : memref<4x8x8x32xf32, #tpu.memory_space<vmem>>, vector<1x1x8x32xf32>
    %189 = vector.shape_cast %188 : vector<1x1x8x32xf32> to vector<8x32xf32>
    %c1_134 = arith.constant 1 : index
    %c0_135 = arith.constant 0 : index
    %c0_136 = arith.constant 0 : index
    %190 = vector.load %arg2[%c1_134, %c0_135, %c0_136] : memref<4x32x32xbf16, #tpu.memory_space<vmem>>, vector<1x32x32xbf16>
    %191 = vector.shape_cast %190 : vector<1x32x32xbf16> to vector<32x32xbf16>
    %cst_137 = arith.constant dense<0.000000e+00> : vector<8x32xf32>
    %192 = tpu.matmul %179, %191, %cst_137 {dimension_numbers = #tpu.dot_dimension_numbers<[1], [0], [0], [1], [0, 0, 1, 1], [], []>} : vector<8x32xbf16>, vector<32x32xbf16>, vector<8x32xf32> -> vector<8x32xf32>
    %193 = arith.addf %189, %192 : vector<8x32xf32>
    %c2_138 = arith.constant 2 : index
    %194 = arith.index_cast %c3_i32 : i32 to index
    %c0_139 = arith.constant 0 : index
    %c0_140 = arith.constant 0 : index
    %195 = vector.load %arg1[%c2_138, %194, %c0_139, %c0_140] : memref<4x8x8x32xf32, #tpu.memory_space<vmem>>, vector<1x1x8x32xf32>
    %196 = vector.shape_cast %195 : vector<1x1x8x32xf32> to vector<8x32xf32>
    %c2_141 = arith.constant 2 : index
    %c0_142 = arith.constant 0 : index
    %c0_143 = arith.constant 0 : index
    %197 = vector.load %arg2[%c2_141, %c0_142, %c0_143] : memref<4x32x32xbf16, #tpu.memory_space<vmem>>, vector<1x32x32xbf16>
    %198 = vector.shape_cast %197 : vector<1x32x32xbf16> to vector<32x32xbf16>
    %cst_144 = arith.constant dense<0.000000e+00> : vector<8x32xf32>
    %199 = tpu.matmul %179, %198, %cst_144 {dimension_numbers = #tpu.dot_dimension_numbers<[1], [0], [0], [1], [0, 0, 1, 1], [], []>} : vector<8x32xbf16>, vector<32x32xbf16>, vector<8x32xf32> -> vector<8x32xf32>
    %200 = arith.addf %196, %199 : vector<8x32xf32>
    %c3_145 = arith.constant 3 : index
    %201 = arith.index_cast %c3_i32 : i32 to index
    %c0_146 = arith.constant 0 : index
    %c0_147 = arith.constant 0 : index
    %202 = vector.load %arg1[%c3_145, %201, %c0_146, %c0_147] : memref<4x8x8x32xf32, #tpu.memory_space<vmem>>, vector<1x1x8x32xf32>
    %203 = vector.shape_cast %202 : vector<1x1x8x32xf32> to vector<8x32xf32>
    %c3_148 = arith.constant 3 : index
    %c0_149 = arith.constant 0 : index
    %c0_150 = arith.constant 0 : index
    %204 = vector.load %arg2[%c3_148, %c0_149, %c0_150] : memref<4x32x32xbf16, #tpu.memory_space<vmem>>, vector<1x32x32xbf16>
    %205 = vector.shape_cast %204 : vector<1x32x32xbf16> to vector<32x32xbf16>
    %cst_151 = arith.constant dense<0.000000e+00> : vector<8x32xf32>
    %206 = tpu.matmul %179, %205, %cst_151 {dimension_numbers = #tpu.dot_dimension_numbers<[1], [0], [0], [1], [0, 0, 1, 1], [], []>} : vector<8x32xbf16>, vector<32x32xbf16>, vector<8x32xf32> -> vector<8x32xf32>
    %207 = arith.addf %203, %206 : vector<8x32xf32>
    %208 = arith.negf %186 : vector<8x32xf32>
    %209 = math.exp %208 : vector<8x32xf32>
    %cst_152 = arith.constant 1.000000e+00 : f32
    %210 = vector.broadcast %cst_152 : f32 to vector<8x32xf32>
    %211 = arith.addf %210, %209 : vector<8x32xf32>
    %212 = arith.divf %210, %211 : vector<8x32xf32>
    %213 = arith.negf %193 : vector<8x32xf32>
    %214 = math.exp %213 : vector<8x32xf32>
    %cst_153 = arith.constant 1.000000e+00 : f32
    %215 = vector.broadcast %cst_153 : f32 to vector<8x32xf32>
    %216 = arith.addf %215, %214 : vector<8x32xf32>
    %217 = arith.divf %215, %216 : vector<8x32xf32>
    %218 = math.tanh %200 : vector<8x32xf32>
    %219 = arith.negf %207 : vector<8x32xf32>
    %220 = math.exp %219 : vector<8x32xf32>
    %cst_154 = arith.constant 1.000000e+00 : f32
    %221 = vector.broadcast %cst_154 : f32 to vector<8x32xf32>
    %222 = arith.addf %221, %220 : vector<8x32xf32>
    %223 = arith.divf %221, %222 : vector<8x32xf32>
    %224 = arith.mulf %217, %178 : vector<8x32xf32>
    %225 = arith.mulf %212, %218 : vector<8x32xf32>
    %226 = arith.addf %224, %225 : vector<8x32xf32>
    %227 = math.tanh %226 : vector<8x32xf32>
    %228 = arith.mulf %223, %227 : vector<8x32xf32>
    %c0_155 = arith.constant 0 : index
    %c0_156 = arith.constant 0 : index
    %229 = vector.load %arg5[%c0_155, %c0_156] : memref<8x32xf32, #tpu.memory_space<vmem>>, vector<8x32xf32>
    tpu.vector_store %arg5[%c0_155, %c0_156], %226 {strides = array<i32>} : memref<8x32xf32, #tpu.memory_space<vmem>>, vector<8x32xf32>,
    %c0_157 = arith.constant 0 : index
    %c0_158 = arith.constant 0 : index
    %230 = vector.load %arg4[%c0_157, %c0_158] : memref<8x32xf32, #tpu.memory_space<vmem>>, vector<8x32xf32>
    tpu.vector_store %arg4[%c0_157, %c0_158], %228 {strides = array<i32>} : memref<8x32xf32, #tpu.memory_space<vmem>>, vector<8x32xf32>,
    %231 = arith.index_cast %c3_i32 : i32 to index
    %c0_159 = arith.constant 0 : index
    %c0_160 = arith.constant 0 : index
    %232 = vector.load %arg3[%231, %c0_159, %c0_160] : memref<8x8x32xf32, #tpu.memory_space<vmem>>, vector<1x8x32xf32>
    %233 = vector.shape_cast %232 : vector<1x8x32xf32> to vector<8x32xf32>
    %234 = vector.shape_cast %228 : vector<8x32xf32> to vector<1x8x32xf32>
    tpu.vector_store %arg3[%231, %c0_159, %c0_160], %234 {strides = array<i32>} : memref<8x8x32xf32, #tpu.memory_space<vmem>>, vector<1x8x32xf32>,
    %c4_i32 = arith.constant 4 : i32
    %c0_161 = arith.constant 0 : index
    %c0_162 = arith.constant 0 : index
    %235 = vector.load %arg4[%c0_161, %c0_162] : memref<8x32xf32, #tpu.memory_space<vmem>>, vector<8x32xf32>
    %c0_163 = arith.constant 0 : index
    %c0_164 = arith.constant 0 : index
    %236 = vector.load %arg5[%c0_163, %c0_164] : memref<8x32xf32, #tpu.memory_space<vmem>>, vector<8x32xf32>
    %237 = arith.truncf %235 : vector<8x32xf32> to vector<8x32xbf16>
    %c0_165 = arith.constant 0 : index
    %238 = arith.index_cast %c4_i32 : i32 to index
    %c0_166 = arith.constant 0 : index
    %c0_167 = arith.constant 0 : index
    %239 = vector.load %arg1[%c0_165, %238, %c0_166, %c0_167] : memref<4x8x8x32xf32, #tpu.memory_space<vmem>>, vector<1x1x8x32xf32>
    %240 = vector.shape_cast %239 : vector<1x1x8x32xf32> to vector<8x32xf32>
    %c0_168 = arith.constant 0 : index
    %c0_169 = arith.constant 0 : index
    %c0_170 = arith.constant 0 : index
    %241 = vector.load %arg2[%c0_168, %c0_169, %c0_170] : memref<4x32x32xbf16, #tpu.memory_space<vmem>>, vector<1x32x32xbf16>
    %242 = vector.shape_cast %241 : vector<1x32x32xbf16> to vector<32x32xbf16>
    %cst_171 = arith.constant dense<0.000000e+00> : vector<8x32xf32>
    %243 = tpu.matmul %237, %242, %cst_171 {dimension_numbers = #tpu.dot_dimension_numbers<[1], [0], [0], [1], [0, 0, 1, 1], [], []>} : vector<8x32xbf16>, vector<32x32xbf16>, vector<8x32xf32> -> vector<8x32xf32>
    %244 = arith.addf %240, %243 : vector<8x32xf32>
    %c1_172 = arith.constant 1 : index
    %245 = arith.index_cast %c4_i32 : i32 to index
    %c0_173 = arith.constant 0 : index
    %c0_174 = arith.constant 0 : index
    %246 = vector.load %arg1[%c1_172, %245, %c0_173, %c0_174] : memref<4x8x8x32xf32, #tpu.memory_space<vmem>>, vector<1x1x8x32xf32>
    %247 = vector.shape_cast %246 : vector<1x1x8x32xf32> to vector<8x32xf32>
    %c1_175 = arith.constant 1 : index
    %c0_176 = arith.constant 0 : index
    %c0_177 = arith.constant 0 : index
    %248 = vector.load %arg2[%c1_175, %c0_176, %c0_177] : memref<4x32x32xbf16, #tpu.memory_space<vmem>>, vector<1x32x32xbf16>
    %249 = vector.shape_cast %248 : vector<1x32x32xbf16> to vector<32x32xbf16>
    %cst_178 = arith.constant dense<0.000000e+00> : vector<8x32xf32>
    %250 = tpu.matmul %237, %249, %cst_178 {dimension_numbers = #tpu.dot_dimension_numbers<[1], [0], [0], [1], [0, 0, 1, 1], [], []>} : vector<8x32xbf16>, vector<32x32xbf16>, vector<8x32xf32> -> vector<8x32xf32>
    %251 = arith.addf %247, %250 : vector<8x32xf32>
    %c2_179 = arith.constant 2 : index
    %252 = arith.index_cast %c4_i32 : i32 to index
    %c0_180 = arith.constant 0 : index
    %c0_181 = arith.constant 0 : index
    %253 = vector.load %arg1[%c2_179, %252, %c0_180, %c0_181] : memref<4x8x8x32xf32, #tpu.memory_space<vmem>>, vector<1x1x8x32xf32>
    %254 = vector.shape_cast %253 : vector<1x1x8x32xf32> to vector<8x32xf32>
    %c2_182 = arith.constant 2 : index
    %c0_183 = arith.constant 0 : index
    %c0_184 = arith.constant 0 : index
    %255 = vector.load %arg2[%c2_182, %c0_183, %c0_184] : memref<4x32x32xbf16, #tpu.memory_space<vmem>>, vector<1x32x32xbf16>
    %256 = vector.shape_cast %255 : vector<1x32x32xbf16> to vector<32x32xbf16>
    %cst_185 = arith.constant dense<0.000000e+00> : vector<8x32xf32>
    %257 = tpu.matmul %237, %256, %cst_185 {dimension_numbers = #tpu.dot_dimension_numbers<[1], [0], [0], [1], [0, 0, 1, 1], [], []>} : vector<8x32xbf16>, vector<32x32xbf16>, vector<8x32xf32> -> vector<8x32xf32>
    %258 = arith.addf %254, %257 : vector<8x32xf32>
    %c3_186 = arith.constant 3 : index
    %259 = arith.index_cast %c4_i32 : i32 to index
    %c0_187 = arith.constant 0 : index
    %c0_188 = arith.constant 0 : index
    %260 = vector.load %arg1[%c3_186, %259, %c0_187, %c0_188] : memref<4x8x8x32xf32, #tpu.memory_space<vmem>>, vector<1x1x8x32xf32>
    %261 = vector.shape_cast %260 : vector<1x1x8x32xf32> to vector<8x32xf32>
    %c3_189 = arith.constant 3 : index
    %c0_190 = arith.constant 0 : index
    %c0_191 = arith.constant 0 : index
    %262 = vector.load %arg2[%c3_189, %c0_190, %c0_191] : memref<4x32x32xbf16, #tpu.memory_space<vmem>>, vector<1x32x32xbf16>
    %263 = vector.shape_cast %262 : vector<1x32x32xbf16> to vector<32x32xbf16>
    %cst_192 = arith.constant dense<0.000000e+00> : vector<8x32xf32>
    %264 = tpu.matmul %237, %263, %cst_192 {dimension_numbers = #tpu.dot_dimension_numbers<[1], [0], [0], [1], [0, 0, 1, 1], [], []>} : vector<8x32xbf16>, vector<32x32xbf16>, vector<8x32xf32> -> vector<8x32xf32>
    %265 = arith.addf %261, %264 : vector<8x32xf32>
    %266 = arith.negf %244 : vector<8x32xf32>
    %267 = math.exp %266 : vector<8x32xf32>
    %cst_193 = arith.constant 1.000000e+00 : f32
    %268 = vector.broadcast %cst_193 : f32 to vector<8x32xf32>
    %269 = arith.addf %268, %267 : vector<8x32xf32>
    %270 = arith.divf %268, %269 : vector<8x32xf32>
    %271 = arith.negf %251 : vector<8x32xf32>
    %272 = math.exp %271 : vector<8x32xf32>
    %cst_194 = arith.constant 1.000000e+00 : f32
    %273 = vector.broadcast %cst_194 : f32 to vector<8x32xf32>
    %274 = arith.addf %273, %272 : vector<8x32xf32>
    %275 = arith.divf %273, %274 : vector<8x32xf32>
    %276 = math.tanh %258 : vector<8x32xf32>
    %277 = arith.negf %265 : vector<8x32xf32>
    %278 = math.exp %277 : vector<8x32xf32>
    %cst_195 = arith.constant 1.000000e+00 : f32
    %279 = vector.broadcast %cst_195 : f32 to vector<8x32xf32>
    %280 = arith.addf %279, %278 : vector<8x32xf32>
    %281 = arith.divf %279, %280 : vector<8x32xf32>
    %282 = arith.mulf %275, %236 : vector<8x32xf32>
    %283 = arith.mulf %270, %276 : vector<8x32xf32>
    %284 = arith.addf %282, %283 : vector<8x32xf32>
    %285 = math.tanh %284 : vector<8x32xf32>
    %286 = arith.mulf %281, %285 : vector<8x32xf32>
    %c0_196 = arith.constant 0 : index
    %c0_197 = arith.constant 0 : index
    %287 = vector.load %arg5[%c0_196, %c0_197] : memref<8x32xf32, #tpu.memory_space<vmem>>, vector<8x32xf32>
    tpu.vector_store %arg5[%c0_196, %c0_197], %284 {strides = array<i32>} : memref<8x32xf32, #tpu.memory_space<vmem>>, vector<8x32xf32>,
    %c0_198 = arith.constant 0 : index
    %c0_199 = arith.constant 0 : index
    %288 = vector.load %arg4[%c0_198, %c0_199] : memref<8x32xf32, #tpu.memory_space<vmem>>, vector<8x32xf32>
    tpu.vector_store %arg4[%c0_198, %c0_199], %286 {strides = array<i32>} : memref<8x32xf32, #tpu.memory_space<vmem>>, vector<8x32xf32>,
    %289 = arith.index_cast %c4_i32 : i32 to index
    %c0_200 = arith.constant 0 : index
    %c0_201 = arith.constant 0 : index
    %290 = vector.load %arg3[%289, %c0_200, %c0_201] : memref<8x8x32xf32, #tpu.memory_space<vmem>>, vector<1x8x32xf32>
    %291 = vector.shape_cast %290 : vector<1x8x32xf32> to vector<8x32xf32>
    %292 = vector.shape_cast %286 : vector<8x32xf32> to vector<1x8x32xf32>
    tpu.vector_store %arg3[%289, %c0_200, %c0_201], %292 {strides = array<i32>} : memref<8x8x32xf32, #tpu.memory_space<vmem>>, vector<1x8x32xf32>,
    %c5_i32 = arith.constant 5 : i32
    %c0_202 = arith.constant 0 : index
    %c0_203 = arith.constant 0 : index
    %293 = vector.load %arg4[%c0_202, %c0_203] : memref<8x32xf32, #tpu.memory_space<vmem>>, vector<8x32xf32>
    %c0_204 = arith.constant 0 : index
    %c0_205 = arith.constant 0 : index
    %294 = vector.load %arg5[%c0_204, %c0_205] : memref<8x32xf32, #tpu.memory_space<vmem>>, vector<8x32xf32>
    %295 = arith.truncf %293 : vector<8x32xf32> to vector<8x32xbf16>
    %c0_206 = arith.constant 0 : index
    %296 = arith.index_cast %c5_i32 : i32 to index
    %c0_207 = arith.constant 0 : index
    %c0_208 = arith.constant 0 : index
    %297 = vector.load %arg1[%c0_206, %296, %c0_207, %c0_208] : memref<4x8x8x32xf32, #tpu.memory_space<vmem>>, vector<1x1x8x32xf32>
    %298 = vector.shape_cast %297 : vector<1x1x8x32xf32> to vector<8x32xf32>
    %c0_209 = arith.constant 0 : index
    %c0_210 = arith.constant 0 : index
    %c0_211 = arith.constant 0 : index
    %299 = vector.load %arg2[%c0_209, %c0_210, %c0_211] : memref<4x32x32xbf16, #tpu.memory_space<vmem>>, vector<1x32x32xbf16>
    %300 = vector.shape_cast %299 : vector<1x32x32xbf16> to vector<32x32xbf16>
    %cst_212 = arith.constant dense<0.000000e+00> : vector<8x32xf32>
    %301 = tpu.matmul %295, %300, %cst_212 {dimension_numbers = #tpu.dot_dimension_numbers<[1], [0], [0], [1], [0, 0, 1, 1], [], []>} : vector<8x32xbf16>, vector<32x32xbf16>, vector<8x32xf32> -> vector<8x32xf32>
    %302 = arith.addf %298, %301 : vector<8x32xf32>
    %c1_213 = arith.constant 1 : index
    %303 = arith.index_cast %c5_i32 : i32 to index
    %c0_214 = arith.constant 0 : index
    %c0_215 = arith.constant 0 : index
    %304 = vector.load %arg1[%c1_213, %303, %c0_214, %c0_215] : memref<4x8x8x32xf32, #tpu.memory_space<vmem>>, vector<1x1x8x32xf32>
    %305 = vector.shape_cast %304 : vector<1x1x8x32xf32> to vector<8x32xf32>
    %c1_216 = arith.constant 1 : index
    %c0_217 = arith.constant 0 : index
    %c0_218 = arith.constant 0 : index
    %306 = vector.load %arg2[%c1_216, %c0_217, %c0_218] : memref<4x32x32xbf16, #tpu.memory_space<vmem>>, vector<1x32x32xbf16>
    %307 = vector.shape_cast %306 : vector<1x32x32xbf16> to vector<32x32xbf16>
    %cst_219 = arith.constant dense<0.000000e+00> : vector<8x32xf32>
    %308 = tpu.matmul %295, %307, %cst_219 {dimension_numbers = #tpu.dot_dimension_numbers<[1], [0], [0], [1], [0, 0, 1, 1], [], []>} : vector<8x32xbf16>, vector<32x32xbf16>, vector<8x32xf32> -> vector<8x32xf32>
    %309 = arith.addf %305, %308 : vector<8x32xf32>
    %c2_220 = arith.constant 2 : index
    %310 = arith.index_cast %c5_i32 : i32 to index
    %c0_221 = arith.constant 0 : index
    %c0_222 = arith.constant 0 : index
    %311 = vector.load %arg1[%c2_220, %310, %c0_221, %c0_222] : memref<4x8x8x32xf32, #tpu.memory_space<vmem>>, vector<1x1x8x32xf32>
    %312 = vector.shape_cast %311 : vector<1x1x8x32xf32> to vector<8x32xf32>
    %c2_223 = arith.constant 2 : index
    %c0_224 = arith.constant 0 : index
    %c0_225 = arith.constant 0 : index
    %313 = vector.load %arg2[%c2_223, %c0_224, %c0_225] : memref<4x32x32xbf16, #tpu.memory_space<vmem>>, vector<1x32x32xbf16>
    %314 = vector.shape_cast %313 : vector<1x32x32xbf16> to vector<32x32xbf16>
    %cst_226 = arith.constant dense<0.000000e+00> : vector<8x32xf32>
    %315 = tpu.matmul %295, %314, %cst_226 {dimension_numbers = #tpu.dot_dimension_numbers<[1], [0], [0], [1], [0, 0, 1, 1], [], []>} : vector<8x32xbf16>, vector<32x32xbf16>, vector<8x32xf32> -> vector<8x32xf32>
    %316 = arith.addf %312, %315 : vector<8x32xf32>
    %c3_227 = arith.constant 3 : index
    %317 = arith.index_cast %c5_i32 : i32 to index
    %c0_228 = arith.constant 0 : index
    %c0_229 = arith.constant 0 : index
    %318 = vector.load %arg1[%c3_227, %317, %c0_228, %c0_229] : memref<4x8x8x32xf32, #tpu.memory_space<vmem>>, vector<1x1x8x32xf32>
    %319 = vector.shape_cast %318 : vector<1x1x8x32xf32> to vector<8x32xf32>
    %c3_230 = arith.constant 3 : index
    %c0_231 = arith.constant 0 : index
    %c0_232 = arith.constant 0 : index
    %320 = vector.load %arg2[%c3_230, %c0_231, %c0_232] : memref<4x32x32xbf16, #tpu.memory_space<vmem>>, vector<1x32x32xbf16>
    %321 = vector.shape_cast %320 : vector<1x32x32xbf16> to vector<32x32xbf16>
    %cst_233 = arith.constant dense<0.000000e+00> : vector<8x32xf32>
    %322 = tpu.matmul %295, %321, %cst_233 {dimension_numbers = #tpu.dot_dimension_numbers<[1], [0], [0], [1], [0, 0, 1, 1], [], []>} : vector<8x32xbf16>, vector<32x32xbf16>, vector<8x32xf32> -> vector<8x32xf32>
    %323 = arith.addf %319, %322 : vector<8x32xf32>
    %324 = arith.negf %302 : vector<8x32xf32>
    %325 = math.exp %324 : vector<8x32xf32>
    %cst_234 = arith.constant 1.000000e+00 : f32
    %326 = vector.broadcast %cst_234 : f32 to vector<8x32xf32>
    %327 = arith.addf %326, %325 : vector<8x32xf32>
    %328 = arith.divf %326, %327 : vector<8x32xf32>
    %329 = arith.negf %309 : vector<8x32xf32>
    %330 = math.exp %329 : vector<8x32xf32>
    %cst_235 = arith.constant 1.000000e+00 : f32
    %331 = vector.broadcast %cst_235 : f32 to vector<8x32xf32>
    %332 = arith.addf %331, %330 : vector<8x32xf32>
    %333 = arith.divf %331, %332 : vector<8x32xf32>
    %334 = math.tanh %316 : vector<8x32xf32>
    %335 = arith.negf %323 : vector<8x32xf32>
    %336 = math.exp %335 : vector<8x32xf32>
    %cst_236 = arith.constant 1.000000e+00 : f32
    %337 = vector.broadcast %cst_236 : f32 to vector<8x32xf32>
    %338 = arith.addf %337, %336 : vector<8x32xf32>
    %339 = arith.divf %337, %338 : vector<8x32xf32>
    %340 = arith.mulf %333, %294 : vector<8x32xf32>
    %341 = arith.mulf %328, %334 : vector<8x32xf32>
    %342 = arith.addf %340, %341 : vector<8x32xf32>
    %343 = math.tanh %342 : vector<8x32xf32>
    %344 = arith.mulf %339, %343 : vector<8x32xf32>
    %c0_237 = arith.constant 0 : index
    %c0_238 = arith.constant 0 : index
    %345 = vector.load %arg5[%c0_237, %c0_238] : memref<8x32xf32, #tpu.memory_space<vmem>>, vector<8x32xf32>
    tpu.vector_store %arg5[%c0_237, %c0_238], %342 {strides = array<i32>} : memref<8x32xf32, #tpu.memory_space<vmem>>, vector<8x32xf32>,
    %c0_239 = arith.constant 0 : index
    %c0_240 = arith.constant 0 : index
    %346 = vector.load %arg4[%c0_239, %c0_240] : memref<8x32xf32, #tpu.memory_space<vmem>>, vector<8x32xf32>
    tpu.vector_store %arg4[%c0_239, %c0_240], %344 {strides = array<i32>} : memref<8x32xf32, #tpu.memory_space<vmem>>, vector<8x32xf32>,
    %347 = arith.index_cast %c5_i32 : i32 to index
    %c0_241 = arith.constant 0 : index
    %c0_242 = arith.constant 0 : index
    %348 = vector.load %arg3[%347, %c0_241, %c0_242] : memref<8x8x32xf32, #tpu.memory_space<vmem>>, vector<1x8x32xf32>
    %349 = vector.shape_cast %348 : vector<1x8x32xf32> to vector<8x32xf32>
    %350 = vector.shape_cast %344 : vector<8x32xf32> to vector<1x8x32xf32>
    tpu.vector_store %arg3[%347, %c0_241, %c0_242], %350 {strides = array<i32>} : memref<8x8x32xf32, #tpu.memory_space<vmem>>, vector<1x8x32xf32>,
    %c6_i32 = arith.constant 6 : i32
    %c0_243 = arith.constant 0 : index
    %c0_244 = arith.constant 0 : index
    %351 = vector.load %arg4[%c0_243, %c0_244] : memref<8x32xf32, #tpu.memory_space<vmem>>, vector<8x32xf32>
    %c0_245 = arith.constant 0 : index
    %c0_246 = arith.constant 0 : index
    %352 = vector.load %arg5[%c0_245, %c0_246] : memref<8x32xf32, #tpu.memory_space<vmem>>, vector<8x32xf32>
    %353 = arith.truncf %351 : vector<8x32xf32> to vector<8x32xbf16>
    %c0_247 = arith.constant 0 : index
    %354 = arith.index_cast %c6_i32 : i32 to index
    %c0_248 = arith.constant 0 : index
    %c0_249 = arith.constant 0 : index
    %355 = vector.load %arg1[%c0_247, %354, %c0_248, %c0_249] : memref<4x8x8x32xf32, #tpu.memory_space<vmem>>, vector<1x1x8x32xf32>
    %356 = vector.shape_cast %355 : vector<1x1x8x32xf32> to vector<8x32xf32>
    %c0_250 = arith.constant 0 : index
    %c0_251 = arith.constant 0 : index
    %c0_252 = arith.constant 0 : index
    %357 = vector.load %arg2[%c0_250, %c0_251, %c0_252] : memref<4x32x32xbf16, #tpu.memory_space<vmem>>, vector<1x32x32xbf16>
    %358 = vector.shape_cast %357 : vector<1x32x32xbf16> to vector<32x32xbf16>
    %cst_253 = arith.constant dense<0.000000e+00> : vector<8x32xf32>
    %359 = tpu.matmul %353, %358, %cst_253 {dimension_numbers = #tpu.dot_dimension_numbers<[1], [0], [0], [1], [0, 0, 1, 1], [], []>} : vector<8x32xbf16>, vector<32x32xbf16>, vector<8x32xf32> -> vector<8x32xf32>
    %360 = arith.addf %356, %359 : vector<8x32xf32>
    %c1_254 = arith.constant 1 : index
    %361 = arith.index_cast %c6_i32 : i32 to index
    %c0_255 = arith.constant 0 : index
    %c0_256 = arith.constant 0 : index
    %362 = vector.load %arg1[%c1_254, %361, %c0_255, %c0_256] : memref<4x8x8x32xf32, #tpu.memory_space<vmem>>, vector<1x1x8x32xf32>
    %363 = vector.shape_cast %362 : vector<1x1x8x32xf32> to vector<8x32xf32>
    %c1_257 = arith.constant 1 : index
    %c0_258 = arith.constant 0 : index
    %c0_259 = arith.constant 0 : index
    %364 = vector.load %arg2[%c1_257, %c0_258, %c0_259] : memref<4x32x32xbf16, #tpu.memory_space<vmem>>, vector<1x32x32xbf16>
    %365 = vector.shape_cast %364 : vector<1x32x32xbf16> to vector<32x32xbf16>
    %cst_260 = arith.constant dense<0.000000e+00> : vector<8x32xf32>
    %366 = tpu.matmul %353, %365, %cst_260 {dimension_numbers = #tpu.dot_dimension_numbers<[1], [0], [0], [1], [0, 0, 1, 1], [], []>} : vector<8x32xbf16>, vector<32x32xbf16>, vector<8x32xf32> -> vector<8x32xf32>
    %367 = arith.addf %363, %366 : vector<8x32xf32>
    %c2_261 = arith.constant 2 : index
    %368 = arith.index_cast %c6_i32 : i32 to index
    %c0_262 = arith.constant 0 : index
    %c0_263 = arith.constant 0 : index
    %369 = vector.load %arg1[%c2_261, %368, %c0_262, %c0_263] : memref<4x8x8x32xf32, #tpu.memory_space<vmem>>, vector<1x1x8x32xf32>
    %370 = vector.shape_cast %369 : vector<1x1x8x32xf32> to vector<8x32xf32>
    %c2_264 = arith.constant 2 : index
    %c0_265 = arith.constant 0 : index
    %c0_266 = arith.constant 0 : index
    %371 = vector.load %arg2[%c2_264, %c0_265, %c0_266] : memref<4x32x32xbf16, #tpu.memory_space<vmem>>, vector<1x32x32xbf16>
    %372 = vector.shape_cast %371 : vector<1x32x32xbf16> to vector<32x32xbf16>
    %cst_267 = arith.constant dense<0.000000e+00> : vector<8x32xf32>
    %373 = tpu.matmul %353, %372, %cst_267 {dimension_numbers = #tpu.dot_dimension_numbers<[1], [0], [0], [1], [0, 0, 1, 1], [], []>} : vector<8x32xbf16>, vector<32x32xbf16>, vector<8x32xf32> -> vector<8x32xf32>
    %374 = arith.addf %370, %373 : vector<8x32xf32>
    %c3_268 = arith.constant 3 : index
    %375 = arith.index_cast %c6_i32 : i32 to index
    %c0_269 = arith.constant 0 : index
    %c0_270 = arith.constant 0 : index
    %376 = vector.load %arg1[%c3_268, %375, %c0_269, %c0_270] : memref<4x8x8x32xf32, #tpu.memory_space<vmem>>, vector<1x1x8x32xf32>
    %377 = vector.shape_cast %376 : vector<1x1x8x32xf32> to vector<8x32xf32>
    %c3_271 = arith.constant 3 : index
    %c0_272 = arith.constant 0 : index
    %c0_273 = arith.constant 0 : index
    %378 = vector.load %arg2[%c3_271, %c0_272, %c0_273] : memref<4x32x32xbf16, #tpu.memory_space<vmem>>, vector<1x32x32xbf16>
    %379 = vector.shape_cast %378 : vector<1x32x32xbf16> to vector<32x32xbf16>
    %cst_274 = arith.constant dense<0.000000e+00> : vector<8x32xf32>
    %380 = tpu.matmul %353, %379, %cst_274 {dimension_numbers = #tpu.dot_dimension_numbers<[1], [0], [0], [1], [0, 0, 1, 1], [], []>} : vector<8x32xbf16>, vector<32x32xbf16>, vector<8x32xf32> -> vector<8x32xf32>
    %381 = arith.addf %377, %380 : vector<8x32xf32>
    %382 = arith.negf %360 : vector<8x32xf32>
    %383 = math.exp %382 : vector<8x32xf32>
    %cst_275 = arith.constant 1.000000e+00 : f32
    %384 = vector.broadcast %cst_275 : f32 to vector<8x32xf32>
    %385 = arith.addf %384, %383 : vector<8x32xf32>
    %386 = arith.divf %384, %385 : vector<8x32xf32>
    %387 = arith.negf %367 : vector<8x32xf32>
    %388 = math.exp %387 : vector<8x32xf32>
    %cst_276 = arith.constant 1.000000e+00 : f32
    %389 = vector.broadcast %cst_276 : f32 to vector<8x32xf32>
    %390 = arith.addf %389, %388 : vector<8x32xf32>
    %391 = arith.divf %389, %390 : vector<8x32xf32>
    %392 = math.tanh %374 : vector<8x32xf32>
    %393 = arith.negf %381 : vector<8x32xf32>
    %394 = math.exp %393 : vector<8x32xf32>
    %cst_277 = arith.constant 1.000000e+00 : f32
    %395 = vector.broadcast %cst_277 : f32 to vector<8x32xf32>
    %396 = arith.addf %395, %394 : vector<8x32xf32>
    %397 = arith.divf %395, %396 : vector<8x32xf32>
    %398 = arith.mulf %391, %352 : vector<8x32xf32>
    %399 = arith.mulf %386, %392 : vector<8x32xf32>
    %400 = arith.addf %398, %399 : vector<8x32xf32>
    %401 = math.tanh %400 : vector<8x32xf32>
    %402 = arith.mulf %397, %401 : vector<8x32xf32>
    %c0_278 = arith.constant 0 : index
    %c0_279 = arith.constant 0 : index
    %403 = vector.load %arg5[%c0_278, %c0_279] : memref<8x32xf32, #tpu.memory_space<vmem>>, vector<8x32xf32>
    tpu.vector_store %arg5[%c0_278, %c0_279], %400 {strides = array<i32>} : memref<8x32xf32, #tpu.memory_space<vmem>>, vector<8x32xf32>,
    %c0_280 = arith.constant 0 : index
    %c0_281 = arith.constant 0 : index
    %404 = vector.load %arg4[%c0_280, %c0_281] : memref<8x32xf32, #tpu.memory_space<vmem>>, vector<8x32xf32>
    tpu.vector_store %arg4[%c0_280, %c0_281], %402 {strides = array<i32>} : memref<8x32xf32, #tpu.memory_space<vmem>>, vector<8x32xf32>,
    %405 = arith.index_cast %c6_i32 : i32 to index
    %c0_282 = arith.constant 0 : index
    %c0_283 = arith.constant 0 : index
    %406 = vector.load %arg3[%405, %c0_282, %c0_283] : memref<8x8x32xf32, #tpu.memory_space<vmem>>, vector<1x8x32xf32>
    %407 = vector.shape_cast %406 : vector<1x8x32xf32> to vector<8x32xf32>
    %408 = vector.shape_cast %402 : vector<8x32xf32> to vector<1x8x32xf32>
    tpu.vector_store %arg3[%405, %c0_282, %c0_283], %408 {strides = array<i32>} : memref<8x8x32xf32, #tpu.memory_space<vmem>>, vector<1x8x32xf32>,
    %c7_i32 = arith.constant 7 : i32
    %c0_284 = arith.constant 0 : index
    %c0_285 = arith.constant 0 : index
    %409 = vector.load %arg4[%c0_284, %c0_285] : memref<8x32xf32, #tpu.memory_space<vmem>>, vector<8x32xf32>
    %c0_286 = arith.constant 0 : index
    %c0_287 = arith.constant 0 : index
    %410 = vector.load %arg5[%c0_286, %c0_287] : memref<8x32xf32, #tpu.memory_space<vmem>>, vector<8x32xf32>
    %411 = arith.truncf %409 : vector<8x32xf32> to vector<8x32xbf16>
    %c0_288 = arith.constant 0 : index
    %412 = arith.index_cast %c7_i32 : i32 to index
    %c0_289 = arith.constant 0 : index
    %c0_290 = arith.constant 0 : index
    %413 = vector.load %arg1[%c0_288, %412, %c0_289, %c0_290] : memref<4x8x8x32xf32, #tpu.memory_space<vmem>>, vector<1x1x8x32xf32>
    %414 = vector.shape_cast %413 : vector<1x1x8x32xf32> to vector<8x32xf32>
    %c0_291 = arith.constant 0 : index
    %c0_292 = arith.constant 0 : index
    %c0_293 = arith.constant 0 : index
    %415 = vector.load %arg2[%c0_291, %c0_292, %c0_293] : memref<4x32x32xbf16, #tpu.memory_space<vmem>>, vector<1x32x32xbf16>
    %416 = vector.shape_cast %415 : vector<1x32x32xbf16> to vector<32x32xbf16>
    %cst_294 = arith.constant dense<0.000000e+00> : vector<8x32xf32>
    %417 = tpu.matmul %411, %416, %cst_294 {dimension_numbers = #tpu.dot_dimension_numbers<[1], [0], [0], [1], [0, 0, 1, 1], [], []>} : vector<8x32xbf16>, vector<32x32xbf16>, vector<8x32xf32> -> vector<8x32xf32>
    %418 = arith.addf %414, %417 : vector<8x32xf32>
    %c1_295 = arith.constant 1 : index
    %419 = arith.index_cast %c7_i32 : i32 to index
    %c0_296 = arith.constant 0 : index
    %c0_297 = arith.constant 0 : index
    %420 = vector.load %arg1[%c1_295, %419, %c0_296, %c0_297] : memref<4x8x8x32xf32, #tpu.memory_space<vmem>>, vector<1x1x8x32xf32>
    %421 = vector.shape_cast %420 : vector<1x1x8x32xf32> to vector<8x32xf32>
    %c1_298 = arith.constant 1 : index
    %c0_299 = arith.constant 0 : index
    %c0_300 = arith.constant 0 : index
    %422 = vector.load %arg2[%c1_298, %c0_299, %c0_300] : memref<4x32x32xbf16, #tpu.memory_space<vmem>>, vector<1x32x32xbf16>
    %423 = vector.shape_cast %422 : vector<1x32x32xbf16> to vector<32x32xbf16>
    %cst_301 = arith.constant dense<0.000000e+00> : vector<8x32xf32>
    %424 = tpu.matmul %411, %423, %cst_301 {dimension_numbers = #tpu.dot_dimension_numbers<[1], [0], [0], [1], [0, 0, 1, 1], [], []>} : vector<8x32xbf16>, vector<32x32xbf16>, vector<8x32xf32> -> vector<8x32xf32>
    %425 = arith.addf %421, %424 : vector<8x32xf32>
    %c2_302 = arith.constant 2 : index
    %426 = arith.index_cast %c7_i32 : i32 to index
    %c0_303 = arith.constant 0 : index
    %c0_304 = arith.constant 0 : index
    %427 = vector.load %arg1[%c2_302, %426, %c0_303, %c0_304] : memref<4x8x8x32xf32, #tpu.memory_space<vmem>>, vector<1x1x8x32xf32>
    %428 = vector.shape_cast %427 : vector<1x1x8x32xf32> to vector<8x32xf32>
    %c2_305 = arith.constant 2 : index
    %c0_306 = arith.constant 0 : index
    %c0_307 = arith.constant 0 : index
    %429 = vector.load %arg2[%c2_305, %c0_306, %c0_307] : memref<4x32x32xbf16, #tpu.memory_space<vmem>>, vector<1x32x32xbf16>
    %430 = vector.shape_cast %429 : vector<1x32x32xbf16> to vector<32x32xbf16>
    %cst_308 = arith.constant dense<0.000000e+00> : vector<8x32xf32>
    %431 = tpu.matmul %411, %430, %cst_308 {dimension_numbers = #tpu.dot_dimension_numbers<[1], [0], [0], [1], [0, 0, 1, 1], [], []>} : vector<8x32xbf16>, vector<32x32xbf16>, vector<8x32xf32> -> vector<8x32xf32>
    %432 = arith.addf %428, %431 : vector<8x32xf32>
    %c3_309 = arith.constant 3 : index
    %433 = arith.index_cast %c7_i32 : i32 to index
    %c0_310 = arith.constant 0 : index
    %c0_311 = arith.constant 0 : index
    %434 = vector.load %arg1[%c3_309, %433, %c0_310, %c0_311] : memref<4x8x8x32xf32, #tpu.memory_space<vmem>>, vector<1x1x8x32xf32>
    %435 = vector.shape_cast %434 : vector<1x1x8x32xf32> to vector<8x32xf32>
    %c3_312 = arith.constant 3 : index
    %c0_313 = arith.constant 0 : index
    %c0_314 = arith.constant 0 : index
    %436 = vector.load %arg2[%c3_312, %c0_313, %c0_314] : memref<4x32x32xbf16, #tpu.memory_space<vmem>>, vector<1x32x32xbf16>
    %437 = vector.shape_cast %436 : vector<1x32x32xbf16> to vector<32x32xbf16>
    %cst_315 = arith.constant dense<0.000000e+00> : vector<8x32xf32>
    %438 = tpu.matmul %411, %437, %cst_315 {dimension_numbers = #tpu.dot_dimension_numbers<[1], [0], [0], [1], [0, 0, 1, 1], [], []>} : vector<8x32xbf16>, vector<32x32xbf16>, vector<8x32xf32> -> vector<8x32xf32>
    %439 = arith.addf %435, %438 : vector<8x32xf32>
    %440 = arith.negf %418 : vector<8x32xf32>
    %441 = math.exp %440 : vector<8x32xf32>
    %cst_316 = arith.constant 1.000000e+00 : f32
    %442 = vector.broadcast %cst_316 : f32 to vector<8x32xf32>
    %443 = arith.addf %442, %441 : vector<8x32xf32>
    %444 = arith.divf %442, %443 : vector<8x32xf32>
    %445 = arith.negf %425 : vector<8x32xf32>
    %446 = math.exp %445 : vector<8x32xf32>
    %cst_317 = arith.constant 1.000000e+00 : f32
    %447 = vector.broadcast %cst_317 : f32 to vector<8x32xf32>
    %448 = arith.addf %447, %446 : vector<8x32xf32>
    %449 = arith.divf %447, %448 : vector<8x32xf32>
    %450 = math.tanh %432 : vector<8x32xf32>
    %451 = arith.negf %439 : vector<8x32xf32>
    %452 = math.exp %451 : vector<8x32xf32>
    %cst_318 = arith.constant 1.000000e+00 : f32
    %453 = vector.broadcast %cst_318 : f32 to vector<8x32xf32>
    %454 = arith.addf %453, %452 : vector<8x32xf32>
    %455 = arith.divf %453, %454 : vector<8x32xf32>
    %456 = arith.mulf %449, %410 : vector<8x32xf32>
    %457 = arith.mulf %444, %450 : vector<8x32xf32>
    %458 = arith.addf %456, %457 : vector<8x32xf32>
    %459 = math.tanh %458 : vector<8x32xf32>
    %460 = arith.mulf %455, %459 : vector<8x32xf32>
    %c0_319 = arith.constant 0 : index
    %c0_320 = arith.constant 0 : index
    %461 = vector.load %arg5[%c0_319, %c0_320] : memref<8x32xf32, #tpu.memory_space<vmem>>, vector<8x32xf32>
    tpu.vector_store %arg5[%c0_319, %c0_320], %458 {strides = array<i32>} : memref<8x32xf32, #tpu.memory_space<vmem>>, vector<8x32xf32>,
    %c0_321 = arith.constant 0 : index
    %c0_322 = arith.constant 0 : index
    %462 = vector.load %arg4[%c0_321, %c0_322] : memref<8x32xf32, #tpu.memory_space<vmem>>, vector<8x32xf32>
    tpu.vector_store %arg4[%c0_321, %c0_322], %460 {strides = array<i32>} : memref<8x32xf32, #tpu.memory_space<vmem>>, vector<8x32xf32>,
    %463 = arith.index_cast %c7_i32 : i32 to index
    %c0_323 = arith.constant 0 : index
    %c0_324 = arith.constant 0 : index
    %464 = vector.load %arg3[%463, %c0_323, %c0_324] : memref<8x8x32xf32, #tpu.memory_space<vmem>>, vector<1x8x32xf32>
    %465 = vector.shape_cast %464 : vector<1x8x32xf32> to vector<8x32xf32>
    %466 = vector.shape_cast %460 : vector<8x32xf32> to vector<1x8x32xf32>
    tpu.vector_store %arg3[%463, %c0_323, %c0_324], %466 {strides = array<i32>} : memref<8x8x32xf32, #tpu.memory_space<vmem>>, vector<1x8x32xf32>,
    %c8_i32 = arith.constant 8 : i32
    return
  }
  func.func @transform_0(%arg0: i32) -> (i32, i32, i32, i32) {
    %c0_i32 = arith.constant 0 : i32
    %c0_i32_0 = arith.constant 0 : i32
    %c0_i32_1 = arith.constant 0 : i32
    %c0_i32_2 = arith.constant 0 : i32
    return %c0_i32, %arg0, %c0_i32_0, %c0_i32_1 : i32, i32, i32, i32
  }
  func.func @transform_1(%arg0: i32) -> (i32, i32, i32) {
    %c0_i32 = arith.constant 0 : i32
    %c0_i32_0 = arith.constant 0 : i32
    %c0_i32_1 = arith.constant 0 : i32
    %c0_i32_2 = arith.constant 0 : i32
    return %c0_i32, %c0_i32_0, %c0_i32_1 : i32, i32, i32
  }
  func.func @transform_2(%arg0: i32) -> (i32, i32, i32) {
    %c0_i32 = arith.constant 0 : i32
    %c0_i32_0 = arith.constant 0 : i32
    %c0_i32_1 = arith.constant 0 : i32
    return %arg0, %c0_i32, %c0_i32_0 : i32, i32, i32
  }
}

</mosaic_0001>

<llo_original>
// kernel: decoder_rnn_forward.3
$region0: #{decoder_rnn_forward.3}
  #allocation0 [shape = 'u32[]', space=smem, size = 0x4, offset = 0x4, fixed_abs, tag = 'smem constant byte address 0x4 - core index']
  #allocation1 [shape = 'u32[144,128]{1,0:T(1,128)}', space=vmem, size = 0x12000, scoped, tag = 'internal scratch']
  %s0 = inlined_call_operand.vmem [shape: bf16[64,32], index: 0, kind: input, shape index: {}]
  %s1 = inlined_call_operand.vmem [shape: bf16[32,128], index: 1, kind: input, shape index: {}]
  %s2 = inlined_call_operand.vmem [shape: f32[1,128], index: 2, kind: input, shape index: {}]
  %s3 = inlined_call_operand.vmem [shape: f32[64,128], index: 3, kind: output, shape index: {}]
  %s4 = sld [smem:[#allocation0]]
  $region22: #{decoder_rnn_forward.3} parent=0
    _
  %s6 = ssub.s32 1, %s4
  %s7 = scalar_select 0, %s6, %s4
  // Predicated region
  $region2: #{decoder_rnn_forward.3} parent=0 // pred_check
    _
  $region3: #{decoder_rnn_forward.3} parent=0 // pred_check_branch
    %9 = sbr.rel (0) target = $region5
  $region4: #{decoder_rnn_forward.3} parent=0 // pred_region
    _
  $region5: #{decoder_rnn_forward.3} parent=0 // pred_fallthru
    _
  // Predicated region
  $region6: #{decoder_rnn_forward.3} parent=0 // pred_check
    _
  $region7: #{decoder_rnn_forward.3} parent=0 // pred_check_branch
    %11 = sbr.rel (0) target = $region9
  $region8: #{decoder_rnn_forward.3} parent=0 // pred_region
    _
  $region9: #{decoder_rnn_forward.3} parent=0 // pred_fallthru
    _
  // Predicated region
  $region10: #{decoder_rnn_forward.3} parent=0 // pred_check
    _
  $region11: #{decoder_rnn_forward.3} parent=0 // pred_check_branch
    %13 = sbr.rel (0) target = $region13
  $region12: #{decoder_rnn_forward.3} parent=0 // pred_region
    _
  $region13: #{decoder_rnn_forward.3} parent=0 // pred_fallthru
    _
  %v15 = vld [vmem:[%s0] sm:$0xf]
  %v16 = vld [vmem:[%s0 + $0x4] sm:$0xf]
  %v17 = vld [vmem:[%s0 + $0x8] sm:$0xf]
  %v18 = vld [vmem:[%s0 + $0xc] sm:$0xf]
  %v19 = vld [vmem:[%s0 + $0x10] sm:$0xf]
  %v20 = vld [vmem:[%s0 + $0x14] sm:$0xf]
  %v21 = vld [vmem:[%s0 + $0x18] sm:$0xf]
  %v22 = vld [vmem:[%s0 + $0x1c] sm:$0xf]
  %v23 = vld [vmem:[%s1] sm:$0xf]
  %v24 = vld [vmem:[%s1 + $0x4] sm:$0xf]
  %v25 = vld [vmem:[%s1 + $0x8] sm:$0xf]
  %v26 = vld [vmem:[%s1 + $0xc] sm:$0xf]
  %v27 = vld [vmem:[%s2] sm:$0x1]
  %v29 = vlaneseq
  %v30 = vshrl.u32 %v29, 7
  %v31 = vsub.s32 0, %v30
  %v32 = vrot.slane %v27, %v31
  %v42 = vunpack.c.l.b16 %v15
  %v43 = vunpack.c.l.b16 %v16
  %v44 = vunpack.c.l.b16 %v17
  %v45 = vunpack.c.l.b16 %v18
  %v46 = vunpack.c.l.b16 %v19
  %v47 = vunpack.c.l.b16 %v20
  %v48 = vunpack.c.l.b16 %v21
  %v49 = vunpack.c.l.b16 %v22
  %v50 = vpack.c.b16 %v43, %v42
  %v51 = vpack.c.b16 %v45, %v44
  %v52 = vpack.c.b16 %v47, %v46
  %v53 = vpack.c.b16 %v49, %v48
  %v58 = vunpack.c.l.b16 %v23
  %v59 = vunpack.c.l.b16 %v24
  %v60 = vunpack.c.l.b16 %v25
  %v61 = vunpack.c.l.b16 %v26
  %v62 = vpack.c.b16 %v59, %v58
  %v63 = vpack.c.b16 %v61, %v60
  %vm66 = vcmask 261120
  %v68 = vsel %vm66, %v50, 0
  %v71 = vsel %vm66, %v51, 0
  %v74 = vsel %vm66, %v52, 0
  %v77 = vsel %vm66, %v53, 0
  %79 = vmatprep.subr.bf16.mxu0 0
  %80 = vmatpush1.bf16.msra.mxu0 %v62
  %81 = vmatprep.subr.bf16.mxu0 0
  %82 = vmatpush1.bf16.msra.mxu0 %v63
  %83 = vmatprep.subr.bf16.mxu0 0
  %84 = vmatpush1.bf16.msra.mxu0 0
  %85 = vmatprep.subr.bf16.mxu0 0
  %86 = vmatpush1.bf16.msra.mxu0 0
  %87 = vmatprep.subr.bf16.mxu0 0
  %88 = vmatpush1.bf16.msra.mxu0 0
  %89 = vmatprep.subr.bf16.mxu0 0
  %90 = vmatpush1.bf16.msra.mxu0 0
  %91 = vmatprep.subr.bf16.mxu0 0
  %92 = vmatpush1.bf16.msra.mxu0 0
  %93 = vmatprep.subr.bf16.mxu0 0
  %94 = vmatpush1.bf16.msra.mxu0 0
  %95 = vmatprep.subr.bf16.mxu0 0
  %96 = vmatpush1.bf16.msra.mxu0 0
  %97 = vmatprep.subr.bf16.mxu0 0
  %98 = vmatpush1.bf16.msra.mxu0 0
  %99 = vmatprep.subr.bf16.mxu0 0
  %100 = vmatpush1.bf16.msra.mxu0 0
  %101 = vmatprep.subr.bf16.mxu0 0
  %102 = vmatpush1.bf16.msra.mxu0 0
  %103 = vmatprep.subr.bf16.mxu0 0
  %104 = vmatpush1.bf16.msra.mxu0 0
  %105 = vmatprep.subr.bf16.mxu0 0
  %106 = vmatpush1.bf16.msra.mxu0 0
  %107 = vmatprep.subr.bf16.mxu0 0
  %108 = vmatpush1.bf16.msra.mxu0 0
  %109 = vmatprep.subr.bf16.mxu0 0
  %110 = vmatpush1.bf16.msra.mxu0 0
  %111 = vmatprep.mubr.bf16.mxu0 0
  %112 = vmatmul.mubr.bf16.gmra.mrb[0].mxu0 %v68
  %v113 = vpop.f32.mrb[0].mxu0
  %v114 = vadd.f32 %v32, %v113
  %v115 = vpop.f32.mrb[0].mxu0
  %v116 = vpop.f32.mrb[0].mxu0
  %v117 = vadd.f32 %v32, %v116
  %v118 = vpop.f32.mrb[0].mxu0
  %119 = vmatprep.mubr.bf16.mxu0 0
  %120 = vmatmul.mubr.bf16.gmra.mrb[0].mxu0 %v71
  %v121 = vpop.f32.mrb[0].mxu0
  %v122 = vadd.f32 %v32, %v121
  %v123 = vpop.f32.mrb[0].mxu0
  %v124 = vpop.f32.mrb[0].mxu0
  %v125 = vadd.f32 %v32, %v124
  %v126 = vpop.f32.mrb[0].mxu0
  %127 = vmatprep.mubr.bf16.mxu0 0
  %128 = vmatmul.mubr.bf16.gmra.mrb[0].mxu0 %v74
  %v129 = vpop.f32.mrb[0].mxu0
  %v130 = vadd.f32 %v32, %v129
  %v131 = vpop.f32.mrb[0].mxu0
  %v132 = vpop.f32.mrb[0].mxu0
  %v133 = vadd.f32 %v32, %v132
  %v134 = vpop.f32.mrb[0].mxu0
  %135 = vmatprep.mubr.bf16.mxu0 0
  %136 = vmatmul.mubr.bf16.gmra.mrb[0].mxu0 %v77
  %v137 = vpop.f32.mrb[0].mxu0
  %v138 = vadd.f32 %v32, %v137
  %v139 = vpop.f32.mrb[0].mxu0
  %v140 = vpop.f32.mrb[0].mxu0
  %v141 = vadd.f32 %v32, %v140
  %v142 = vpop.f32.mrb[0].mxu0
  %143 = vdwg.mxu0
  %144 = vst [vmem:[%s3] sm:$0xff] %v114
  %145 = vst [vmem:[%s3 + $0x8] sm:$0xff] %v117
  %146 = vst [vmem:[%s3 + $0x10] sm:$0xff] %v122
  %147 = vst [vmem:[%s3 + $0x18] sm:$0xff] %v125
  %148 = vst [vmem:[%s3 + $0x20] sm:$0xff] %v130
  %149 = vst [vmem:[%s3 + $0x28] sm:$0xff] %v133
  %150 = vst [vmem:[%s3 + $0x30] sm:$0xff] %v138
  %151 = vst [vmem:[%s3 + $0x38] sm:$0xff] %v141
  // Predicated region
  $region14: #{decoder_rnn_forward.3} parent=0 // pred_check
    _
  $region15: #{decoder_rnn_forward.3} parent=0 // pred_check_branch
    %153 = sbr.rel (0) target = $region17
  $region16: #{decoder_rnn_forward.3} parent=0 // pred_region
    _
  $region17: #{decoder_rnn_forward.3} parent=0 // pred_fallthru
    _
  // Predicated region
  $region18: #{decoder_rnn_forward.3} parent=0 // pred_check
    _
  $region19: #{decoder_rnn_forward.3} parent=0 // pred_check_branch
    %155 = sbr.rel (0) target = $region21
  $region20: #{decoder_rnn_forward.3} parent=0 // pred_region
    _
  $region21: #{decoder_rnn_forward.3} parent=0 // pred_fallthru
    _

// kernel: decoder_rnn_forward.4
$region0: #{decoder_rnn_forward.4}
  #allocation0 [shape = 'u32[]', space=smem, size = 0x4, offset = 0x4, fixed_abs, tag = 'smem constant byte address 0x4 - core index']
  #allocation1 [shape = 'u32[144,128]{1,0:T(1,128)}', space=vmem, size = 0x12000, scoped, tag = 'internal scratch']
  #allocation2 [shape = 'f32[8,32]{1,0:T(8,128)}', space=vmem, size = 0x1000, scoped, tag = 'scratch operand']
  #allocation3 [shape = 'f32[8,32]{1,0:T(8,128)}', space=vmem, size = 0x1000, scoped, tag = 'scratch operand']
  %s0 = inlined_call_operand.vmem [shape: f32[4,8,8,32], index: 0, kind: input, shape index: {}]
  %s1 = inlined_call_operand.vmem [shape: bf16[4,32,32], index: 1, kind: input, shape index: {}]
  %s2 = inlined_call_operand.vmem [shape: f32[8,8,32], index: 2, kind: output, shape index: {}]
  %s3 = sld [smem:[#allocation0]]
  $region22: #{decoder_rnn_forward.4} parent=0
    _
  %s5 = ssub.s32 1, %s3
  %s6 = scalar_select 0, %s5, %s3
  // Predicated region
  $region2: #{decoder_rnn_forward.4} parent=0 // pred_check
    _
  $region3: #{decoder_rnn_forward.4} parent=0 // pred_check_branch
    %8 = sbr.rel (0) target = $region5
  $region4: #{decoder_rnn_forward.4} parent=0 // pred_region
    _
  $region5: #{decoder_rnn_forward.4} parent=0 // pred_fallthru
    _
  // Predicated region
  $region6: #{decoder_rnn_forward.4} parent=0 // pred_check
    _
  $region7: #{decoder_rnn_forward.4} parent=0 // pred_check_branch
    %10 = sbr.rel (0) target = $region9
  $region8: #{decoder_rnn_forward.4} parent=0 // pred_region
    _
  $region9: #{decoder_rnn_forward.4} parent=0 // pred_fallthru
    _
  %p12 = scmp.eq.s32.totalorder 0, 0
  // Predicated region
  $region10: #{decoder_rnn_forward.4} parent=0 // pred_check
    %p13 = pneg %p12
  $region11: #{decoder_rnn_forward.4} parent=0 // pred_check_branch
    %15 = sbr.rel (%p13) target = $region13
  $region12: #{decoder_rnn_forward.4} parent=0 // pred_region
    %vm16 = vcmask 261120
    %17 = vst.msk [vmem:[#allocation2] sm:$0xff] %vm16, 0.0
    %18 = vst.msk [vmem:[#allocation3] sm:$0xff] %vm16, 0.0
  $region13: #{decoder_rnn_forward.4} parent=0 // pred_fallthru
    _
  %v19 = vld [vmem:[#allocation2] sm:$0xff]
  %v20 = vld [vmem:[#allocation3] sm:$0xff]
  %v21 = vpack.c.bf16 %v19, %v19
  %v22 = vld [vmem:[%s0] sm:$0xff]
  %v23 = vld [vmem:[%s1] sm:$0xf]
  %v24 = vld [vmem:[%s1 + $0x4] sm:$0xf]
  %v25 = vld [vmem:[%s1 + $0x8] sm:$0xf]
  %v26 = vld [vmem:[%s1 + $0xc] sm:$0xf]
  %v31 = vunpack.c.l.b16 %v23
  %v32 = vunpack.c.l.b16 %v24
  %v33 = vunpack.c.l.b16 %v25
  %v34 = vunpack.c.l.b16 %v26
  %v35 = vpack.c.b16 %v32, %v31
  %v36 = vpack.c.b16 %v34, %v33
  %vm39 = vcmask 261120
  %v41 = vsel %vm39, %v21, 0
  %43 = vmatprep.subr.bf16.mxu0 0
  %44 = vmatpush1.bf16.msra.mxu0 %v35
  %45 = vmatprep.subr.bf16.mxu0 0
  %46 = vmatpush1.bf16.msra.mxu0 %v36
  %47 = vmatprep.subr.bf16.mxu0 0
  %48 = vmatpush1.bf16.msra.mxu0 0
  %49 = vmatprep.subr.bf16.mxu0 0
  %50 = vmatpush1.bf16.msra.mxu0 0
  %51 = vmatprep.subr.bf16.mxu0 0
  %52 = vmatpush1.bf16.msra.mxu0 0
  %53 = vmatprep.subr.bf16.mxu0 0
  %54 = vmatpush1.bf16.msra.mxu0 0
  %55 = vmatprep.subr.bf16.mxu0 0
  %56 = vmatpush1.bf16.msra.mxu0 0
  %57 = vmatprep.subr.bf16.mxu0 0
  %58 = vmatpush1.bf16.msra.mxu0 0
  %59 = vmatprep.subr.bf16.mxu0 0
  %60 = vmatpush1.bf16.msra.mxu0 0
  %61 = vmatprep.subr.bf16.mxu0 0
  %62 = vmatpush1.bf16.msra.mxu0 0
  %63 = vmatprep.subr.bf16.mxu0 0
  %64 = vmatpush1.bf16.msra.mxu0 0
  %65 = vmatprep.subr.bf16.mxu0 0
  %66 = vmatpush1.bf16.msra.mxu0 0
  %67 = vmatprep.subr.bf16.mxu0 0
  %68 = vmatpush1.bf16.msra.mxu0 0
  %69 = vmatprep.subr.bf16.mxu0 0
  %70 = vmatpush1.bf16.msra.mxu0 0
  %71 = vmatprep.subr.bf16.mxu0 0
  %72 = vmatpush1.bf16.msra.mxu0 0
  %73 = vmatprep.subr.bf16.mxu0 0
  %74 = vmatpush1.bf16.msra.mxu0 0
  %75 = vmatprep.mubr.bf16.mxu0 0
  %76 = vmatmul.mubr.bf16.gmra.mrb[0].mxu0 %v41
  %v77 = vpop.f32.mrb[0].mxu0
  %v78 = vadd.f32 0.0, %v77
  %v79 = vpop.f32.mrb[0].mxu0
  %v80 = vpop.f32.mrb[0].mxu0
  %v81 = vpop.f32.mrb[0].mxu0
  %82 = vdwg.mxu0
  %v83 = vadd.f32 %v22, %v78
  %s84 = scalar_lea.vmem %s0, 64
  %v85 = vld [vmem:[%s84] sm:$0xff]
  %s86 = scalar_lea.vmem %s1, 16
  %v87 = vld [vmem:[%s86] sm:$0xf]
  %v88 = vld [vmem:[%s86 + $0x4] sm:$0xf]
  %v89 = vld [vmem:[%s86 + $0x8] sm:$0xf]
  %v90 = vld [vmem:[%s86 + $0xc] sm:$0xf]
  %v95 = vunpack.c.l.b16 %v87
  %v96 = vunpack.c.l.b16 %v88
  %v97 = vunpack.c.l.b16 %v89
  %v98 = vunpack.c.l.b16 %v90
  %v99 = vpack.c.b16 %v96, %v95
  %v100 = vpack.c.b16 %v98, %v97
  %103 = vmatprep.subr.bf16.mxu0 0
  %104 = vmatpush1.bf16.msra.mxu0 %v99
  %105 = vmatprep.subr.bf16.mxu0 0
  %106 = vmatpush1.bf16.msra.mxu0 %v100
  %107 = vmatprep.subr.bf16.mxu0 0
  %108 = vmatpush1.bf16.msra.mxu0 0
  %109 = vmatprep.subr.bf16.mxu0 0
  %110 = vmatpush1.bf16.msra.mxu0 0
  %111 = vmatprep.subr.bf16.mxu0 0
  %112 = vmatpush1.bf16.msra.mxu0 0
  %113 = vmatprep.subr.bf16.mxu0 0
  %114 = vmatpush1.bf16.msra.mxu0 0
  %115 = vmatprep.subr.bf16.mxu0 0
  %116 = vmatpush1.bf16.msra.mxu0 0
  %117 = vmatprep.subr.bf16.mxu0 0
  %118 = vmatpush1.bf16.msra.mxu0 0
  %119 = vmatprep.subr.bf16.mxu0 0
  %120 = vmatpush1.bf16.msra.mxu0 0
  %121 = vmatprep.subr.bf16.mxu0 0
  %122 = vmatpush1.bf16.msra.mxu0 0
  %123 = vmatprep.subr.bf16.mxu0 0
  %124 = vmatpush1.bf16.msra.mxu0 0
  %125 = vmatprep.subr.bf16.mxu0 0
  %126 = vmatpush1.bf16.msra.mxu0 0
  %127 = vmatprep.subr.bf16.mxu0 0
  %128 = vmatpush1.bf16.msra.mxu0 0
  %129 = vmatprep.subr.bf16.mxu0 0
  %130 = vmatpush1.bf16.msra.mxu0 0
  %131 = vmatprep.subr.bf16.mxu0 0
  %132 = vmatpush1.bf16.msra.mxu0 0
  %133 = vmatprep.subr.bf16.mxu0 0
  %134 = vmatpush1.bf16.msra.mxu0 0
  %135 = vmatprep.mubr.bf16.mxu0 0
  %136 = vmatmul.mubr.bf16.gmra.mrb[0].mxu0 %v41
  %v137 = vpop.f32.mrb[0].mxu0
  %v138 = vadd.f32 0.0, %v137
  %v139 = vpop.f32.mrb[0].mxu0
  %v140 = vpop.f32.mrb[0].mxu0
  %v141 = vpop.f32.mrb[0].mxu0
  %142 = vdwg.mxu0
  %v143 = vadd.f32 %v85, %v138
  %s144 = scalar_lea.vmem %s0, 128
  %v145 = vld [vmem:[%s144] sm:$0xff]
  %s146 = scalar_lea.vmem %s1, 32
  %v147 = vld [vmem:[%s146] sm:$0xf]
  %v148 = vld [vmem:[%s146 + $0x4] sm:$0xf]
  %v149 = vld [vmem:[%s146 + $0x8] sm:$0xf]
  %v150 = vld [vmem:[%s146 + $0xc] sm:$0xf]
  %v155 = vunpack.c.l.b16 %v147
  %v156 = vunpack.c.l.b16 %v148
  %v157 = vunpack.c.l.b16 %v149
  %v158 = vunpack.c.l.b16 %v150
  %v159 = vpack.c.b16 %v156, %v155
  %v160 = vpack.c.b16 %v158, %v157
  %163 = vmatprep.subr.bf16.mxu0 0
  %164 = vmatpush1.bf16.msra.mxu0 %v159
  %165 = vmatprep.subr.bf16.mxu0 0
  %166 = vmatpush1.bf16.msra.mxu0 %v160
  %167 = vmatprep.subr.bf16.mxu0 0
  %168 = vmatpush1.bf16.msra.mxu0 0
  %169 = vmatprep.subr.bf16.mxu0 0
  %170 = vmatpush1.bf16.msra.mxu0 0
  %171 = vmatprep.subr.bf16.mxu0 0
  %172 = vmatpush1.bf16.msra.mxu0 0
  %173 = vmatprep.subr.bf16.mxu0 0
  %174 = vmatpush1.bf16.msra.mxu0 0
  %175 = vmatprep.subr.bf16.mxu0 0
  %176 = vmatpush1.bf16.msra.mxu0 0
  %177 = vmatprep.subr.bf16.mxu0 0
  %178 = vmatpush1.bf16.msra.mxu0 0
  %179 = vmatprep.subr.bf16.mxu0 0
  %180 = vmatpush1.bf16.msra.mxu0 0
  %181 = vmatprep.subr.bf16.mxu0 0
  %182 = vmatpush1.bf16.msra.mxu0 0
  %183 = vmatprep.subr.bf16.mxu0 0
  %184 = vmatpush1.bf16.msra.mxu0 0
  %185 = vmatprep.subr.bf16.mxu0 0
  %186 = vmatpush1.bf16.msra.mxu0 0
  %187 = vmatprep.subr.bf16.mxu0 0
  %188 = vmatpush1.bf16.msra.mxu0 0
  %189 = vmatprep.subr.bf16.mxu0 0
  %190 = vmatpush1.bf16.msra.mxu0 0
  %191 = vmatprep.subr.bf16.mxu0 0
  %192 = vmatpush1.bf16.msra.mxu0 0
  %193 = vmatprep.subr.bf16.mxu0 0
  %194 = vmatpush1.bf16.msra.mxu0 0
  %195 = vmatprep.mubr.bf16.mxu0 0
  %196 = vmatmul.mubr.bf16.gmra.mrb[0].mxu0 %v41
  %v197 = vpop.f32.mrb[0].mxu0
  %v198 = vadd.f32 0.0, %v197
  %v199 = vpop.f32.mrb[0].mxu0
  %v200 = vpop.f32.mrb[0].mxu0
  %v201 = vpop.f32.mrb[0].mxu0
  %202 = vdwg.mxu0
  %v203 = vadd.f32 %v145, %v198
  %s204 = scalar_lea.vmem %s0, 192
  %v205 = vld [vmem:[%s204] sm:$0xff]
  %s206 = scalar_lea.vmem %s1, 48
  %v207 = vld [vmem:[%s206] sm:$0xf]
  %v208 = vld [vmem:[%s206 + $0x4] sm:$0xf]
  %v209 = vld [vmem:[%s206 + $0x8] sm:$0xf]
  %v210 = vld [vmem:[%s206 + $0xc] sm:$0xf]
  %v215 = vunpack.c.l.b16 %v207
  %v216 = vunpack.c.l.b16 %v208
  %v217 = vunpack.c.l.b16 %v209
  %v218 = vunpack.c.l.b16 %v210
  %v219 = vpack.c.b16 %v216, %v215
  %v220 = vpack.c.b16 %v218, %v217
  %223 = vmatprep.subr.bf16.mxu0 0
  %224 = vmatpush1.bf16.msra.mxu0 %v219
  %225 = vmatprep.subr.bf16.mxu0 0
  %226 = vmatpush1.bf16.msra.mxu0 %v220
  %227 = vmatprep.subr.bf16.mxu0 0
  %228 = vmatpush1.bf16.msra.mxu0 0
  %229 = vmatprep.subr.bf16.mxu0 0
  %230 = vmatpush1.bf16.msra.mxu0 0
  %231 = vmatprep.subr.bf16.mxu0 0
  %232 = vmatpush1.bf16.msra.mxu0 0
  %233 = vmatprep.subr.bf16.mxu0 0
  %234 = vmatpush1.bf16.msra.mxu0 0
  %235 = vmatprep.subr.bf16.mxu0 0
  %236 = vmatpush1.bf16.msra.mxu0 0
  %237 = vmatprep.subr.bf16.mxu0 0
  %238 = vmatpush1.bf16.msra.mxu0 0
  %239 = vmatprep.subr.bf16.mxu0 0
  %240 = vmatpush1.bf16.msra.mxu0 0
  %241 = vmatprep.subr.bf16.mxu0 0
  %242 = vmatpush1.bf16.msra.mxu0 0
  %243 = vmatprep.subr.bf16.mxu0 0
  %244 = vmatpush1.bf16.msra.mxu0 0
  %245 = vmatprep.subr.bf16.mxu0 0
  %246 = vmatpush1.bf16.msra.mxu0 0
  %247 = vmatprep.subr.bf16.mxu0 0
  %248 = vmatpush1.bf16.msra.mxu0 0
  %249 = vmatprep.subr.bf16.mxu0 0
  %250 = vmatpush1.bf16.msra.mxu0 0
  %251 = vmatprep.subr.bf16.mxu0 0
  %252 = vmatpush1.bf16.msra.mxu0 0
  %253 = vmatprep.subr.bf16.mxu0 0
  %254 = vmatpush1.bf16.msra.mxu0 0
  %255 = vmatprep.mubr.bf16.mxu0 0
  %256 = vmatmul.mubr.bf16.gmra.mrb[0].mxu0 %v41
  %v257 = vpop.f32.mrb[0].mxu0
  %v258 = vadd.f32 0.0, %v257
  %v259 = vpop.f32.mrb[0].mxu0
  %v260 = vpop.f32.mrb[0].mxu0
  %v261 = vpop.f32.mrb[0].mxu0
  %262 = vdwg.mxu0
  %v263 = vadd.f32 %v205, %v258
  %v264 = vxor.u32 %v83, 2147483648
  %v265 = vmul.f32 %v264, 1.442695
  %v266 = vpow.pop %v265
  %v267 = vadd.f32 %v266, 1.0
  %v268 = vrcp.pop %v267
  %v269 = vmul.f32 1.0, %v268
  %v270 = vxor.u32 %v143, 2147483648
  %v271 = vmul.f32 %v270, 1.442695
  %v272 = vpow.pop %v271
  %v273 = vadd.f32 %v272, 1.0
  %v274 = vrcp.pop %v273
  %v275 = vmul.f32 1.0, %v274
  %v276 = vtanh.pop %v203
  %v277 = vxor.u32 %v263, 2147483648
  %v278 = vmul.f32 %v277, 1.442695
  %v279 = vpow.pop %v278
  %v280 = vadd.f32 %v279, 1.0
  %v281 = vrcp.pop %v280
  %v282 = vmul.f32 1.0, %v281
  %v283 = vmul.f32 %v275, %v20
  %v284 = vmul.f32 %v269, %v276
  %v285 = vadd.f32 %v283, %v284
  %v286 = vtanh.pop %v285
  %v287 = vmul.f32 %v282, %v286
  %288 = vst.msk [vmem:[#allocation3] sm:$0xff] %vm39, %v285
  %289 = vst.msk [vmem:[#allocation2] sm:$0xff] %vm39, %v287
  %290 = vst.msk [vmem:[%s2] sm:$0xff] %vm39, %v287
  %v291 = vld [vmem:[#allocation2] sm:$0xff]
  %v292 = vld [vmem:[#allocation3] sm:$0xff]
  %v293 = vpack.c.bf16 %v291, %v291
  %s294 = scalar_lea.vmem %s0, 8
  %v295 = vld [vmem:[%s294] sm:$0xff]
  %v296 = vld [vmem:[%s1] sm:$0xf]
  %v297 = vld [vmem:[%s1 + $0x4] sm:$0xf]
  %v298 = vld [vmem:[%s1 + $0x8] sm:$0xf]
  %v299 = vld [vmem:[%s1 + $0xc] sm:$0xf]
  %v304 = vunpack.c.l.b16 %v296
  %v305 = vunpack.c.l.b16 %v297
  %v306 = vunpack.c.l.b16 %v298
  %v307 = vunpack.c.l.b16 %v299
  %v308 = vpack.c.b16 %v305, %v304
  %v309 = vpack.c.b16 %v307, %v306
  %v313 = vsel %vm39, %v293, 0
  %315 = vmatprep.subr.bf16.mxu0 0
  %316 = vmatpush1.bf16.msra.mxu0 %v308
  %317 = vmatprep.subr.bf16.mxu0 0
  %318 = vmatpush1.bf16.msra.mxu0 %v309
  %319 = vmatprep.subr.bf16.mxu0 0
  %320 = vmatpush1.bf16.msra.mxu0 0
  %321 = vmatprep.subr.bf16.mxu0 0
  %322 = vmatpush1.bf16.msra.mxu0 0
  %323 = vmatprep.subr.bf16.mxu0 0
  %324 = vmatpush1.bf16.msra.mxu0 0
  %325 = vmatprep.subr.bf16.mxu0 0
  %326 = vmatpush1.bf16.msra.mxu0 0
  %327 = vmatprep.subr.bf16.mxu0 0
  %328 = vmatpush1.bf16.msra.mxu0 0
  %329 = vmatprep.subr.bf16.mxu0 0
  %330 = vmatpush1.bf16.msra.mxu0 0
  %331 = vmatprep.subr.bf16.mxu0 0
  %332 = vmatpush1.bf16.msra.mxu0 0
  %333 = vmatprep.subr.bf16.mxu0 0
  %334 = vmatpush1.bf16.msra.mxu0 0
  %335 = vmatprep.subr.bf16.mxu0 0
  %336 = vmatpush1.bf16.msra.mxu0 0
  %337 = vmatprep.subr.bf16.mxu0 0
  %338 = vmatpush1.bf16.msra.mxu0 0
  %339 = vmatprep.subr.bf16.mxu0 0
  %340 = vmatpush1.bf16.msra.mxu0 0
  %341 = vmatprep.subr.bf16.mxu0 0
  %342 = vmatpush1.bf16.msra.mxu0 0
  %343 = vmatprep.subr.bf16.mxu0 0
  %344 = vmatpush1.bf16.msra.mxu0 0
  %345 = vmatprep.subr.bf16.mxu0 0
  %346 = vmatpush1.bf16.msra.mxu0 0
  %347 = vmatprep.mubr.bf16.mxu0 0
  %348 = vmatmul.mubr.bf16.gmra.mrb[0].mxu0 %v313
  %v349 = vpop.f32.mrb[0].mxu0
  %v350 = vadd.f32 0.0, %v349
  %v351 = vpop.f32.mrb[0].mxu0
  %v352 = vpop.f32.mrb[0].mxu0
  %v353 = vpop.f32.mrb[0].mxu0
  %354 = vdwg.mxu0
  %v355 = vadd.f32 %v295, %v350
  %s356 = scalar_lea.vmem %s0, 72
  %v357 = vld [vmem:[%s356] sm:$0xff]
  %v358 = vld [vmem:[%s86] sm:$0xf]
  %v359 = vld [vmem:[%s86 + $0x4] sm:$0xf]
  %v360 = vld [vmem:[%s86 + $0x8] sm:$0xf]
  %v361 = vld [vmem:[%s86 + $0xc] sm:$0xf]
  %v366 = vunpack.c.l.b16 %v358
  %v367 = vunpack.c.l.b16 %v359
  %v368 = vunpack.c.l.b16 %v360
  %v369 = vunpack.c.l.b16 %v361
  %v370 = vpack.c.b16 %v367, %v366
  %v371 = vpack.c.b16 %v369, %v368
  %374 = vmatprep.subr.bf16.mxu0 0
  %375 = vmatpush1.bf16.msra.mxu0 %v370
  %376 = vmatprep.subr.bf16.mxu0 0
  %377 = vmatpush1.bf16.msra.mxu0 %v371
  %378 = vmatprep.subr.bf16.mxu0 0
  %379 = vmatpush1.bf16.msra.mxu0 0
  %380 = vmatprep.subr.bf16.mxu0 0
  %381 = vmatpush1.bf16.msra.mxu0 0
  %382 = vmatprep.subr.bf16.mxu0 0
  %383 = vmatpush1.bf16.msra.mxu0 0
  %384 = vmatprep.subr.bf16.mxu0 0
  %385 = vmatpush1.bf16.msra.mxu0 0
  %386 = vmatprep.subr.bf16.mxu0 0
  %387 = vmatpush1.bf16.msra.mxu0 0
  %388 = vmatprep.subr.bf16.mxu0 0
  %389 = vmatpush1.bf16.msra.mxu0 0
  %390 = vmatprep.subr.bf16.mxu0 0
  %391 = vmatpush1.bf16.msra.mxu0 0
  %392 = vmatprep.subr.bf16.mxu0 0
  %393 = vmatpush1.bf16.msra.mxu0 0
  %394 = vmatprep.subr.bf16.mxu0 0
  %395 = vmatpush1.bf16.msra.mxu0 0
  %396 = vmatprep.subr.bf16.mxu0 0
  %397 = vmatpush1.bf16.msra.mxu0 0
  %398 = vmatprep.subr.bf16.mxu0 0
  %399 = vmatpush1.bf16.msra.mxu0 0
  %400 = vmatprep.subr.bf16.mxu0 0
  %401 = vmatpush1.bf16.msra.mxu0 0
  %402 = vmatprep.subr.bf16.mxu0 0
  %403 = vmatpush1.bf16.msra.mxu0 0
  %404 = vmatprep.subr.bf16.mxu0 0
  %405 = vmatpush1.bf16.msra.mxu0 0
  %406 = vmatprep.mubr.bf16.mxu0 0
  %407 = vmatmul.mubr.bf16.gmra.mrb[0].mxu0 %v313
  %v408 = vpop.f32.mrb[0].mxu0
  %v409 = vadd.f32 0.0, %v408
  %v410 = vpop.f32.mrb[0].mxu0
  %v411 = vpop.f32.mrb[0].mxu0
  %v412 = vpop.f32.mrb[0].mxu0
  %413 = vdwg.mxu0
  %v414 = vadd.f32 %v357, %v409
  %s415 = scalar_lea.vmem %s0, 136
  %v416 = vld [vmem:[%s415] sm:$0xff]
  %v417 = vld [vmem:[%s146] sm:$0xf]
  %v418 = vld [vmem:[%s146 + $0x4] sm:$0xf]
  %v419 = vld [vmem:[%s146 + $0x8] sm:$0xf]
  %v420 = vld [vmem:[%s146 + $0xc] sm:$0xf]
  %v425 = vunpack.c.l.b16 %v417
  %v426 = vunpack.c.l.b16 %v418
  %v427 = vunpack.c.l.b16 %v419
  %v428 = vunpack.c.l.b16 %v420
  %v429 = vpack.c.b16 %v426, %v425
  %v430 = vpack.c.b16 %v428, %v427
  %433 = vmatprep.subr.bf16.mxu0 0
  %434 = vmatpush1.bf16.msra.mxu0 %v429
  %435 = vmatprep.subr.bf16.mxu0 0
  %436 = vmatpush1.bf16.msra.mxu0 %v430
  %437 = vmatprep.subr.bf16.mxu0 0
  %438 = vmatpush1.bf16.msra.mxu0 0
  %439 = vmatprep.subr.bf16.mxu0 0
  %440 = vmatpush1.bf16.msra.mxu0 0
  %441 = vmatprep.subr.bf16.mxu0 0
  %442 = vmatpush1.bf16.msra.mxu0 0
  %443 = vmatprep.subr.bf16.mxu0 0
  %444 = vmatpush1.bf16.msra.mxu0 0
  %445 = vmatprep.subr.bf16.mxu0 0
  %446 = vmatpush1.bf16.msra.mxu0 0
  %447 = vmatprep.subr.bf16.mxu0 0
  %448 = vmatpush1.bf16.msra.mxu0 0
  %449 = vmatprep.subr.bf16.mxu0 0
  %450 = vmatpush1.bf16.msra.mxu0 0
  %451 = vmatprep.subr.bf16.mxu0 0
  %452 = vmatpush1.bf16.msra.mxu0 0
  %453 = vmatprep.subr.bf16.mxu0 0
  %454 = vmatpush1.bf16.msra.mxu0 0
  %455 = vmatprep.subr.bf16.mxu0 0
  %456 = vmatpush1.bf16.msra.mxu0 0
  %457 = vmatprep.subr.bf16.mxu0 0
  %458 = vmatpush1.bf16.msra.mxu0 0
  %459 = vmatprep.subr.bf16.mxu0 0
  %460 = vmatpush1.bf16.msra.mxu0 0
  %461 = vmatprep.subr.bf16.mxu0 0
  %462 = vmatpush1.bf16.msra.mxu0 0
  %463 = vmatprep.subr.bf16.mxu0 0
  %464 = vmatpush1.bf16.msra.mxu0 0
  %465 = vmatprep.mubr.bf16.mxu0 0
  %466 = vmatmul.mubr.bf16.gmra.mrb[0].mxu0 %v313
  %v467 = vpop.f32.mrb[0].mxu0
  %v468 = vadd.f32 0.0, %v467
  %v469 = vpop.f32.mrb[0].mxu0
  %v470 = vpop.f32.mrb[0].mxu0
  %v471 = vpop.f32.mrb[0].mxu0
  %472 = vdwg.mxu0
  %v473 = vadd.f32 %v416, %v468
  %s474 = scalar_lea.vmem %s0, 200
  %v475 = vld [vmem:[%s474] sm:$0xff]
  %v476 = vld [vmem:[%s206] sm:$0xf]
  %v477 = vld [vmem:[%s206 + $0x4] sm:$0xf]
  %v478 = vld [vmem:[%s206 + $0x8] sm:$0xf]
  %v479 = vld [vmem:[%s206 + $0xc] sm:$0xf]
  %v484 = vunpack.c.l.b16 %v476
  %v485 = vunpack.c.l.b16 %v477
  %v486 = vunpack.c.l.b16 %v478
  %v487 = vunpack.c.l.b16 %v479
  %v488 = vpack.c.b16 %v485, %v484
  %v489 = vpack.c.b16 %v487, %v486
  %492 = vmatprep.subr.bf16.mxu0 0
  %493 = vmatpush1.bf16.msra.mxu0 %v488
  %494 = vmatprep.subr.bf16.mxu0 0
  %495 = vmatpush1.bf16.msra.mxu0 %v489
  %496 = vmatprep.subr.bf16.mxu0 0
  %497 = vmatpush1.bf16.msra.mxu0 0
  %498 = vmatprep.subr.bf16.mxu0 0
  %499 = vmatpush1.bf16.msra.mxu0 0
  %500 = vmatprep.subr.bf16.mxu0 0
  %501 = vmatpush1.bf16.msra.mxu0 0
  %502 = vmatprep.subr.bf16.mxu0 0
  %503 = vmatpush1.bf16.msra.mxu0 0
  %504 = vmatprep.subr.bf16.mxu0 0
  %505 = vmatpush1.bf16.msra.mxu0 0
  %506 = vmatprep.subr.bf16.mxu0 0
  %507 = vmatpush1.bf16.msra.mxu0 0
  %508 = vmatprep.subr.bf16.mxu0 0
  %509 = vmatpush1.bf16.msra.mxu0 0
  %510 = vmatprep.subr.bf16.mxu0 0
  %511 = vmatpush1.bf16.msra.mxu0 0
  %512 = vmatprep.subr.bf16.mxu0 0
  %513 = vmatpush1.bf16.msra.mxu0 0
  %514 = vmatprep.subr.bf16.mxu0 0
  %515 = vmatpush1.bf16.msra.mxu0 0
  %516 = vmatprep.subr.bf16.mxu0 0
  %517 = vmatpush1.bf16.msra.mxu0 0
  %518 = vmatprep.subr.bf16.mxu0 0
  %519 = vmatpush1.bf16.msra.mxu0 0
  %520 = vmatprep.subr.bf16.mxu0 0
  %521 = vmatpush1.bf16.msra.mxu0 0
  %522 = vmatprep.subr.bf16.mxu0 0
  %523 = vmatpush1.bf16.msra.mxu0 0
  %524 = vmatprep.mubr.bf16.mxu0 0
  %525 = vmatmul.mubr.bf16.gmra.mrb[0].mxu0 %v313
  %v526 = vpop.f32.mrb[0].mxu0
  %v527 = vadd.f32 0.0, %v526
  %v528 = vpop.f32.mrb[0].mxu0
  %v529 = vpop.f32.mrb[0].mxu0
  %v530 = vpop.f32.mrb[0].mxu0
  %531 = vdwg.mxu0
  %v532 = vadd.f32 %v475, %v527
  %v533 = vxor.u32 %v355, 2147483648
  %v534 = vmul.f32 %v533, 1.442695
  %v535 = vpow.pop %v534
  %v536 = vadd.f32 %v535, 1.0
  %v537 = vrcp.pop %v536
  %v538 = vmul.f32 1.0, %v537
  %v539 = vxor.u32 %v414, 2147483648
  %v540 = vmul.f32 %v539, 1.442695
  %v541 = vpow.pop %v540
  %v542 = vadd.f32 %v541, 1.0
  %v543 = vrcp.pop %v542
  %v544 = vmul.f32 1.0, %v543
  %v545 = vtanh.pop %v473
  %v546 = vxor.u32 %v532, 2147483648
  %v547 = vmul.f32 %v546, 1.442695
  %v548 = vpow.pop %v547
  %v549 = vadd.f32 %v548, 1.0
  %v550 = vrcp.pop %v549
  %v551 = vmul.f32 1.0, %v550
  %v552 = vmul.f32 %v544, %v292
  %v553 = vmul.f32 %v538, %v545
  %v554 = vadd.f32 %v552, %v553
  %v555 = vtanh.pop %v554
  %v556 = vmul.f32 %v551, %v555
  %557 = vst.msk [vmem:[#allocation3] sm:$0xff] %vm39, %v554
  %558 = vst.msk [vmem:[#allocation2] sm:$0xff] %vm39, %v556
  %s559 = scalar_lea.vmem %s2, 8
  %560 = vst.msk [vmem:[%s559] sm:$0xff] %vm39, %v556
  %v561 = vld [vmem:[#allocation2] sm:$0xff]
  %v562 = vld [vmem:[#allocation3] sm:$0xff]
  %v563 = vpack.c.bf16 %v561, %v561
  %s564 = scalar_lea.vmem %s0, 16
  %v565 = vld [vmem:[%s564] sm:$0xff]
  %v566 = vld [vmem:[%s1] sm:$0xf]
  %v567 = vld [vmem:[%s1 + $0x4] sm:$0xf]
  %v568 = vld [vmem:[%s1 + $0x8] sm:$0xf]
  %v569 = vld [vmem:[%s1 + $0xc] sm:$0xf]
  %v574 = vunpack.c.l.b16 %v566
  %v575 = vunpack.c.l.b16 %v567
  %v576 = vunpack.c.l.b16 %v568
  %v577 = vunpack.c.l.b16 %v569
  %v578 = vpack.c.b16 %v575, %v574
  %v579 = vpack.c.b16 %v577, %v576
  %v583 = vsel %vm39, %v563, 0
  %585 = vmatprep.subr.bf16.mxu0 0
  %586 = vmatpush1.bf16.msra.mxu0 %v578
  %587 = vmatprep.subr.bf16.mxu0 0
  %588 = vmatpush1.bf16.msra.mxu0 %v579
  %589 = vmatprep.subr.bf16.mxu0 0
  %590 = vmatpush1.bf16.msra.mxu0 0
  %591 = vmatprep.subr.bf16.mxu0 0
  %592 = vmatpush1.bf16.msra.mxu0 0
  %593 = vmatprep.subr.bf16.mxu0 0
  %594 = vmatpush1.bf16.msra.mxu0 0
  %595 = vmatprep.subr.bf16.mxu0 0
  %596 = vmatpush1.bf16.msra.mxu0 0
  %597 = vmatprep.subr.bf16.mxu0 0
  %598 = vmatpush1.bf16.msra.mxu0 0
  %599 = vmatprep.subr.bf16.mxu0 0
  %600 = vmatpush1.bf16.msra.mxu0 0
  %601 = vmatprep.subr.bf16.mxu0 0
  %602 = vmatpush1.bf16.msra.mxu0 0
  %603 = vmatprep.subr.bf16.mxu0 0
  %604 = vmatpush1.bf16.msra.mxu0 0
  %605 = vmatprep.subr.bf16.mxu0 0
  %606 = vmatpush1.bf16.msra.mxu0 0
  %607 = vmatprep.subr.bf16.mxu0 0
  %608 = vmatpush1.bf16.msra.mxu0 0
  %609 = vmatprep.subr.bf16.mxu0 0
  %610 = vmatpush1.bf16.msra.mxu0 0
  %611 = vmatprep.subr.bf16.mxu0 0
  %612 = vmatpush1.bf16.msra.mxu0 0
  %613 = vmatprep.subr.bf16.mxu0 0
  %614 = vmatpush1.bf16.msra.mxu0 0
  %615 = vmatprep.subr.bf16.mxu0 0
  %616 = vmatpush1.bf16.msra.mxu0 0
  %617 = vmatprep.mubr.bf16.mxu0 0
  %618 = vmatmul.mubr.bf16.gmra.mrb[0].mxu0 %v583
  %v619 = vpop.f32.mrb[0].mxu0
  %v620 = vadd.f32 0.0, %v619
  %v621 = vpop.f32.mrb[0].mxu0
  %v622 = vpop.f32.mrb[0].mxu0
  %v623 = vpop.f32.mrb[0].mxu0
  %624 = vdwg.mxu0
  %v625 = vadd.f32 %v565, %v620
  %s626 = scalar_lea.vmem %s0, 80
  %v627 = vld [vmem:[%s626] sm:$0xff]
  %v628 = vld [vmem:[%s86] sm:$0xf]
  %v629 = vld [vmem:[%s86 + $0x4] sm:$0xf]
  %v630 = vld [vmem:[%s86 + $0x8] sm:$0xf]
  %v631 = vld [vmem:[%s86 + $0xc] sm:$0xf]
  %v636 = vunpack.c.l.b16 %v628
  %v637 = vunpack.c.l.b16 %v629
  %v638 = vunpack.c.l.b16 %v630
  %v639 = vunpack.c.l.b16 %v631
  %v640 = vpack.c.b16 %v637, %v636
  %v641 = vpack.c.b16 %v639, %v638
  %644 = vmatprep.subr.bf16.mxu0 0
  %645 = vmatpush1.bf16.msra.mxu0 %v640
  %646 = vmatprep.subr.bf16.mxu0 0
  %647 = vmatpush1.bf16.msra.mxu0 %v641
  %648 = vmatprep.subr.bf16.mxu0 0
  %649 = vmatpush1.bf16.msra.mxu0 0
  %650 = vmatprep.subr.bf16.mxu0 0
  %651 = vmatpush1.bf16.msra.mxu0 0
  %652 = vmatprep.subr.bf16.mxu0 0
  %653 = vmatpush1.bf16.msra.mxu0 0
  %654 = vmatprep.subr.bf16.mxu0 0
  %655 = vmatpush1.bf16.msra.mxu0 0
  %656 = vmatprep.subr.bf16.mxu0 0
  %657 = vmatpush1.bf16.msra.mxu0 0
  %658 = vmatprep.subr.bf16.mxu0 0
  %659 = vmatpush1.bf16.msra.mxu0 0
  %660 = vmatprep.subr.bf16.mxu0 0
  %661 = vmatpush1.bf16.msra.mxu0 0
  %662 = vmatprep.subr.bf16.mxu0 0
  %663 = vmatpush1.bf16.msra.mxu0 0
  %664 = vmatprep.subr.bf16.mxu0 0
  %665 = vmatpush1.bf16.msra.mxu0 0
  %666 = vmatprep.subr.bf16.mxu0 0
  %667 = vmatpush1.bf16.msra.mxu0 0
  %668 = vmatprep.subr.bf16.mxu0 0
  %669 = vmatpush1.bf16.msra.mxu0 0
  %670 = vmatprep.subr.bf16.mxu0 0
  %671 = vmatpush1.bf16.msra.mxu0 0
  %672 = vmatprep.subr.bf16.mxu0 0
  %673 = vmatpush1.bf16.msra.mxu0 0
  %674 = vmatprep.subr.bf16.mxu0 0
  %675 = vmatpush1.bf16.msra.mxu0 0
  %676 = vmatprep.mubr.bf16.mxu0 0
  %677 = vmatmul.mubr.bf16.gmra.mrb[0].mxu0 %v583
  %v678 = vpop.f32.mrb[0].mxu0
  %v679 = vadd.f32 0.0, %v678
  %v680 = vpop.f32.mrb[0].mxu0
  %v681 = vpop.f32.mrb[0].mxu0
  %v682 = vpop.f32.mrb[0].mxu0
  %683 = vdwg.mxu0
  %v684 = vadd.f32 %v627, %v679
  %s685 = scalar_lea.vmem %s0, 144
  %v686 = vld [vmem:[%s685] sm:$0xff]
  %v687 = vld [vmem:[%s146] sm:$0xf]
  %v688 = vld [vmem:[%s146 + $0x4] sm:$0xf]
  %v689 = vld [vmem:[%s146 + $0x8] sm:$0xf]
  %v690 = vld [vmem:[%s146 + $0xc] sm:$0xf]
  %v695 = vunpack.c.l.b16 %v687
  %v696 = vunpack.c.l.b16 %v688
  %v697 = vunpack.c.l.b16 %v689
  %v698 = vunpack.c.l.b16 %v690
  %v699 = vpack.c.b16 %v696, %v695
  %v700 = vpack.c.b16 %v698, %v697
  %703 = vmatprep.subr.bf16.mxu0 0
  %704 = vmatpush1.bf16.msra.mxu0 %v699
  %705 = vmatprep.subr.bf16.mxu0 0
  %706 = vmatpush1.bf16.msra.mxu0 %v700
  %707 = vmatprep.subr.bf16.mxu0 0
  %708 = vmatpush1.bf16.msra.mxu0 0
  %709 = vmatprep.subr.bf16.mxu0 0
  %710 = vmatpush1.bf16.msra.mxu0 0
  %711 = vmatprep.subr.bf16.mxu0 0
  %712 = vmatpush1.bf16.msra.mxu0 0
  %713 = vmatprep.subr.bf16.mxu0 0
  %714 = vmatpush1.bf16.msra.mxu0 0
  %715 = vmatprep.subr.bf16.mxu0 0
  %716 = vmatpush1.bf16.msra.mxu0 0
  %717 = vmatprep.subr.bf16.mxu0 0
  %718 = vmatpush1.bf16.msra.mxu0 0
  %719 = vmatprep.subr.bf16.mxu0 0
  %720 = vmatpush1.bf16.msra.mxu0 0
  %721 = vmatprep.subr.bf16.mxu0 0
  %722 = vmatpush1.bf16.msra.mxu0 0
  %723 = vmatprep.subr.bf16.mxu0 0
  %724 = vmatpush1.bf16.msra.mxu0 0
  %725 = vmatprep.subr.bf16.mxu0 0
  %726 = vmatpush1.bf16.msra.mxu0 0
  %727 = vmatprep.subr.bf16.mxu0 0
  %728 = vmatpush1.bf16.msra.mxu0 0
  %729 = vmatprep.subr.bf16.mxu0 0
  %730 = vmatpush1.bf16.msra.mxu0 0
  %731 = vmatprep.subr.bf16.mxu0 0
  %732 = vmatpush1.bf16.msra.mxu0 0
  %733 = vmatprep.subr.bf16.mxu0 0
  %734 = vmatpush1.bf16.msra.mxu0 0
  %735 = vmatprep.mubr.bf16.mxu0 0
  %736 = vmatmul.mubr.bf16.gmra.mrb[0].mxu0 %v583
  %v737 = vpop.f32.mrb[0].mxu0
  %v738 = vadd.f32 0.0, %v737
  %v739 = vpop.f32.mrb[0].mxu0
  %v740 = vpop.f32.mrb[0].mxu0
  %v741 = vpop.f32.mrb[0].mxu0
  %742 = vdwg.mxu0
  %v743 = vadd.f32 %v686, %v738
  %s744 = scalar_lea.vmem %s0, 208
  %v745 = vld [vmem:[%s744] sm:$0xff]
  %v746 = vld [vmem:[%s206] sm:$0xf]
  %v747 = vld [vmem:[%s206 + $0x4] sm:$0xf]
  %v748 = vld [vmem:[%s206 + $0x8] sm:$0xf]
  %v749 = vld [vmem:[%s206 + $0xc] sm:$0xf]
  %v754 = vunpack.c.l.b16 %v746
  %v755 = vunpack.c.l.b16 %v747
  %v756 = vunpack.c.l.b16 %v748
  %v757 = vunpack.c.l.b16 %v749
  %v758 = vpack.c.b16 %v755, %v754
  %v759 = vpack.c.b16 %v757, %v756
  %762 = vmatprep.subr.bf16.mxu0 0
  %763 = vmatpush1.bf16.msra.mxu0 %v758
  %764 = vmatprep.subr.bf16.mxu0 0
  %765 = vmatpush1.bf16.msra.mxu0 %v759
  %766 = vmatprep.subr.bf16.mxu0 0
  %767 = vmatpush1.bf16.msra.mxu0 0
  %768 = vmatprep.subr.bf16.mxu0 0
  %769 = vmatpush1.bf16.msra.mxu0 0
  %770 = vmatprep.subr.bf16.mxu0 0
  %771 = vmatpush1.bf16.msra.mxu0 0
  %772 = vmatprep.subr.bf16.mxu0 0
  %773 = vmatpush1.bf16.msra.mxu0 0
  %774 = vmatprep.subr.bf16.mxu0 0
  %775 = vmatpush1.bf16.msra.mxu0 0
  %776 = vmatprep.subr.bf16.mxu0 0
  %777 = vmatpush1.bf16.msra.mxu0 0
  %778 = vmatprep.subr.bf16.mxu0 0
  %779 = vmatpush1.bf16.msra.mxu0 0
  %780 = vmatprep.subr.bf16.mxu0 0
  %781 = vmatpush1.bf16.msra.mxu0 0
  %782 = vmatprep.subr.bf16.mxu0 0
  %783 = vmatpush1.bf16.msra.mxu0 0
  %784 = vmatprep.subr.bf16.mxu0 0
  %785 = vmatpush1.bf16.msra.mxu0 0
  %786 = vmatprep.subr.bf16.mxu0 0
  %787 = vmatpush1.bf16.msra.mxu0 0
  %788 = vmatprep.subr.bf16.mxu0 0
  %789 = vmatpush1.bf16.msra.mxu0 0
  %790 = vmatprep.subr.bf16.mxu0 0
  %791 = vmatpush1.bf16.msra.mxu0 0
  %792 = vmatprep.subr.bf16.mxu0 0
  %793 = vmatpush1.bf16.msra.mxu0 0
  %794 = vmatprep.mubr.bf16.mxu0 0
  %795 = vmatmul.mubr.bf16.gmra.mrb[0].mxu0 %v583
  %v796 = vpop.f32.mrb[0].mxu0
  %v797 = vadd.f32 0.0, %v796
  %v798 = vpop.f32.mrb[0].mxu0
  %v799 = vpop.f32.mrb[0].mxu0
  %v800 = vpop.f32.mrb[0].mxu0
  %801 = vdwg.mxu0
  %v802 = vadd.f32 %v745, %v797
  %v803 = vxor.u32 %v625, 2147483648
  %v804 = vmul.f32 %v803, 1.442695
  %v805 = vpow.pop %v804
  %v806 = vadd.f32 %v805, 1.0
  %v807 = vrcp.pop %v806
  %v808 = vmul.f32 1.0, %v807
  %v809 = vxor.u32 %v684, 2147483648
  %v810 = vmul.f32 %v809, 1.442695
  %v811 = vpow.pop %v810
  %v812 = vadd.f32 %v811, 1.0
  %v813 = vrcp.pop %v812
  %v814 = vmul.f32 1.0, %v813
  %v815 = vtanh.pop %v743
  %v816 = vxor.u32 %v802, 2147483648
  %v817 = vmul.f32 %v816, 1.442695
  %v818 = vpow.pop %v817
  %v819 = vadd.f32 %v818, 1.0
  %v820 = vrcp.pop %v819
  %v821 = vmul.f32 1.0, %v820
  %v822 = vmul.f32 %v814, %v562
  %v823 = vmul.f32 %v808, %v815
  %v824 = vadd.f32 %v822, %v823
  %v825 = vtanh.pop %v824
  %v826 = vmul.f32 %v821, %v825
  %827 = vst.msk [vmem:[#allocation3] sm:$0xff] %vm39, %v824
  %828 = vst.msk [vmem:[#allocation2] sm:$0xff] %vm39, %v826
  %s829 = scalar_lea.vmem %s2, 16
  %830 = vst.msk [vmem:[%s829] sm:$0xff] %vm39, %v826
  %v831 = vld [vmem:[#allocation2] sm:$0xff]
  %v832 = vld [vmem:[#allocation3] sm:$0xff]
  %v833 = vpack.c.bf16 %v831, %v831
  %s834 = scalar_lea.vmem %s0, 24
  %v835 = vld [vmem:[%s834] sm:$0xff]
  %v836 = vld [vmem:[%s1] sm:$0xf]
  %v837 = vld [vmem:[%s1 + $0x4] sm:$0xf]
  %v838 = vld [vmem:[%s1 + $0x8] sm:$0xf]
  %v839 = vld [vmem:[%s1 + $0xc] sm:$0xf]
  %v844 = vunpack.c.l.b16 %v836
  %v845 = vunpack.c.l.b16 %v837
  %v846 = vunpack.c.l.b16 %v838
  %v847 = vunpack.c.l.b16 %v839
  %v848 = vpack.c.b16 %v845, %v844
  %v849 = vpack.c.b16 %v847, %v846
  %v853 = vsel %vm39, %v833, 0
  %855 = vmatprep.subr.bf16.mxu0 0
  %856 = vmatpush1.bf16.msra.mxu0 %v848
  %857 = vmatprep.subr.bf16.mxu0 0
  %858 = vmatpush1.bf16.msra.mxu0 %v849
  %859 = vmatprep.subr.bf16.mxu0 0
  %860 = vmatpush1.bf16.msra.mxu0 0
  %861 = vmatprep.subr.bf16.mxu0 0
  %862 = vmatpush1.bf16.msra.mxu0 0
  %863 = vmatprep.subr.bf16.mxu0 0
  %864 = vmatpush1.bf16.msra.mxu0 0
  %865 = vmatprep.subr.bf16.mxu0 0
  %866 = vmatpush1.bf16.msra.mxu0 0
  %867 = vmatprep.subr.bf16.mxu0 0
  %868 = vmatpush1.bf16.msra.mxu0 0
  %869 = vmatprep.subr.bf16.mxu0 0
  %870 = vmatpush1.bf16.msra.mxu0 0
  %871 = vmatprep.subr.bf16.mxu0 0
  %872 = vmatpush1.bf16.msra.mxu0 0
  %873 = vmatprep.subr.bf16.mxu0 0
  %874 = vmatpush1.bf16.msra.mxu0 0
  %875 = vmatprep.subr.bf16.mxu0 0
  %876 = vmatpush1.bf16.msra.mxu0 0
  %877 = vmatprep.subr.bf16.mxu0 0
  %878 = vmatpush1.bf16.msra.mxu0 0
  %879 = vmatprep.subr.bf16.mxu0 0
  %880 = vmatpush1.bf16.msra.mxu0 0
  %881 = vmatprep.subr.bf16.mxu0 0
  %882 = vmatpush1.bf16.msra.mxu0 0
  %883 = vmatprep.subr.bf16.mxu0 0
  %884 = vmatpush1.bf16.msra.mxu0 0
  %885 = vmatprep.subr.bf16.mxu0 0
  %886 = vmatpush1.bf16.msra.mxu0 0
  %887 = vmatprep.mubr.bf16.mxu0 0
  %888 = vmatmul.mubr.bf16.gmra.mrb[0].mxu0 %v853
  %v889 = vpop.f32.mrb[0].mxu0
  %v890 = vadd.f32 0.0, %v889
  %v891 = vpop.f32.mrb[0].mxu0
  %v892 = vpop.f32.mrb[0].mxu0
  %v893 = vpop.f32.mrb[0].mxu0
  %894 = vdwg.mxu0
  %v895 = vadd.f32 %v835, %v890
  %s896 = scalar_lea.vmem %s0, 88
  %v897 = vld [vmem:[%s896] sm:$0xff]
  %v898 = vld [vmem:[%s86] sm:$0xf]
  %v899 = vld [vmem:[%s86 + $0x4] sm:$0xf]
  %v900 = vld [vmem:[%s86 + $0x8] sm:$0xf]
  %v901 = vld [vmem:[%s86 + $0xc] sm:$0xf]
  %v906 = vunpack.c.l.b16 %v898
  %v907 = vunpack.c.l.b16 %v899
  %v908 = vunpack.c.l.b16 %v900
  %v909 = vunpack.c.l.b16 %v901
  %v910 = vpack.c.b16 %v907, %v906
  %v911 = vpack.c.b16 %v909, %v908
  %914 = vmatprep.subr.bf16.mxu0 0
  %915 = vmatpush1.bf16.msra.mxu0 %v910
  %916 = vmatprep.subr.bf16.mxu0 0
  %917 = vmatpush1.bf16.msra.mxu0 %v911
  %918 = vmatprep.subr.bf16.mxu0 0
  %919 = vmatpush1.bf16.msra.mxu0 0
  %920 = vmatprep.subr.bf16.mxu0 0
  %921 = vmatpush1.bf16.msra.mxu0 0
  %922 = vmatprep.subr.bf16.mxu0 0
  %923 = vmatpush1.bf16.msra.mxu0 0
  %924 = vmatprep.subr.bf16.mxu0 0
  %925 = vmatpush1.bf16.msra.mxu0 0
  %926 = vmatprep.subr.bf16.mxu0 0
  %927 = vmatpush1.bf16.msra.mxu0 0
  %928 = vmatprep.subr.bf16.mxu0 0
  %929 = vmatpush1.bf16.msra.mxu0 0
  %930 = vmatprep.subr.bf16.mxu0 0
  %931 = vmatpush1.bf16.msra.mxu0 0
  %932 = vmatprep.subr.bf16.mxu0 0
  %933 = vmatpush1.bf16.msra.mxu0 0
  %934 = vmatprep.subr.bf16.mxu0 0
  %935 = vmatpush1.bf16.msra.mxu0 0
  %936 = vmatprep.subr.bf16.mxu0 0
  %937 = vmatpush1.bf16.msra.mxu0 0
  %938 = vmatprep.subr.bf16.mxu0 0
  %939 = vmatpush1.bf16.msra.mxu0 0
  %940 = vmatprep.subr.bf16.mxu0 0
  %941 = vmatpush1.bf16.msra.mxu0 0
  %942 = vmatprep.subr.bf16.mxu0 0
  %943 = vmatpush1.bf16.msra.mxu0 0
  %944 = vmatprep.subr.bf16.mxu0 0
  %945 = vmatpush1.bf16.msra.mxu0 0
  %946 = vmatprep.mubr.bf16.mxu0 0
  %947 = vmatmul.mubr.bf16.gmra.mrb[0].mxu0 %v853
  %v948 = vpop.f32.mrb[0].mxu0
  %v949 = vadd.f32 0.0, %v948
  %v950 = vpop.f32.mrb[0].mxu0
  %v951 = vpop.f32.mrb[0].mxu0
  %v952 = vpop.f32.mrb[0].mxu0
  %953 = vdwg.mxu0
  %v954 = vadd.f32 %v897, %v949
  %s955 = scalar_lea.vmem %s0, 152
  %v956 = vld [vmem:[%s955] sm:$0xff]
  %v957 = vld [vmem:[%s146] sm:$0xf]
  %v958 = vld [vmem:[%s146 + $0x4] sm:$0xf]
  %v959 = vld [vmem:[%s146 + $0x8] sm:$0xf]
  %v960 = vld [vmem:[%s146 + $0xc] sm:$0xf]
  %v965 = vunpack.c.l.b16 %v957
  %v966 = vunpack.c.l.b16 %v958
  %v967 = vunpack.c.l.b16 %v959
  %v968 = vunpack.c.l.b16 %v960
  %v969 = vpack.c.b16 %v966, %v965
  %v970 = vpack.c.b16 %v968, %v967
  %973 = vmatprep.subr.bf16.mxu0 0
  %974 = vmatpush1.bf16.msra.mxu0 %v969
  %975 = vmatprep.subr.bf16.mxu0 0
  %976 = vmatpush1.bf16.msra.mxu0 %v970
  %977 = vmatprep.subr.bf16.mxu0 0
  %978 = vmatpush1.bf16.msra.mxu0 0
  %979 = vmatprep.subr.bf16.mxu0 0
  %980 = vmatpush1.bf16.msra.mxu0 0
  %981 = vmatprep.subr.bf16.mxu0 0
  %982 = vmatpush1.bf16.msra.mxu0 0
  %983 = vmatprep.subr.bf16.mxu0 0
  %984 = vmatpush1.bf16.msra.mxu0 0
  %985 = vmatprep.subr.bf16.mxu0 0
  %986 = vmatpush1.bf16.msra.mxu0 0
  %987 = vmatprep.subr.bf16.mxu0 0
  %988 = vmatpush1.bf16.msra.mxu0 0
  %989 = vmatprep.subr.bf16.mxu0 0
  %990 = vmatpush1.bf16.msra.mxu0 0
  %991 = vmatprep.subr.bf16.mxu0 0
  %992 = vmatpush1.bf16.msra.mxu0 0
  %993 = vmatprep.subr.bf16.mxu0 0
  %994 = vmatpush1.bf16.msra.mxu0 0
  %995 = vmatprep.subr.bf16.mxu0 0
  %996 = vmatpush1.bf16.msra.mxu0 0
  %997 = vmatprep.subr.bf16.mxu0 0
  %998 = vmatpush1.bf16.msra.mxu0 0
  %999 = vmatprep.subr.bf16.mxu0 0
  %1000 = vmatpush1.bf16.msra.mxu0 0
  %1001 = vmatprep.subr.bf16.mxu0 0
  %1002 = vmatpush1.bf16.msra.mxu0 0
  %1003 = vmatprep.subr.bf16.mxu0 0
  %1004 = vmatpush1.bf16.msra.mxu0 0
  %1005 = vmatprep.mubr.bf16.mxu0 0
  %1006 = vmatmul.mubr.bf16.gmra.mrb[0].mxu0 %v853
  %v1007 = vpop.f32.mrb[0].mxu0
  %v1008 = vadd.f32 0.0, %v1007
  %v1009 = vpop.f32.mrb[0].mxu0
  %v1010 = vpop.f32.mrb[0].mxu0
  %v1011 = vpop.f32.mrb[0].mxu0
  %1012 = vdwg.mxu0
  %v1013 = vadd.f32 %v956, %v1008
  %s1014 = scalar_lea.vmem %s0, 216
  %v1015 = vld [vmem:[%s1014] sm:$0xff]
  %v1016 = vld [vmem:[%s206] sm:$0xf]
  %v1017 = vld [vmem:[%s206 + $0x4] sm:$0xf]
  %v1018 = vld [vmem:[%s206 + $0x8] sm:$0xf]
  %v1019 = vld [vmem:[%s206 + $0xc] sm:$0xf]
  %v1024 = vunpack.c.l.b16 %v1016
  %v1025 = vunpack.c.l.b16 %v1017
  %v1026 = vunpack.c.l.b16 %v1018
  %v1027 = vunpack.c.l.b16 %v1019
  %v1028 = vpack.c.b16 %v1025, %v1024
  %v1029 = vpack.c.b16 %v1027, %v1026
  %1032 = vmatprep.subr.bf16.mxu0 0
  %1033 = vmatpush1.bf16.msra.mxu0 %v1028
  %1034 = vmatprep.subr.bf16.mxu0 0
  %1035 = vmatpush1.bf16.msra.mxu0 %v1029
  %1036 = vmatprep.subr.bf16.mxu0 0
  %1037 = vmatpush1.bf16.msra.mxu0 0
  %1038 = vmatprep.subr.bf16.mxu0 0
  %1039 = vmatpush1.bf16.msra.mxu0 0
  %1040 = vmatprep.subr.bf16.mxu0 0
  %1041 = vmatpush1.bf16.msra.mxu0 0
  %1042 = vmatprep.subr.bf16.mxu0 0
  %1043 = vmatpush1.bf16.msra.mxu0 0
  %1044 = vmatprep.subr.bf16.mxu0 0
  %1045 = vmatpush1.bf16.msra.mxu0 0
  %1046 = vmatprep.subr.bf16.mxu0 0
  %1047 = vmatpush1.bf16.msra.mxu0 0
  %1048 = vmatprep.subr.bf16.mxu0 0
  %1049 = vmatpush1.bf16.msra.mxu0 0
  %1050 = vmatprep.subr.bf16.mxu0 0
  %1051 = vmatpush1.bf16.msra.mxu0 0
  %1052 = vmatprep.subr.bf16.mxu0 0
  %1053 = vmatpush1.bf16.msra.mxu0 0
  %1054 = vmatprep.subr.bf16.mxu0 0
  %1055 = vmatpush1.bf16.msra.mxu0 0
  %1056 = vmatprep.subr.bf16.mxu0 0
  %1057 = vmatpush1.bf16.msra.mxu0 0
  %1058 = vmatprep.subr.bf16.mxu0 0
  %1059 = vmatpush1.bf16.msra.mxu0 0
  %1060 = vmatprep.subr.bf16.mxu0 0
  %1061 = vmatpush1.bf16.msra.mxu0 0
  %1062 = vmatprep.subr.bf16.mxu0 0
  %1063 = vmatpush1.bf16.msra.mxu0 0
  %1064 = vmatprep.mubr.bf16.mxu0 0
  %1065 = vmatmul.mubr.bf16.gmra.mrb[0].mxu0 %v853
  %v1066 = vpop.f32.mrb[0].mxu0
  %v1067 = vadd.f32 0.0, %v1066
  %v1068 = vpop.f32.mrb[0].mxu0
  %v1069 = vpop.f32.mrb[0].mxu0
  %v1070 = vpop.f32.mrb[0].mxu0
  %1071 = vdwg.mxu0
  %v1072 = vadd.f32 %v1015, %v1067
  %v1073 = vxor.u32 %v895, 2147483648
  %v1074 = vmul.f32 %v1073, 1.442695
  %v1075 = vpow.pop %v1074
  %v1076 = vadd.f32 %v1075, 1.0
  %v1077 = vrcp.pop %v1076
  %v1078 = vmul.f32 1.0, %v1077
  %v1079 = vxor.u32 %v954, 2147483648
  %v1080 = vmul.f32 %v1079, 1.442695
  %v1081 = vpow.pop %v1080
  %v1082 = vadd.f32 %v1081, 1.0
  %v1083 = vrcp.pop %v1082
  %v1084 = vmul.f32 1.0, %v1083
  %v1085 = vtanh.pop %v1013
  %v1086 = vxor.u32 %v1072, 2147483648
  %v1087 = vmul.f32 %v1086, 1.442695
  %v1088 = vpow.pop %v1087
  %v1089 = vadd.f32 %v1088, 1.0
  %v1090 = vrcp.pop %v1089
  %v1091 = vmul.f32 1.0, %v1090
  %v1092 = vmul.f32 %v1084, %v832
  %v1093 = vmul.f32 %v1078, %v1085
  %v1094 = vadd.f32 %v1092, %v1093
  %v1095 = vtanh.pop %v1094
  %v1096 = vmul.f32 %v1091, %v1095
  %1097 = vst.msk [vmem:[#allocation3] sm:$0xff] %vm39, %v1094
  %1098 = vst.msk [vmem:[#allocation2] sm:$0xff] %vm39, %v1096
  %s1099 = scalar_lea.vmem %s2, 24
  %1100 = vst.msk [vmem:[%s1099] sm:$0xff] %vm39, %v1096
  %v1101 = vld [vmem:[#allocation2] sm:$0xff]
  %v1102 = vld [vmem:[#allocation3] sm:$0xff]
  %v1103 = vpack.c.bf16 %v1101, %v1101
  %s1104 = scalar_lea.vmem %s0, 32
  %v1105 = vld [vmem:[%s1104] sm:$0xff]
  %v1106 = vld [vmem:[%s1] sm:$0xf]
  %v1107 = vld [vmem:[%s1 + $0x4] sm:$0xf]
  %v1108 = vld [vmem:[%s1 + $0x8] sm:$0xf]
  %v1109 = vld [vmem:[%s1 + $0xc] sm:$0xf]
  %v1114 = vunpack.c.l.b16 %v1106
  %v1115 = vunpack.c.l.b16 %v1107
  %v1116 = vunpack.c.l.b16 %v1108
  %v1117 = vunpack.c.l.b16 %v1109
  %v1118 = vpack.c.b16 %v1115, %v1114
  %v1119 = vpack.c.b16 %v1117, %v1116
  %v1123 = vsel %vm39, %v1103, 0
  %1125 = vmatprep.subr.bf16.mxu0 0
  %1126 = vmatpush1.bf16.msra.mxu0 %v1118
  %1127 = vmatprep.subr.bf16.mxu0 0
  %1128 = vmatpush1.bf16.msra.mxu0 %v1119
  %1129 = vmatprep.subr.bf16.mxu0 0
  %1130 = vmatpush1.bf16.msra.mxu0 0
  %1131 = vmatprep.subr.bf16.mxu0 0
  %1132 = vmatpush1.bf16.msra.mxu0 0
  %1133 = vmatprep.subr.bf16.mxu0 0
  %1134 = vmatpush1.bf16.msra.mxu0 0
  %1135 = vmatprep.subr.bf16.mxu0 0
  %1136 = vmatpush1.bf16.msra.mxu0 0
  %1137 = vmatprep.subr.bf16.mxu0 0
  %1138 = vmatpush1.bf16.msra.mxu0 0
  %1139 = vmatprep.subr.bf16.mxu0 0
  %1140 = vmatpush1.bf16.msra.mxu0 0
  %1141 = vmatprep.subr.bf16.mxu0 0
  %1142 = vmatpush1.bf16.msra.mxu0 0
  %1143 = vmatprep.subr.bf16.mxu0 0
  %1144 = vmatpush1.bf16.msra.mxu0 0
  %1145 = vmatprep.subr.bf16.mxu0 0
  %1146 = vmatpush1.bf16.msra.mxu0 0
  %1147 = vmatprep.subr.bf16.mxu0 0
  %1148 = vmatpush1.bf16.msra.mxu0 0
  %1149 = vmatprep.subr.bf16.mxu0 0
  %1150 = vmatpush1.bf16.msra.mxu0 0
  %1151 = vmatprep.subr.bf16.mxu0 0
  %1152 = vmatpush1.bf16.msra.mxu0 0
  %1153 = vmatprep.subr.bf16.mxu0 0
  %1154 = vmatpush1.bf16.msra.mxu0 0
  %1155 = vmatprep.subr.bf16.mxu0 0
  %1156 = vmatpush1.bf16.msra.mxu0 0
  %1157 = vmatprep.mubr.bf16.mxu0 0
  %1158 = vmatmul.mubr.bf16.gmra.mrb[0].mxu0 %v1123
  %v1159 = vpop.f32.mrb[0].mxu0
  %v1160 = vadd.f32 0.0, %v1159
  %v1161 = vpop.f32.mrb[0].mxu0
  %v1162 = vpop.f32.mrb[0].mxu0
  %v1163 = vpop.f32.mrb[0].mxu0
  %1164 = vdwg.mxu0
  %v1165 = vadd.f32 %v1105, %v1160
  %s1166 = scalar_lea.vmem %s0, 96
  %v1167 = vld [vmem:[%s1166] sm:$0xff]
  %v1168 = vld [vmem:[%s86] sm:$0xf]
  %v1169 = vld [vmem:[%s86 + $0x4] sm:$0xf]
  %v1170 = vld [vmem:[%s86 + $0x8] sm:$0xf]
  %v1171 = vld [vmem:[%s86 + $0xc] sm:$0xf]
  %v1176 = vunpack.c.l.b16 %v1168
  %v1177 = vunpack.c.l.b16 %v1169
  %v1178 = vunpack.c.l.b16 %v1170
  %v1179 = vunpack.c.l.b16 %v1171
  %v1180 = vpack.c.b16 %v1177, %v1176
  %v1181 = vpack.c.b16 %v1179, %v1178
  %1184 = vmatprep.subr.bf16.mxu0 0
  %1185 = vmatpush1.bf16.msra.mxu0 %v1180
  %1186 = vmatprep.subr.bf16.mxu0 0
  %1187 = vmatpush1.bf16.msra.mxu0 %v1181
  %1188 = vmatprep.subr.bf16.mxu0 0
  %1189 = vmatpush1.bf16.msra.mxu0 0
  %1190 = vmatprep.subr.bf16.mxu0 0
  %1191 = vmatpush1.bf16.msra.mxu0 0
  %1192 = vmatprep.subr.bf16.mxu0 0
  %1193 = vmatpush1.bf16.msra.mxu0 0
  %1194 = vmatprep.subr.bf16.mxu0 0
  %1195 = vmatpush1.bf16.msra.mxu0 0
  %1196 = vmatprep.subr.bf16.mxu0 0
  %1197 = vmatpush1.bf16.msra.mxu0 0
  %1198 = vmatprep.subr.bf16.mxu0 0
  %1199 = vmatpush1.bf16.msra.mxu0 0
  %1200 = vmatprep.subr.bf16.mxu0 0
  %1201 = vmatpush1.bf16.msra.mxu0 0
  %1202 = vmatprep.subr.bf16.mxu0 0
  %1203 = vmatpush1.bf16.msra.mxu0 0
  %1204 = vmatprep.subr.bf16.mxu0 0
  %1205 = vmatpush1.bf16.msra.mxu0 0
  %1206 = vmatprep.subr.bf16.mxu0 0
  %1207 = vmatpush1.bf16.msra.mxu0 0
  %1208 = vmatprep.subr.bf16.mxu0 0
  %1209 = vmatpush1.bf16.msra.mxu0 0
  %1210 = vmatprep.subr.bf16.mxu0 0
  %1211 = vmatpush1.bf16.msra.mxu0 0
  %1212 = vmatprep.subr.bf16.mxu0 0
  %1213 = vmatpush1.bf16.msra.mxu0 0
  %1214 = vmatprep.subr.bf16.mxu0 0
  %1215 = vmatpush1.bf16.msra.mxu0 0
  %1216 = vmatprep.mubr.bf16.mxu0 0
  %1217 = vmatmul.mubr.bf16.gmra.mrb[0].mxu0 %v1123
  %v1218 = vpop.f32.mrb[0].mxu0
  %v1219 = vadd.f32 0.0, %v1218
  %v1220 = vpop.f32.mrb[0].mxu0
  %v1221 = vpop.f32.mrb[0].mxu0
  %v1222 = vpop.f32.mrb[0].mxu0
  %1223 = vdwg.mxu0
  %v1224 = vadd.f32 %v1167, %v1219
  %s1225 = scalar_lea.vmem %s0, 160
  %v1226 = vld [vmem:[%s1225] sm:$0xff]
  %v1227 = vld [vmem:[%s146] sm:$0xf]
  %v1228 = vld [vmem:[%s146 + $0x4] sm:$0xf]
  %v1229 = vld [vmem:[%s146 + $0x8] sm:$0xf]
  %v1230 = vld [vmem:[%s146 + $0xc] sm:$0xf]
  %v1235 = vunpack.c.l.b16 %v1227
  %v1236 = vunpack.c.l.b16 %v1228
  %v1237 = vunpack.c.l.b16 %v1229
  %v1238 = vunpack.c.l.b16 %v1230
  %v1239 = vpack.c.b16 %v1236, %v1235
  %v1240 = vpack.c.b16 %v1238, %v1237
  %1243 = vmatprep.subr.bf16.mxu0 0
  %1244 = vmatpush1.bf16.msra.mxu0 %v1239
  %1245 = vmatprep.subr.bf16.mxu0 0
  %1246 = vmatpush1.bf16.msra.mxu0 %v1240
  %1247 = vmatprep.subr.bf16.mxu0 0
  %1248 = vmatpush1.bf16.msra.mxu0 0
  %1249 = vmatprep.subr.bf16.mxu0 0
  %1250 = vmatpush1.bf16.msra.mxu0 0
  %1251 = vmatprep.subr.bf16.mxu0 0
  %1252 = vmatpush1.bf16.msra.mxu0 0
  %1253 = vmatprep.subr.bf16.mxu0 0
  %1254 = vmatpush1.bf16.msra.mxu0 0
  %1255 = vmatprep.subr.bf16.mxu0 0
  %1256 = vmatpush1.bf16.msra.mxu0 0
  %1257 = vmatprep.subr.bf16.mxu0 0
  %1258 = vmatpush1.bf16.msra.mxu0 0
  %1259 = vmatprep.subr.bf16.mxu0 0
  %1260 = vmatpush1.bf16.msra.mxu0 0
  %1261 = vmatprep.subr.bf16.mxu0 0
  %1262 = vmatpush1.bf16.msra.mxu0 0
  %1263 = vmatprep.subr.bf16.mxu0 0
  %1264 = vmatpush1.bf16.msra.mxu0 0
  %1265 = vmatprep.subr.bf16.mxu0 0
  %1266 = vmatpush1.bf16.msra.mxu0 0
  %1267 = vmatprep.subr.bf16.mxu0 0
  %1268 = vmatpush1.bf16.msra.mxu0 0
  %1269 = vmatprep.subr.bf16.mxu0 0
  %1270 = vmatpush1.bf16.msra.mxu0 0
  %1271 = vmatprep.subr.bf16.mxu0 0
  %1272 = vmatpush1.bf16.msra.mxu0 0
  %1273 = vmatprep.subr.bf16.mxu0 0
  %1274 = vmatpush1.bf16.msra.mxu0 0
  %1275 = vmatprep.mubr.bf16.mxu0 0
  %1276 = vmatmul.mubr.bf16.gmra.mrb[0].mxu0 %v1123
  %v1277 = vpop.f32.mrb[0].mxu0
  %v1278 = vadd.f32 0.0, %v1277
  %v1279 = vpop.f32.mrb[0].mxu0
  %v1280 = vpop.f32.mrb[0].mxu0
  %v1281 = vpop.f32.mrb[0].mxu0
  %1282 = vdwg.mxu0
  %v1283 = vadd.f32 %v1226, %v1278
  %s1284 = scalar_lea.vmem %s0, 224
  %v1285 = vld [vmem:[%s1284] sm:$0xff]
  %v1286 = vld [vmem:[%s206] sm:$0xf]
  %v1287 = vld [vmem:[%s206 + $0x4] sm:$0xf]
  %v1288 = vld [vmem:[%s206 + $0x8] sm:$0xf]
  %v1289 = vld [vmem:[%s206 + $0xc] sm:$0xf]
  %v1294 = vunpack.c.l.b16 %v1286
  %v1295 = vunpack.c.l.b16 %v1287
  %v1296 = vunpack.c.l.b16 %v1288
  %v1297 = vunpack.c.l.b16 %v1289
  %v1298 = vpack.c.b16 %v1295, %v1294
  %v1299 = vpack.c.b16 %v1297, %v1296
  %1302 = vmatprep.subr.bf16.mxu0 0
  %1303 = vmatpush1.bf16.msra.mxu0 %v1298
  %1304 = vmatprep.subr.bf16.mxu0 0
  %1305 = vmatpush1.bf16.msra.mxu0 %v1299
  %1306 = vmatprep.subr.bf16.mxu0 0
  %1307 = vmatpush1.bf16.msra.mxu0 0
  %1308 = vmatprep.subr.bf16.mxu0 0
  %1309 = vmatpush1.bf16.msra.mxu0 0
  %1310 = vmatprep.subr.bf16.mxu0 0
  %1311 = vmatpush1.bf16.msra.mxu0 0
  %1312 = vmatprep.subr.bf16.mxu0 0
  %1313 = vmatpush1.bf16.msra.mxu0 0
  %1314 = vmatprep.subr.bf16.mxu0 0
  %1315 = vmatpush1.bf16.msra.mxu0 0
  %1316 = vmatprep.subr.bf16.mxu0 0
  %1317 = vmatpush1.bf16.msra.mxu0 0
  %1318 = vmatprep.subr.bf16.mxu0 0
  %1319 = vmatpush1.bf16.msra.mxu0 0
  %1320 = vmatprep.subr.bf16.mxu0 0
  %1321 = vmatpush1.bf16.msra.mxu0 0
  %1322 = vmatprep.subr.bf16.mxu0 0
  %1323 = vmatpush1.bf16.msra.mxu0 0
  %1324 = vmatprep.subr.bf16.mxu0 0
  %1325 = vmatpush1.bf16.msra.mxu0 0
  %1326 = vmatprep.subr.bf16.mxu0 0
  %1327 = vmatpush1.bf16.msra.mxu0 0
  %1328 = vmatprep.subr.bf16.mxu0 0
  %1329 = vmatpush1.bf16.msra.mxu0 0
  %1330 = vmatprep.subr.bf16.mxu0 0
  %1331 = vmatpush1.bf16.msra.mxu0 0
  %1332 = vmatprep.subr.bf16.mxu0 0
  %1333 = vmatpush1.bf16.msra.mxu0 0
  %1334 = vmatprep.mubr.bf16.mxu0 0
  %1335 = vmatmul.mubr.bf16.gmra.mrb[0].mxu0 %v1123
  %v1336 = vpop.f32.mrb[0].mxu0
  %v1337 = vadd.f32 0.0, %v1336
  %v1338 = vpop.f32.mrb[0].mxu0
  %v1339 = vpop.f32.mrb[0].mxu0
  %v1340 = vpop.f32.mrb[0].mxu0
  %1341 = vdwg.mxu0
  %v1342 = vadd.f32 %v1285, %v1337
  %v1343 = vxor.u32 %v1165, 2147483648
  %v1344 = vmul.f32 %v1343, 1.442695
  %v1345 = vpow.pop %v1344
  %v1346 = vadd.f32 %v1345, 1.0
  %v1347 = vrcp.pop %v1346
  %v1348 = vmul.f32 1.0, %v1347
  %v1349 = vxor.u32 %v1224, 2147483648
  %v1350 = vmul.f32 %v1349, 1.442695
  %v1351 = vpow.pop %v1350
  %v1352 = vadd.f32 %v1351, 1.0
  %v1353 = vrcp.pop %v1352
  %v1354 = vmul.f32 1.0, %v1353
  %v1355 = vtanh.pop %v1283
  %v1356 = vxor.u32 %v1342, 2147483648
  %v1357 = vmul.f32 %v1356, 1.442695
  %v1358 = vpow.pop %v1357
  %v1359 = vadd.f32 %v1358, 1.0
  %v1360 = vrcp.pop %v1359
  %v1361 = vmul.f32 1.0, %v1360
  %v1362 = vmul.f32 %v1354, %v1102
  %v1363 = vmul.f32 %v1348, %v1355
  %v1364 = vadd.f32 %v1362, %v1363
  %v1365 = vtanh.pop %v1364
  %v1366 = vmul.f32 %v1361, %v1365
  %1367 = vst.msk [vmem:[#allocation3] sm:$0xff] %vm39, %v1364
  %1368 = vst.msk [vmem:[#allocation2] sm:$0xff] %vm39, %v1366
  %s1369 = scalar_lea.vmem %s2, 32
  %1370 = vst.msk [vmem:[%s1369] sm:$0xff] %vm39, %v1366
  %v1371 = vld [vmem:[#allocation2] sm:$0xff]
  %v1372 = vld [vmem:[#allocation3] sm:$0xff]
  %v1373 = vpack.c.bf16 %v1371, %v1371
  %s1374 = scalar_lea.vmem %s0, 40
  %v1375 = vld [vmem:[%s1374] sm:$0xff]
  %v1376 = vld [vmem:[%s1] sm:$0xf]
  %v1377 = vld [vmem:[%s1 + $0x4] sm:$0xf]
  %v1378 = vld [vmem:[%s1 + $0x8] sm:$0xf]
  %v1379 = vld [vmem:[%s1 + $0xc] sm:$0xf]
  %v1384 = vunpack.c.l.b16 %v1376
  %v1385 = vunpack.c.l.b16 %v1377
  %v1386 = vunpack.c.l.b16 %v1378
  %v1387 = vunpack.c.l.b16 %v1379
  %v1388 = vpack.c.b16 %v1385, %v1384
  %v1389 = vpack.c.b16 %v1387, %v1386
  %v1393 = vsel %vm39, %v1373, 0
  %1395 = vmatprep.subr.bf16.mxu0 0
  %1396 = vmatpush1.bf16.msra.mxu0 %v1388
  %1397 = vmatprep.subr.bf16.mxu0 0
  %1398 = vmatpush1.bf16.msra.mxu0 %v1389
  %1399 = vmatprep.subr.bf16.mxu0 0
  %1400 = vmatpush1.bf16.msra.mxu0 0
  %1401 = vmatprep.subr.bf16.mxu0 0
  %1402 = vmatpush1.bf16.msra.mxu0 0
  %1403 = vmatprep.subr.bf16.mxu0 0
  %1404 = vmatpush1.bf16.msra.mxu0 0
  %1405 = vmatprep.subr.bf16.mxu0 0
  %1406 = vmatpush1.bf16.msra.mxu0 0
  %1407 = vmatprep.subr.bf16.mxu0 0
  %1408 = vmatpush1.bf16.msra.mxu0 0
  %1409 = vmatprep.subr.bf16.mxu0 0
  %1410 = vmatpush1.bf16.msra.mxu0 0
  %1411 = vmatprep.subr.bf16.mxu0 0
  %1412 = vmatpush1.bf16.msra.mxu0 0
  %1413 = vmatprep.subr.bf16.mxu0 0
  %1414 = vmatpush1.bf16.msra.mxu0 0
  %1415 = vmatprep.subr.bf16.mxu0 0
  %1416 = vmatpush1.bf16.msra.mxu0 0
  %1417 = vmatprep.subr.bf16.mxu0 0
  %1418 = vmatpush1.bf16.msra.mxu0 0
  %1419 = vmatprep.subr.bf16.mxu0 0
  %1420 = vmatpush1.bf16.msra.mxu0 0
  %1421 = vmatprep.subr.bf16.mxu0 0
  %1422 = vmatpush1.bf16.msra.mxu0 0
  %1423 = vmatprep.subr.bf16.mxu0 0
  %1424 = vmatpush1.bf16.msra.mxu0 0
  %1425 = vmatprep.subr.bf16.mxu0 0
  %1426 = vmatpush1.bf16.msra.mxu0 0
  %1427 = vmatprep.mubr.bf16.mxu0 0
  %1428 = vmatmul.mubr.bf16.gmra.mrb[0].mxu0 %v1393
  %v1429 = vpop.f32.mrb[0].mxu0
  %v1430 = vadd.f32 0.0, %v1429
  %v1431 = vpop.f32.mrb[0].mxu0
  %v1432 = vpop.f32.mrb[0].mxu0
  %v1433 = vpop.f32.mrb[0].mxu0
  %1434 = vdwg.mxu0
  %v1435 = vadd.f32 %v1375, %v1430
  %s1436 = scalar_lea.vmem %s0, 104
  %v1437 = vld [vmem:[%s1436] sm:$0xff]
  %v1438 = vld [vmem:[%s86] sm:$0xf]
  %v1439 = vld [vmem:[%s86 + $0x4] sm:$0xf]
  %v1440 = vld [vmem:[%s86 + $0x8] sm:$0xf]
  %v1441 = vld [vmem:[%s86 + $0xc] sm:$0xf]
  %v1446 = vunpack.c.l.b16 %v1438
  %v1447 = vunpack.c.l.b16 %v1439
  %v1448 = vunpack.c.l.b16 %v1440
  %v1449 = vunpack.c.l.b16 %v1441
  %v1450 = vpack.c.b16 %v1447, %v1446
  %v1451 = vpack.c.b16 %v1449, %v1448
  %1454 = vmatprep.subr.bf16.mxu0 0
  %1455 = vmatpush1.bf16.msra.mxu0 %v1450
  %1456 = vmatprep.subr.bf16.mxu0 0
  %1457 = vmatpush1.bf16.msra.mxu0 %v1451
  %1458 = vmatprep.subr.bf16.mxu0 0
  %1459 = vmatpush1.bf16.msra.mxu0 0
  %1460 = vmatprep.subr.bf16.mxu0 0
  %1461 = vmatpush1.bf16.msra.mxu0 0
  %1462 = vmatprep.subr.bf16.mxu0 0
  %1463 = vmatpush1.bf16.msra.mxu0 0
  %1464 = vmatprep.subr.bf16.mxu0 0
  %1465 = vmatpush1.bf16.msra.mxu0 0
  %1466 = vmatprep.subr.bf16.mxu0 0
  %1467 = vmatpush1.bf16.msra.mxu0 0
  %1468 = vmatprep.subr.bf16.mxu0 0
  %1469 = vmatpush1.bf16.msra.mxu0 0
  %1470 = vmatprep.subr.bf16.mxu0 0
  %1471 = vmatpush1.bf16.msra.mxu0 0
  %1472 = vmatprep.subr.bf16.mxu0 0
  %1473 = vmatpush1.bf16.msra.mxu0 0
  %1474 = vmatprep.subr.bf16.mxu0 0
  %1475 = vmatpush1.bf16.msra.mxu0 0
  %1476 = vmatprep.subr.bf16.mxu0 0
  %1477 = vmatpush1.bf16.msra.mxu0 0
  %1478 = vmatprep.subr.bf16.mxu0 0
  %1479 = vmatpush1.bf16.msra.mxu0 0
  %1480 = vmatprep.subr.bf16.mxu0 0
  %1481 = vmatpush1.bf16.msra.mxu0 0
  %1482 = vmatprep.subr.bf16.mxu0 0
  %1483 = vmatpush1.bf16.msra.mxu0 0
  %1484 = vmatprep.subr.bf16.mxu0 0
  %1485 = vmatpush1.bf16.msra.mxu0 0
  %1486 = vmatprep.mubr.bf16.mxu0 0
  %1487 = vmatmul.mubr.bf16.gmra.mrb[0].mxu0 %v1393
  %v1488 = vpop.f32.mrb[0].mxu0
  %v1489 = vadd.f32 0.0, %v1488
  %v1490 = vpop.f32.mrb[0].mxu0
  %v1491 = vpop.f32.mrb[0].mxu0
  %v1492 = vpop.f32.mrb[0].mxu0
  %1493 = vdwg.mxu0
  %v1494 = vadd.f32 %v1437, %v1489
  %s1495 = scalar_lea.vmem %s0, 168
  %v1496 = vld [vmem:[%s1495] sm:$0xff]
  %v1497 = vld [vmem:[%s146] sm:$0xf]
  %v1498 = vld [vmem:[%s146 + $0x4] sm:$0xf]
  %v1499 = vld [vmem:[%s146 + $0x8] sm:$0xf]
  %v1500 = vld [vmem:[%s146 + $0xc] sm:$0xf]
  %v1505 = vunpack.c.l.b16 %v1497
  %v1506 = vunpack.c.l.b16 %v1498
  %v1507 = vunpack.c.l.b16 %v1499
  %v1508 = vunpack.c.l.b16 %v1500
  %v1509 = vpack.c.b16 %v1506, %v1505
  %v1510 = vpack.c.b16 %v1508, %v1507
  %1513 = vmatprep.subr.bf16.mxu0 0
  %1514 = vmatpush1.bf16.msra.mxu0 %v1509
  %1515 = vmatprep.subr.bf16.mxu0 0
  %1516 = vmatpush1.bf16.msra.mxu0 %v1510
  %1517 = vmatprep.subr.bf16.mxu0 0
  %1518 = vmatpush1.bf16.msra.mxu0 0
  %1519 = vmatprep.subr.bf16.mxu0 0
  %1520 = vmatpush1.bf16.msra.mxu0 0
  %1521 = vmatprep.subr.bf16.mxu0 0
  %1522 = vmatpush1.bf16.msra.mxu0 0
  %1523 = vmatprep.subr.bf16.mxu0 0
  %1524 = vmatpush1.bf16.msra.mxu0 0
  %1525 = vmatprep.subr.bf16.mxu0 0
  %1526 = vmatpush1.bf16.msra.mxu0 0
  %1527 = vmatprep.subr.bf16.mxu0 0
  %1528 = vmatpush1.bf16.msra.mxu0 0
  %1529 = vmatprep.subr.bf16.mxu0 0
  %1530 = vmatpush1.bf16.msra.mxu0 0
  %1531 = vmatprep.subr.bf16.mxu0 0
  %1532 = vmatpush1.bf16.msra.mxu0 0
  %1533 = vmatprep.subr.bf16.mxu0 0
  %1534 = vmatpush1.bf16.msra.mxu0 0
  %1535 = vmatprep.subr.bf16.mxu0 0
  %1536 = vmatpush1.bf16.msra.mxu0 0
  %1537 = vmatprep.subr.bf16.mxu0 0
  %1538 = vmatpush1.bf16.msra.mxu0 0
  %1539 = vmatprep.subr.bf16.mxu0 0
  %1540 = vmatpush1.bf16.msra.mxu0 0
  %1541 = vmatprep.subr.bf16.mxu0 0
  %1542 = vmatpush1.bf16.msra.mxu0 0
  %1543 = vmatprep.subr.bf16.mxu0 0
  %1544 = vmatpush1.bf16.msra.mxu0 0
  %1545 = vmatprep.mubr.bf16.mxu0 0
  %1546 = vmatmul.mubr.bf16.gmra.mrb[0].mxu0 %v1393
  %v1547 = vpop.f32.mrb[0].mxu0
  %v1548 = vadd.f32 0.0, %v1547
  %v1549 = vpop.f32.mrb[0].mxu0
  %v1550 = vpop.f32.mrb[0].mxu0
  %v1551 = vpop.f32.mrb[0].mxu0
  %1552 = vdwg.mxu0
  %v1553 = vadd.f32 %v1496, %v1548
  %s1554 = scalar_lea.vmem %s0, 232
  %v1555 = vld [vmem:[%s1554] sm:$0xff]
  %v1556 = vld [vmem:[%s206] sm:$0xf]
  %v1557 = vld [vmem:[%s206 + $0x4] sm:$0xf]
  %v1558 = vld [vmem:[%s206 + $0x8] sm:$0xf]
  %v1559 = vld [vmem:[%s206 + $0xc] sm:$0xf]
  %v1564 = vunpack.c.l.b16 %v1556
  %v1565 = vunpack.c.l.b16 %v1557
  %v1566 = vunpack.c.l.b16 %v1558
  %v1567 = vunpack.c.l.b16 %v1559
  %v1568 = vpack.c.b16 %v1565, %v1564
  %v1569 = vpack.c.b16 %v1567, %v1566
  %1572 = vmatprep.subr.bf16.mxu0 0
  %1573 = vmatpush1.bf16.msra.mxu0 %v1568
  %1574 = vmatprep.subr.bf16.mxu0 0
  %1575 = vmatpush1.bf16.msra.mxu0 %v1569
  %1576 = vmatprep.subr.bf16.mxu0 0
  %1577 = vmatpush1.bf16.msra.mxu0 0
  %1578 = vmatprep.subr.bf16.mxu0 0
  %1579 = vmatpush1.bf16.msra.mxu0 0
  %1580 = vmatprep.subr.bf16.mxu0 0
  %1581 = vmatpush1.bf16.msra.mxu0 0
  %1582 = vmatprep.subr.bf16.mxu0 0
  %1583 = vmatpush1.bf16.msra.mxu0 0
  %1584 = vmatprep.subr.bf16.mxu0 0
  %1585 = vmatpush1.bf16.msra.mxu0 0
  %1586 = vmatprep.subr.bf16.mxu0 0
  %1587 = vmatpush1.bf16.msra.mxu0 0
  %1588 = vmatprep.subr.bf16.mxu0 0
  %1589 = vmatpush1.bf16.msra.mxu0 0
  %1590 = vmatprep.subr.bf16.mxu0 0
  %1591 = vmatpush1.bf16.msra.mxu0 0
  %1592 = vmatprep.subr.bf16.mxu0 0
  %1593 = vmatpush1.bf16.msra.mxu0 0
  %1594 = vmatprep.subr.bf16.mxu0 0
  %1595 = vmatpush1.bf16.msra.mxu0 0
  %1596 = vmatprep.subr.bf16.mxu0 0
  %1597 = vmatpush1.bf16.msra.mxu0 0
  %1598 = vmatprep.subr.bf16.mxu0 0
  %1599 = vmatpush1.bf16.msra.mxu0 0
  %1600 = vmatprep.subr.bf16.mxu0 0
  %1601 = vmatpush1.bf16.msra.mxu0 0
  %1602 = vmatprep.subr.bf16.mxu0 0
  %1603 = vmatpush1.bf16.msra.mxu0 0
  %1604 = vmatprep.mubr.bf16.mxu0 0
  %1605 = vmatmul.mubr.bf16.gmra.mrb[0].mxu0 %v1393
  %v1606 = vpop.f32.mrb[0].mxu0
  %v1607 = vadd.f32 0.0, %v1606
  %v1608 = vpop.f32.mrb[0].mxu0
  %v1609 = vpop.f32.mrb[0].mxu0
  %v1610 = vpop.f32.mrb[0].mxu0
  %1611 = vdwg.mxu0
  %v1612 = vadd.f32 %v1555, %v1607
  %v1613 = vxor.u32 %v1435, 2147483648
  %v1614 = vmul.f32 %v1613, 1.442695
  %v1615 = vpow.pop %v1614
  %v1616 = vadd.f32 %v1615, 1.0
  %v1617 = vrcp.pop %v1616
  %v1618 = vmul.f32 1.0, %v1617
  %v1619 = vxor.u32 %v1494, 2147483648
  %v1620 = vmul.f32 %v1619, 1.442695
  %v1621 = vpow.pop %v1620
  %v1622 = vadd.f32 %v1621, 1.0
  %v1623 = vrcp.pop %v1622
  %v1624 = vmul.f32 1.0, %v1623
  %v1625 = vtanh.pop %v1553
  %v1626 = vxor.u32 %v1612, 2147483648
  %v1627 = vmul.f32 %v1626, 1.442695
  %v1628 = vpow.pop %v1627
  %v1629 = vadd.f32 %v1628, 1.0
  %v1630 = vrcp.pop %v1629
  %v1631 = vmul.f32 1.0, %v1630
  %v1632 = vmul.f32 %v1624, %v1372
  %v1633 = vmul.f32 %v1618, %v1625
  %v1634 = vadd.f32 %v1632, %v1633
  %v1635 = vtanh.pop %v1634
  %v1636 = vmul.f32 %v1631, %v1635
  %1637 = vst.msk [vmem:[#allocation3] sm:$0xff] %vm39, %v1634
  %1638 = vst.msk [vmem:[#allocation2] sm:$0xff] %vm39, %v1636
  %s1639 = scalar_lea.vmem %s2, 40
  %1640 = vst.msk [vmem:[%s1639] sm:$0xff] %vm39, %v1636
  %v1641 = vld [vmem:[#allocation2] sm:$0xff]
  %v1642 = vld [vmem:[#allocation3] sm:$0xff]
  %v1643 = vpack.c.bf16 %v1641, %v1641
  %s1644 = scalar_lea.vmem %s0, 48
  %v1645 = vld [vmem:[%s1644] sm:$0xff]
  %v1646 = vld [vmem:[%s1] sm:$0xf]
  %v1647 = vld [vmem:[%s1 + $0x4] sm:$0xf]
  %v1648 = vld [vmem:[%s1 + $0x8] sm:$0xf]
  %v1649 = vld [vmem:[%s1 + $0xc] sm:$0xf]
  %v1654 = vunpack.c.l.b16 %v1646
  %v1655 = vunpack.c.l.b16 %v1647
  %v1656 = vunpack.c.l.b16 %v1648
  %v1657 = vunpack.c.l.b16 %v1649
  %v1658 = vpack.c.b16 %v1655, %v1654
  %v1659 = vpack.c.b16 %v1657, %v1656
  %v1663 = vsel %vm39, %v1643, 0
  %1665 = vmatprep.subr.bf16.mxu0 0
  %1666 = vmatpush1.bf16.msra.mxu0 %v1658
  %1667 = vmatprep.subr.bf16.mxu0 0
  %1668 = vmatpush1.bf16.msra.mxu0 %v1659
  %1669 = vmatprep.subr.bf16.mxu0 0
  %1670 = vmatpush1.bf16.msra.mxu0 0
  %1671 = vmatprep.subr.bf16.mxu0 0
  %1672 = vmatpush1.bf16.msra.mxu0 0
  %1673 = vmatprep.subr.bf16.mxu0 0
  %1674 = vmatpush1.bf16.msra.mxu0 0
  %1675 = vmatprep.subr.bf16.mxu0 0
  %1676 = vmatpush1.bf16.msra.mxu0 0
  %1677 = vmatprep.subr.bf16.mxu0 0
  %1678 = vmatpush1.bf16.msra.mxu0 0
  %1679 = vmatprep.subr.bf16.mxu0 0
  %1680 = vmatpush1.bf16.msra.mxu0 0
  %1681 = vmatprep.subr.bf16.mxu0 0
  %1682 = vmatpush1.bf16.msra.mxu0 0
  %1683 = vmatprep.subr.bf16.mxu0 0
  %1684 = vmatpush1.bf16.msra.mxu0 0
  %1685 = vmatprep.subr.bf16.mxu0 0
  %1686 = vmatpush1.bf16.msra.mxu0 0
  %1687 = vmatprep.subr.bf16.mxu0 0
  %1688 = vmatpush1.bf16.msra.mxu0 0
  %1689 = vmatprep.subr.bf16.mxu0 0
  %1690 = vmatpush1.bf16.msra.mxu0 0
  %1691 = vmatprep.subr.bf16.mxu0 0
  %1692 = vmatpush1.bf16.msra.mxu0 0
  %1693 = vmatprep.subr.bf16.mxu0 0
  %1694 = vmatpush1.bf16.msra.mxu0 0
  %1695 = vmatprep.subr.bf16.mxu0 0
  %1696 = vmatpush1.bf16.msra.mxu0 0
  %1697 = vmatprep.mubr.bf16.mxu0 0
  %1698 = vmatmul.mubr.bf16.gmra.mrb[0].mxu0 %v1663
  %v1699 = vpop.f32.mrb[0].mxu0
  %v1700 = vadd.f32 0.0, %v1699
  %v1701 = vpop.f32.mrb[0].mxu0
  %v1702 = vpop.f32.mrb[0].mxu0
  %v1703 = vpop.f32.mrb[0].mxu0
  %1704 = vdwg.mxu0
  %v1705 = vadd.f32 %v1645, %v1700
  %s1706 = scalar_lea.vmem %s0, 112
  %v1707 = vld [vmem:[%s1706] sm:$0xff]
  %v1708 = vld [vmem:[%s86] sm:$0xf]
  %v1709 = vld [vmem:[%s86 + $0x4] sm:$0xf]
  %v1710 = vld [vmem:[%s86 + $0x8] sm:$0xf]
  %v1711 = vld [vmem:[%s86 + $0xc] sm:$0xf]
  %v1716 = vunpack.c.l.b16 %v1708
  %v1717 = vunpack.c.l.b16 %v1709
  %v1718 = vunpack.c.l.b16 %v1710
  %v1719 = vunpack.c.l.b16 %v1711
  %v1720 = vpack.c.b16 %v1717, %v1716
  %v1721 = vpack.c.b16 %v1719, %v1718
  %1724 = vmatprep.subr.bf16.mxu0 0
  %1725 = vmatpush1.bf16.msra.mxu0 %v1720
  %1726 = vmatprep.subr.bf16.mxu0 0
  %1727 = vmatpush1.bf16.msra.mxu0 %v1721
  %1728 = vmatprep.subr.bf16.mxu0 0
  %1729 = vmatpush1.bf16.msra.mxu0 0
  %1730 = vmatprep.subr.bf16.mxu0 0
  %1731 = vmatpush1.bf16.msra.mxu0 0
  %1732 = vmatprep.subr.bf16.mxu0 0
  %1733 = vmatpush1.bf16.msra.mxu0 0
  %1734 = vmatprep.subr.bf16.mxu0 0
  %1735 = vmatpush1.bf16.msra.mxu0 0
  %1736 = vmatprep.subr.bf16.mxu0 0
  %1737 = vmatpush1.bf16.msra.mxu0 0
  %1738 = vmatprep.subr.bf16.mxu0 0
  %1739 = vmatpush1.bf16.msra.mxu0 0
  %1740 = vmatprep.subr.bf16.mxu0 0
  %1741 = vmatpush1.bf16.msra.mxu0 0
  %1742 = vmatprep.subr.bf16.mxu0 0
  %1743 = vmatpush1.bf16.msra.mxu0 0
  %1744 = vmatprep.subr.bf16.mxu0 0
  %1745 = vmatpush1.bf16.msra.mxu0 0
  %1746 = vmatprep.subr.bf16.mxu0 0
  %1747 = vmatpush1.bf16.msra.mxu0 0
  %1748 = vmatprep.subr.bf16.mxu0 0
  %1749 = vmatpush1.bf16.msra.mxu0 0
  %1750 = vmatprep.subr.bf16.mxu0 0
  %1751 = vmatpush1.bf16.msra.mxu0 0
  %1752 = vmatprep.subr.bf16.mxu0 0
  %1753 = vmatpush1.bf16.msra.mxu0 0
  %1754 = vmatprep.subr.bf16.mxu0 0
  %1755 = vmatpush1.bf16.msra.mxu0 0
  %1756 = vmatprep.mubr.bf16.mxu0 0
  %1757 = vmatmul.mubr.bf16.gmra.mrb[0].mxu0 %v1663
  %v1758 = vpop.f32.mrb[0].mxu0
  %v1759 = vadd.f32 0.0, %v1758
  %v1760 = vpop.f32.mrb[0].mxu0
  %v1761 = vpop.f32.mrb[0].mxu0
  %v1762 = vpop.f32.mrb[0].mxu0
  %1763 = vdwg.mxu0
  %v1764 = vadd.f32 %v1707, %v1759
  %s1765 = scalar_lea.vmem %s0, 176
  %v1766 = vld [vmem:[%s1765] sm:$0xff]
  %v1767 = vld [vmem:[%s146] sm:$0xf]
  %v1768 = vld [vmem:[%s146 + $0x4] sm:$0xf]
  %v1769 = vld [vmem:[%s146 + $0x8] sm:$0xf]
  %v1770 = vld [vmem:[%s146 + $0xc] sm:$0xf]
  %v1775 = vunpack.c.l.b16 %v1767
  %v1776 = vunpack.c.l.b16 %v1768
  %v1777 = vunpack.c.l.b16 %v1769
  %v1778 = vunpack.c.l.b16 %v1770
  %v1779 = vpack.c.b16 %v1776, %v1775
  %v1780 = vpack.c.b16 %v1778, %v1777
  %1783 = vmatprep.subr.bf16.mxu0 0
  %1784 = vmatpush1.bf16.msra.mxu0 %v1779
  %1785 = vmatprep.subr.bf16.mxu0 0
  %1786 = vmatpush1.bf16.msra.mxu0 %v1780
  %1787 = vmatprep.subr.bf16.mxu0 0
  %1788 = vmatpush1.bf16.msra.mxu0 0
  %1789 = vmatprep.subr.bf16.mxu0 0
  %1790 = vmatpush1.bf16.msra.mxu0 0
  %1791 = vmatprep.subr.bf16.mxu0 0
  %1792 = vmatpush1.bf16.msra.mxu0 0
  %1793 = vmatprep.subr.bf16.mxu0 0
  %1794 = vmatpush1.bf16.msra.mxu0 0
  %1795 = vmatprep.subr.bf16.mxu0 0
  %1796 = vmatpush1.bf16.msra.mxu0 0
  %1797 = vmatprep.subr.bf16.mxu0 0
  %1798 = vmatpush1.bf16.msra.mxu0 0
  %1799 = vmatprep.subr.bf16.mxu0 0
  %1800 = vmatpush1.bf16.msra.mxu0 0
  %1801 = vmatprep.subr.bf16.mxu0 0
  %1802 = vmatpush1.bf16.msra.mxu0 0
  %1803 = vmatprep.subr.bf16.mxu0 0
  %1804 = vmatpush1.bf16.msra.mxu0 0
  %1805 = vmatprep.subr.bf16.mxu0 0
  %1806 = vmatpush1.bf16.msra.mxu0 0
  %1807 = vmatprep.subr.bf16.mxu0 0
  %1808 = vmatpush1.bf16.msra.mxu0 0
  %1809 = vmatprep.subr.bf16.mxu0 0
  %1810 = vmatpush1.bf16.msra.mxu0 0
  %1811 = vmatprep.subr.bf16.mxu0 0
  %1812 = vmatpush1.bf16.msra.mxu0 0
  %1813 = vmatprep.subr.bf16.mxu0 0
  %1814 = vmatpush1.bf16.msra.mxu0 0
  %1815 = vmatprep.mubr.bf16.mxu0 0
  %1816 = vmatmul.mubr.bf16.gmra.mrb[0].mxu0 %v1663
  %v1817 = vpop.f32.mrb[0].mxu0
  %v1818 = vadd.f32 0.0, %v1817
  %v1819 = vpop.f32.mrb[0].mxu0
  %v1820 = vpop.f32.mrb[0].mxu0
  %v1821 = vpop.f32.mrb[0].mxu0
  %1822 = vdwg.mxu0
  %v1823 = vadd.f32 %v1766, %v1818
  %s1824 = scalar_lea.vmem %s0, 240
  %v1825 = vld [vmem:[%s1824] sm:$0xff]
  %v1826 = vld [vmem:[%s206] sm:$0xf]
  %v1827 = vld [vmem:[%s206 + $0x4] sm:$0xf]
  %v1828 = vld [vmem:[%s206 + $0x8] sm:$0xf]
  %v1829 = vld [vmem:[%s206 + $0xc] sm:$0xf]
  %v1834 = vunpack.c.l.b16 %v1826
  %v1835 = vunpack.c.l.b16 %v1827
  %v1836 = vunpack.c.l.b16 %v1828
  %v1837 = vunpack.c.l.b16 %v1829
  %v1838 = vpack.c.b16 %v1835, %v1834
  %v1839 = vpack.c.b16 %v1837, %v1836
  %1842 = vmatprep.subr.bf16.mxu0 0
  %1843 = vmatpush1.bf16.msra.mxu0 %v1838
  %1844 = vmatprep.subr.bf16.mxu0 0
  %1845 = vmatpush1.bf16.msra.mxu0 %v1839
  %1846 = vmatprep.subr.bf16.mxu0 0
  %1847 = vmatpush1.bf16.msra.mxu0 0
  %1848 = vmatprep.subr.bf16.mxu0 0
  %1849 = vmatpush1.bf16.msra.mxu0 0
  %1850 = vmatprep.subr.bf16.mxu0 0
  %1851 = vmatpush1.bf16.msra.mxu0 0
  %1852 = vmatprep.subr.bf16.mxu0 0
  %1853 = vmatpush1.bf16.msra.mxu0 0
  %1854 = vmatprep.subr.bf16.mxu0 0
  %1855 = vmatpush1.bf16.msra.mxu0 0
  %1856 = vmatprep.subr.bf16.mxu0 0
  %1857 = vmatpush1.bf16.msra.mxu0 0
  %1858 = vmatprep.subr.bf16.mxu0 0
  %1859 = vmatpush1.bf16.msra.mxu0 0
  %1860 = vmatprep.subr.bf16.mxu0 0
  %1861 = vmatpush1.bf16.msra.mxu0 0
  %1862 = vmatprep.subr.bf16.mxu0 0
  %1863 = vmatpush1.bf16.msra.mxu0 0
  %1864 = vmatprep.subr.bf16.mxu0 0
  %1865 = vmatpush1.bf16.msra.mxu0 0
  %1866 = vmatprep.subr.bf16.mxu0 0
  %1867 = vmatpush1.bf16.msra.mxu0 0
  %1868 = vmatprep.subr.bf16.mxu0 0
  %1869 = vmatpush1.bf16.msra.mxu0 0
  %1870 = vmatprep.subr.bf16.mxu0 0
  %1871 = vmatpush1.bf16.msra.mxu0 0
  %1872 = vmatprep.subr.bf16.mxu0 0
  %1873 = vmatpush1.bf16.msra.mxu0 0
  %1874 = vmatprep.mubr.bf16.mxu0 0
  %1875 = vmatmul.mubr.bf16.gmra.mrb[0].mxu0 %v1663
  %v1876 = vpop.f32.mrb[0].mxu0
  %v1877 = vadd.f32 0.0, %v1876
  %v1878 = vpop.f32.mrb[0].mxu0
  %v1879 = vpop.f32.mrb[0].mxu0
  %v1880 = vpop.f32.mrb[0].mxu0
  %1881 = vdwg.mxu0
  %v1882 = vadd.f32 %v1825, %v1877
  %v1883 = vxor.u32 %v1705, 2147483648
  %v1884 = vmul.f32 %v1883, 1.442695
  %v1885 = vpow.pop %v1884
  %v1886 = vadd.f32 %v1885, 1.0
  %v1887 = vrcp.pop %v1886
  %v1888 = vmul.f32 1.0, %v1887
  %v1889 = vxor.u32 %v1764, 2147483648
  %v1890 = vmul.f32 %v1889, 1.442695
  %v1891 = vpow.pop %v1890
  %v1892 = vadd.f32 %v1891, 1.0
  %v1893 = vrcp.pop %v1892
  %v1894 = vmul.f32 1.0, %v1893
  %v1895 = vtanh.pop %v1823
  %v1896 = vxor.u32 %v1882, 2147483648
  %v1897 = vmul.f32 %v1896, 1.442695
  %v1898 = vpow.pop %v1897
  %v1899 = vadd.f32 %v1898, 1.0
  %v1900 = vrcp.pop %v1899
  %v1901 = vmul.f32 1.0, %v1900
  %v1902 = vmul.f32 %v1894, %v1642
  %v1903 = vmul.f32 %v1888, %v1895
  %v1904 = vadd.f32 %v1902, %v1903
  %v1905 = vtanh.pop %v1904
  %v1906 = vmul.f32 %v1901, %v1905
  %1907 = vst.msk [vmem:[#allocation3] sm:$0xff] %vm39, %v1904
  %1908 = vst.msk [vmem:[#allocation2] sm:$0xff] %vm39, %v1906
  %s1909 = scalar_lea.vmem %s2, 48
  %1910 = vst.msk [vmem:[%s1909] sm:$0xff] %vm39, %v1906
  %v1911 = vld [vmem:[#allocation2] sm:$0xff]
  %v1912 = vld [vmem:[#allocation3] sm:$0xff]
  %v1913 = vpack.c.bf16 %v1911, %v1911
  %s1914 = scalar_lea.vmem %s0, 56
  %v1915 = vld [vmem:[%s1914] sm:$0xff]
  %v1916 = vld [vmem:[%s1] sm:$0xf]
  %v1917 = vld [vmem:[%s1 + $0x4] sm:$0xf]
  %v1918 = vld [vmem:[%s1 + $0x8] sm:$0xf]
  %v1919 = vld [vmem:[%s1 + $0xc] sm:$0xf]
  %v1924 = vunpack.c.l.b16 %v1916
  %v1925 = vunpack.c.l.b16 %v1917
  %v1926 = vunpack.c.l.b16 %v1918
  %v1927 = vunpack.c.l.b16 %v1919
  %v1928 = vpack.c.b16 %v1925, %v1924
  %v1929 = vpack.c.b16 %v1927, %v1926
  %v1933 = vsel %vm39, %v1913, 0
  %1935 = vmatprep.subr.bf16.mxu0 0
  %1936 = vmatpush1.bf16.msra.mxu0 %v1928
  %1937 = vmatprep.subr.bf16.mxu0 0
  %1938 = vmatpush1.bf16.msra.mxu0 %v1929
  %1939 = vmatprep.subr.bf16.mxu0 0
  %1940 = vmatpush1.bf16.msra.mxu0 0
  %1941 = vmatprep.subr.bf16.mxu0 0
  %1942 = vmatpush1.bf16.msra.mxu0 0
  %1943 = vmatprep.subr.bf16.mxu0 0
  %1944 = vmatpush1.bf16.msra.mxu0 0
  %1945 = vmatprep.subr.bf16.mxu0 0
  %1946 = vmatpush1.bf16.msra.mxu0 0
  %1947 = vmatprep.subr.bf16.mxu0 0
  %1948 = vmatpush1.bf16.msra.mxu0 0
  %1949 = vmatprep.subr.bf16.mxu0 0
  %1950 = vmatpush1.bf16.msra.mxu0 0
  %1951 = vmatprep.subr.bf16.mxu0 0
  %1952 = vmatpush1.bf16.msra.mxu0 0
  %1953 = vmatprep.subr.bf16.mxu0 0
  %1954 = vmatpush1.bf16.msra.mxu0 0
  %1955 = vmatprep.subr.bf16.mxu0 0
  %1956 = vmatpush1.bf16.msra.mxu0 0
  %1957 = vmatprep.subr.bf16.mxu0 0
  %1958 = vmatpush1.bf16.msra.mxu0 0
  %1959 = vmatprep.subr.bf16.mxu0 0
  %1960 = vmatpush1.bf16.msra.mxu0 0
  %1961 = vmatprep.subr.bf16.mxu0 0
  %1962 = vmatpush1.bf16.msra.mxu0 0
  %1963 = vmatprep.subr.bf16.mxu0 0
  %1964 = vmatpush1.bf16.msra.mxu0 0
  %1965 = vmatprep.subr.bf16.mxu0 0
  %1966 = vmatpush1.bf16.msra.mxu0 0
  %1967 = vmatprep.mubr.bf16.mxu0 0
  %1968 = vmatmul.mubr.bf16.gmra.mrb[0].mxu0 %v1933
  %v1969 = vpop.f32.mrb[0].mxu0
  %v1970 = vadd.f32 0.0, %v1969
  %v1971 = vpop.f32.mrb[0].mxu0
  %v1972 = vpop.f32.mrb[0].mxu0
  %v1973 = vpop.f32.mrb[0].mxu0
  %1974 = vdwg.mxu0
  %v1975 = vadd.f32 %v1915, %v1970
  %s1976 = scalar_lea.vmem %s0, 120
  %v1977 = vld [vmem:[%s1976] sm:$0xff]
  %v1978 = vld [vmem:[%s86] sm:$0xf]
  %v1979 = vld [vmem:[%s86 + $0x4] sm:$0xf]
  %v1980 = vld [vmem:[%s86 + $0x8] sm:$0xf]
  %v1981 = vld [vmem:[%s86 + $0xc] sm:$0xf]
  %v1986 = vunpack.c.l.b16 %v1978
  %v1987 = vunpack.c.l.b16 %v1979
  %v1988 = vunpack.c.l.b16 %v1980
  %v1989 = vunpack.c.l.b16 %v1981
  %v1990 = vpack.c.b16 %v1987, %v1986
  %v1991 = vpack.c.b16 %v1989, %v1988
  %1994 = vmatprep.subr.bf16.mxu0 0
  %1995 = vmatpush1.bf16.msra.mxu0 %v1990
  %1996 = vmatprep.subr.bf16.mxu0 0
  %1997 = vmatpush1.bf16.msra.mxu0 %v1991
  %1998 = vmatprep.subr.bf16.mxu0 0
  %1999 = vmatpush1.bf16.msra.mxu0 0
  %2000 = vmatprep.subr.bf16.mxu0 0
  %2001 = vmatpush1.bf16.msra.mxu0 0
  %2002 = vmatprep.subr.bf16.mxu0 0
  %2003 = vmatpush1.bf16.msra.mxu0 0
  %2004 = vmatprep.subr.bf16.mxu0 0
  %2005 = vmatpush1.bf16.msra.mxu0 0
  %2006 = vmatprep.subr.bf16.mxu0 0
  %2007 = vmatpush1.bf16.msra.mxu0 0
  %2008 = vmatprep.subr.bf16.mxu0 0
  %2009 = vmatpush1.bf16.msra.mxu0 0
  %2010 = vmatprep.subr.bf16.mxu0 0
  %2011 = vmatpush1.bf16.msra.mxu0 0
  %2012 = vmatprep.subr.bf16.mxu0 0
  %2013 = vmatpush1.bf16.msra.mxu0 0
  %2014 = vmatprep.subr.bf16.mxu0 0
  %2015 = vmatpush1.bf16.msra.mxu0 0
  %2016 = vmatprep.subr.bf16.mxu0 0
  %2017 = vmatpush1.bf16.msra.mxu0 0
  %2018 = vmatprep.subr.bf16.mxu0 0
  %2019 = vmatpush1.bf16.msra.mxu0 0
  %2020 = vmatprep.subr.bf16.mxu0 0
  %2021 = vmatpush1.bf16.msra.mxu0 0
  %2022 = vmatprep.subr.bf16.mxu0 0
  %2023 = vmatpush1.bf16.msra.mxu0 0
  %2024 = vmatprep.subr.bf16.mxu0 0
  %2025 = vmatpush1.bf16.msra.mxu0 0
  %2026 = vmatprep.mubr.bf16.mxu0 0
  %2027 = vmatmul.mubr.bf16.gmra.mrb[0].mxu0 %v1933
  %v2028 = vpop.f32.mrb[0].mxu0
  %v2029 = vadd.f32 0.0, %v2028
  %v2030 = vpop.f32.mrb[0].mxu0
  %v2031 = vpop.f32.mrb[0].mxu0
  %v2032 = vpop.f32.mrb[0].mxu0
  %2033 = vdwg.mxu0
  %v2034 = vadd.f32 %v1977, %v2029
  %s2035 = scalar_lea.vmem %s0, 184
  %v2036 = vld [vmem:[%s2035] sm:$0xff]
  %v2037 = vld [vmem:[%s146] sm:$0xf]
  %v2038 = vld [vmem:[%s146 + $0x4] sm:$0xf]
  %v2039 = vld [vmem:[%s146 + $0x8] sm:$0xf]
  %v2040 = vld [vmem:[%s146 + $0xc] sm:$0xf]
  %v2045 = vunpack.c.l.b16 %v2037
  %v2046 = vunpack.c.l.b16 %v2038
  %v2047 = vunpack.c.l.b16 %v2039
  %v2048 = vunpack.c.l.b16 %v2040
  %v2049 = vpack.c.b16 %v2046, %v2045
  %v2050 = vpack.c.b16 %v2048, %v2047
  %2053 = vmatprep.subr.bf16.mxu0 0
  %2054 = vmatpush1.bf16.msra.mxu0 %v2049
  %2055 = vmatprep.subr.bf16.mxu0 0
  %2056 = vmatpush1.bf16.msra.mxu0 %v2050
  %2057 = vmatprep.subr.bf16.mxu0 0
  %2058 = vmatpush1.bf16.msra.mxu0 0
  %2059 = vmatprep.subr.bf16.mxu0 0
  %2060 = vmatpush1.bf16.msra.mxu0 0
  %2061 = vmatprep.subr.bf16.mxu0 0
  %2062 = vmatpush1.bf16.msra.mxu0 0
  %2063 = vmatprep.subr.bf16.mxu0 0
  %2064 = vmatpush1.bf16.msra.mxu0 0
  %2065 = vmatprep.subr.bf16.mxu0 0
  %2066 = vmatpush1.bf16.msra.mxu0 0
  %2067 = vmatprep.subr.bf16.mxu0 0
  %2068 = vmatpush1.bf16.msra.mxu0 0
  %2069 = vmatprep.subr.bf16.mxu0 0
  %2070 = vmatpush1.bf16.msra.mxu0 0
  %2071 = vmatprep.subr.bf16.mxu0 0
  %2072 = vmatpush1.bf16.msra.mxu0 0
  %2073 = vmatprep.subr.bf16.mxu0 0
  %2074 = vmatpush1.bf16.msra.mxu0 0
  %2075 = vmatprep.subr.bf16.mxu0 0
  %2076 = vmatpush1.bf16.msra.mxu0 0
  %2077 = vmatprep.subr.bf16.mxu0 0
  %2078 = vmatpush1.bf16.msra.mxu0 0
  %2079 = vmatprep.subr.bf16.mxu0 0
  %2080 = vmatpush1.bf16.msra.mxu0 0
  %2081 = vmatprep.subr.bf16.mxu0 0
  %2082 = vmatpush1.bf16.msra.mxu0 0
  %2083 = vmatprep.subr.bf16.mxu0 0
  %2084 = vmatpush1.bf16.msra.mxu0 0
  %2085 = vmatprep.mubr.bf16.mxu0 0
  %2086 = vmatmul.mubr.bf16.gmra.mrb[0].mxu0 %v1933
  %v2087 = vpop.f32.mrb[0].mxu0
  %v2088 = vadd.f32 0.0, %v2087
  %v2089 = vpop.f32.mrb[0].mxu0
  %v2090 = vpop.f32.mrb[0].mxu0
  %v2091 = vpop.f32.mrb[0].mxu0
  %2092 = vdwg.mxu0
  %v2093 = vadd.f32 %v2036, %v2088
  %s2094 = scalar_lea.vmem %s0, 248
  %v2095 = vld [vmem:[%s2094] sm:$0xff]
  %v2096 = vld [vmem:[%s206] sm:$0xf]
  %v2097 = vld [vmem:[%s206 + $0x4] sm:$0xf]
  %v2098 = vld [vmem:[%s206 + $0x8] sm:$0xf]
  %v2099 = vld [vmem:[%s206 + $0xc] sm:$0xf]
  %v2104 = vunpack.c.l.b16 %v2096
  %v2105 = vunpack.c.l.b16 %v2097
  %v2106 = vunpack.c.l.b16 %v2098
  %v2107 = vunpack.c.l.b16 %v2099
  %v2108 = vpack.c.b16 %v2105, %v2104
  %v2109 = vpack.c.b16 %v2107, %v2106
  %2112 = vmatprep.subr.bf16.mxu0 0
  %2113 = vmatpush1.bf16.msra.mxu0 %v2108
  %2114 = vmatprep.subr.bf16.mxu0 0
  %2115 = vmatpush1.bf16.msra.mxu0 %v2109
  %2116 = vmatprep.subr.bf16.mxu0 0
  %2117 = vmatpush1.bf16.msra.mxu0 0
  %2118 = vmatprep.subr.bf16.mxu0 0
  %2119 = vmatpush1.bf16.msra.mxu0 0
  %2120 = vmatprep.subr.bf16.mxu0 0
  %2121 = vmatpush1.bf16.msra.mxu0 0
  %2122 = vmatprep.subr.bf16.mxu0 0
  %2123 = vmatpush1.bf16.msra.mxu0 0
  %2124 = vmatprep.subr.bf16.mxu0 0
  %2125 = vmatpush1.bf16.msra.mxu0 0
  %2126 = vmatprep.subr.bf16.mxu0 0
  %2127 = vmatpush1.bf16.msra.mxu0 0
  %2128 = vmatprep.subr.bf16.mxu0 0
  %2129 = vmatpush1.bf16.msra.mxu0 0
  %2130 = vmatprep.subr.bf16.mxu0 0
  %2131 = vmatpush1.bf16.msra.mxu0 0
  %2132 = vmatprep.subr.bf16.mxu0 0
  %2133 = vmatpush1.bf16.msra.mxu0 0
  %2134 = vmatprep.subr.bf16.mxu0 0
  %2135 = vmatpush1.bf16.msra.mxu0 0
  %2136 = vmatprep.subr.bf16.mxu0 0
  %2137 = vmatpush1.bf16.msra.mxu0 0
  %2138 = vmatprep.subr.bf16.mxu0 0
  %2139 = vmatpush1.bf16.msra.mxu0 0
  %2140 = vmatprep.subr.bf16.mxu0 0
  %2141 = vmatpush1.bf16.msra.mxu0 0
  %2142 = vmatprep.subr.bf16.mxu0 0
  %2143 = vmatpush1.bf16.msra.mxu0 0
  %2144 = vmatprep.mubr.bf16.mxu0 0
  %2145 = vmatmul.mubr.bf16.gmra.mrb[0].mxu0 %v1933
  %v2146 = vpop.f32.mrb[0].mxu0
  %v2147 = vadd.f32 0.0, %v2146
  %v2148 = vpop.f32.mrb[0].mxu0
  %v2149 = vpop.f32.mrb[0].mxu0
  %v2150 = vpop.f32.mrb[0].mxu0
  %2151 = vdwg.mxu0
  %v2152 = vadd.f32 %v2095, %v2147
  %v2153 = vxor.u32 %v1975, 2147483648
  %v2154 = vmul.f32 %v2153, 1.442695
  %v2155 = vpow.pop %v2154
  %v2156 = vadd.f32 %v2155, 1.0
  %v2157 = vrcp.pop %v2156
  %v2158 = vmul.f32 1.0, %v2157
  %v2159 = vxor.u32 %v2034, 2147483648
  %v2160 = vmul.f32 %v2159, 1.442695
  %v2161 = vpow.pop %v2160
  %v2162 = vadd.f32 %v2161, 1.0
  %v2163 = vrcp.pop %v2162
  %v2164 = vmul.f32 1.0, %v2163
  %v2165 = vtanh.pop %v2093
  %v2166 = vxor.u32 %v2152, 2147483648
  %v2167 = vmul.f32 %v2166, 1.442695
  %v2168 = vpow.pop %v2167
  %v2169 = vadd.f32 %v2168, 1.0
  %v2170 = vrcp.pop %v2169
  %v2171 = vmul.f32 1.0, %v2170
  %v2172 = vmul.f32 %v2164, %v1912
  %v2173 = vmul.f32 %v2158, %v2165
  %v2174 = vadd.f32 %v2172, %v2173
  %v2175 = vtanh.pop %v2174
  %v2176 = vmul.f32 %v2171, %v2175
  %2177 = vst.msk [vmem:[#allocation3] sm:$0xff] %vm39, %v2174
  %2178 = vst.msk [vmem:[#allocation2] sm:$0xff] %vm39, %v2176
  %s2179 = scalar_lea.vmem %s2, 56
  %2180 = vst.msk [vmem:[%s2179] sm:$0xff] %vm39, %v2176
  // Predicated region
  $region14: #{decoder_rnn_forward.4} parent=0 // pred_check
    _
  $region15: #{decoder_rnn_forward.4} parent=0 // pred_check_branch
    %2182 = sbr.rel (0) target = $region17
  $region16: #{decoder_rnn_forward.4} parent=0 // pred_region
    _
  $region17: #{decoder_rnn_forward.4} parent=0 // pred_fallthru
    _
  // Predicated region
  $region18: #{decoder_rnn_forward.4} parent=0 // pred_check
    _
  $region19: #{decoder_rnn_forward.4} parent=0 // pred_check_branch
    %2184 = sbr.rel (0) target = $region21
  $region20: #{decoder_rnn_forward.4} parent=0 // pred_region
    _
  $region21: #{decoder_rnn_forward.4} parent=0 // pred_fallthru
    _

</llo_original>
